<compile_context>
chip_gen: v7x
topology: tpu7x:2x2x1
jax: 0.10.0
libtpu: 0.0.40
codegen_flags: <defaults>
</compile_context>

<pallas_src>
import jax
import jax.numpy as jnp
from jax import lax
from jax.experimental import pallas as pl
from jax.experimental.pallas import tpu as pltpu

EPS = 1e-5   # PyTorch BatchNorm1d default eps
C1P = 128    # conv channel count (100) padded to a full lane tile


def expr_predict_forward(x, p):
    """x: (B, 4, L) in PyTorch NCL layout (L must be 100 for the fc_expr head)."""
    B, Cin, L = x.shape
    C1 = p['W1'].shape[0]            # 100
    K1 = p['W1'].shape[2]            # 7
    L1, L2, L3 = L, L // 2, L // 4   # 100, 50, 25
    F1 = p['Wf1'].shape[0]           # 256
    F2 = p['Wf2'].shape[0]           # 128
    f32, bf16 = jnp.float32, jnp.bfloat16
    assert L % 4 == 0

    # ---------------- wrapper-side layout prep (pure data movement, runs in XLA) ----------------
    # conv1 im2col, then split by phase g = l % 4 with rows in position-major (i, b) order.
    # Group g row (i*B + b) holds the 28 im2col features of spatial position l = 4*i + g.
    x_cl = jnp.transpose(x, (0, 2, 1)).astype(f32)                 # (B, L, Cin)
    x_pad = jnp.pad(x_cl, ((0, 0), (K1 // 2, K1 // 2), (0, 0)))    # zero padding = 3
    xcol_full = jnp.concatenate([x_pad[:, k:k + L1, :] for k in range(K1)], axis=-1)  # (B, L1, 28)
    xg = xcol_full.reshape(B, L3, 4, K1 * Cin)                     # l = 4*i + g
    xg = jnp.transpose(xg, (2, 1, 0, 3)).reshape(4, L3 * B, K1 * Cin)
    xcol = xg.astype(bf16)                                         # (4, B*L3, 28)

    # conv1 weight (O, I, K) -> (K1*Cin, C1P): row k*Cin + c = W1[o, c, k]
    w1 = jnp.transpose(p['W1'], (2, 1, 0)).reshape(K1 * Cin, C1)
    w1 = jnp.pad(w1, ((0, 0), (0, C1P - C1))).astype(bf16)

    def cvec(v):   # (C1,) -> (1, C1P); padded channels are exactly zero
        return jnp.pad(v.reshape(1, C1), ((0, 0), (0, C1P - C1)))

    g1, be1 = cvec(p['g1']), cvec(p['be1'])
    g2, be2 = cvec(p['g2']), cvec(p['be2'])
    # NOTE: conv biases b1/b2 cancel exactly in training-mode BatchNorm -> not passed.

    # conv2 weight (O, I, K) -> (K2, C1P, C1P): w2[k, c, o] = W2[o, c, k]
    w2 = jnp.transpose(p['W2'], (2, 1, 0))                         # (3, C1, C1)
    w2 = jnp.pad(w2, ((0, 0), (0, C1P - C1), (0, C1P - C1))).astype(bf16)

    # fc1: PyTorch flatten index is c*L3 + l; pass as a per-position weight stack (L3, C1P, F1)
    wf1 = jnp.transpose(p['Wf1'].reshape(F1, C1, L3), (2, 1, 0))   # (L3, C1, F1)
    wf1 = jnp.pad(wf1, ((0, 0), (0, C1P - C1), (0, 0))).astype(bf16)
    bf1 = p['bf1'].reshape(1, F1)
    wf2 = p['Wf2'].T.astype(bf16)                                  # (F1, F2) bf16
    bf2 = p['bf2'].reshape(1, F2)
    wf3 = p['Wf3'].T                                               # (F2, 1) f32 (tiny)
    bf3 = p['bf3'].reshape(1, 1)

    # ---------------- fused kernel ----------------
    def kernel(xcol_ref, w1_ref, g1_ref, be1_ref,
               w2_ref, g2_ref, be2_ref,
               wf1_ref, bf1_ref, wf2_ref, bf2_ref, wf3_ref, bf3_ref,
               out_ref, pe_ref, po_ref, pool2_ref):
        # conv1 (k=7, pad=3): four phase-split bf16 matmuls (same FLOPs as one big one)
        w1v = w1_ref[...]
        h = [jnp.dot(xcol_ref[g], w1v, preferred_element_type=jnp.float32)
             for g in range(4)]                                    # 4 x (B*L3, C1P)

        # BatchNorm1d (training-mode batch stats over all B*L1 positions; one-pass
        # E[x^2]-E[x]^2 -- fine at this scale / tolerance) + ReLU
        n1 = float(B * L1)
        m1 = (jnp.sum(h[0], axis=0, keepdims=True) + jnp.sum(h[1], axis=0, keepdims=True)
              + jnp.sum(h[2], axis=0, keepdims=True) + jnp.sum(h[3], axis=0, keepdims=True)) / n1
        ss1 = (jnp.sum(h[0] * h[0], axis=0, keepdims=True)
               + jnp.sum(h[1] * h[1], axis=0, keepdims=True)
               + jnp.sum(h[2] * h[2], axis=0, keepdims=True)
               + jnp.sum(h[3] * h[3], axis=0, keepdims=True)) / n1
        v1 = ss1 - m1 * m1
        sc1 = g1_ref[...] * lax.rsqrt(v1 + EPS)
        sh1 = be1_ref[...] - m1 * sc1
        y0 = jnp.maximum(h[0] * sc1 + sh1, 0.0)
        y1 = jnp.maximum(h[1] * sc1 + sh1, 0.0)
        y2 = jnp.maximum(h[2] * sc1 + sh1, 0.0)
        y3 = jnp.maximum(h[3] * sc1 + sh1, 0.0)

        # MaxPool1d(2,2): pure element-wise max thanks to the phase split.
        pe = jnp.maximum(y0, y1)     # pool1 at even pooled positions j=2i, rows (i, b)
        po = jnp.maximum(y2, y3)     # pool1 at odd pooled positions  j=2i+1
        pe_ref[...] = pe
        po_ref[...] = po

        # conv2 (k=3, pad=1) taps: +/-1 pooled-position shifts.  Position-major row
        # order makes a shift by one position == shift by B rows, batch-safe, and the
        # leading/trailing zero blocks are exactly the conv zero padding.
        zrow = jnp.zeros((B, C1P), jnp.float32)
        po_prev = jnp.concatenate([zrow, po_ref[0:(L3 - 1) * B, :]], axis=0)  # po[i-1]
        pe_next = jnp.concatenate([pe_ref[B:L3 * B, :], zrow], axis=0)        # pe[i+1]

        pe_b = pe.astype(jnp.bfloat16)
        po_b = po.astype(jnp.bfloat16)
        w2_0, w2_1, w2_2 = w2_ref[0], w2_ref[1], w2_ref[2]
        # even output positions j=2i  : W2_0*po[i-1] + W2_1*pe[i] + W2_2*po[i]
        h2e = (jnp.dot(po_prev.astype(jnp.bfloat16), w2_0, preferred_element_type=jnp.float32)
               + jnp.dot(pe_b, w2_1, preferred_element_type=jnp.float32)
               + jnp.dot(po_b, w2_2, preferred_element_type=jnp.float32))
        # odd output positions j=2i+1: W2_0*pe[i] + W2_1*po[i] + W2_2*pe[i+1]
        h2o = (jnp.dot(pe_b, w2_0, preferred_element_type=jnp.float32)
               + jnp.dot(po_b, w2_1, preferred_element_type=jnp.float32)
               + jnp.dot(pe_next.astype(jnp.bfloat16), w2_2, preferred_element_type=jnp.float32))

        n2 = float(B * L2)
        m2 = (jnp.sum(h2e, axis=0, keepdims=True) + jnp.sum(h2o, axis=0, keepdims=True)) / n2
        ss2 = (jnp.sum(h2e * h2e, axis=0, keepdims=True)
               + jnp.sum(h2o * h2o, axis=0, keepdims=True)) / n2
        v2 = ss2 - m2 * m2
        sc2 = g2_ref[...] * lax.rsqrt(v2 + EPS)
        sh2 = be2_ref[...] - m2 * sc2
        y2e = jnp.maximum(h2e * sc2 + sh2, 0.0)
        y2o = jnp.maximum(h2o * sc2 + sh2, 0.0)

        # MaxPool1d(2,2): element-wise max again.  Rows of pool2 are (i, b).
        pool2_ref[...] = jnp.maximum(y2e, y2o)                     # (B*L3, C1P)

        # flatten + fc1: accumulate 25 small (B,128)@(128,256) bf16 matmuls over the
        # pooled position (PyTorch (C,L)-major flatten order is folded into wf1).
        acc = jnp.zeros((B, F1), jnp.float32)
        for i in range(L3):
            blk = pool2_ref[i * B:(i + 1) * B, :].astype(jnp.bfloat16)
            acc = acc + jnp.dot(blk, wf1_ref[i], preferred_element_type=jnp.float32)

        z = jnp.maximum(acc + bf1_ref[...], 0.0)
        z = jnp.maximum(jnp.dot(z.astype(jnp.bfloat16), wf2_ref[...],
                                preferred_element_type=jnp.float32) + bf2_ref[...], 0.0)
        out_ref[...] = jnp.dot(z, wf3_ref[...],
                               preferred_element_type=jnp.float32) + bf3_ref[...]

    args = (xcol, w1, g1, be1,
            w2, g2, be2,
            wf1, bf1, wf2, bf2, wf3, bf3)

    return pl.pallas_call(
        kernel,
        out_shape=jax.ShapeDtypeStruct((B, 1), jnp.float32),
        in_specs=[pl.BlockSpec(memory_space=pltpu.MemorySpace.VMEM)] * len(args),
        out_specs=pl.BlockSpec(memory_space=pltpu.MemorySpace.VMEM),
        scratch_shapes=[pltpu.VMEM((L3 * B, C1P), jnp.float32),   # pe
                        pltpu.VMEM((L3 * B, C1P), jnp.float32),   # po
                        pltpu.VMEM((L3 * B, C1P), jnp.float32)],  # pool2
    )(*args)


# ---------------- deterministic synthetic parameters (PyTorch layouts) ----------------
def init_params(key):
    ks = jax.random.split(key, 16)
    p = {}
    p['W1'] = jax.random.normal(ks[0], (100, 4, 7), jnp.float32) * 0.1      # Conv1d(4,100,7)
    p['b1'] = jax.random.normal(ks[1], (100,), jnp.float32) * 0.1
    p['g1'] = 1.0 + 0.1 * jax.random.normal(ks[2], (100,), jnp.float32)      # BN weight
    p['be1'] = 0.1 * jax.random.normal(ks[3], (100,), jnp.float32)           # BN bias
    p['W2'] = jax.random.normal(ks[4], (100, 100, 3), jnp.float32) * 0.05    # Conv1d(100,100,3)
    p['b2'] = jax.random.normal(ks[5], (100,), jnp.float32) * 0.1
    p['g2'] = 1.0 + 0.1 * jax.random.normal(ks[6], (100,), jnp.float32)
    p['be2'] = 0.1 * jax.random.normal(ks[7], (100,), jnp.float32)
    p['Wf1'] = jax.random.normal(ks[8], (256, 2500), jnp.float32) * 0.02     # Linear(2500,256)
    p['bf1'] = 0.1 * jax.random.normal(ks[9], (256,), jnp.float32)
    p['Wf2'] = jax.random.normal(ks[10], (128, 256), jnp.float32) * 0.05     # Linear(256,128)
    p['bf2'] = 0.1 * jax.random.normal(ks[11], (128,), jnp.float32)
    p['Wf3'] = jax.random.normal(ks[12], (1, 128), jnp.float32) * 0.05       # Linear(128,1)
    p['bf3'] = 0.1 * jax.random.normal(ks[13], (1,), jnp.float32)
    return p


# ---------------- pure-JAX reference (PyTorch NCL semantics) ----------------
def _bn_train(y, g, b):
    m = jnp.mean(y, axis=(0, 2), keepdims=True)
    v = jnp.mean((y - m) ** 2, axis=(0, 2), keepdims=True)
    return (y - m) * lax.rsqrt(v + EPS) * g[None, :, None] + b[None, :, None]


def reference_forward(x, p):
    B = x.shape[0]
    y = lax.conv_general_dilated(x, p['W1'], (1,), [(3, 3)],
                                 dimension_numbers=('NCH', 'OIH', 'NCH'))
    y = y + p['b1'][None, :, None]
    y = jnp.maximum(_bn_train(y, p['g1'], p['be1']), 0.0)
    y = y.reshape(B, y.shape[1], y.shape[2] // 2, 2).max(axis=-1)
    y = lax.conv_general_dilated(y, p['W2'], (1,), [(1, 1)],
                                 dimension_numbers=('NCH', 'OIH', 'NCH'))
    y = y + p['b2'][None, :, None]
    y = jnp.maximum(_bn_train(y, p['g2'], p['be2']), 0.0)
    y = y.reshape(B, y.shape[1], y.shape[2] // 2, 2).max(axis=-1)
    f = y.reshape(B, -1)                                   # PyTorch .view: (C, L)-major
    z = jnp.maximum(f @ p['Wf1'].T + p['bf1'], 0.0)
    z = jnp.maximum(z @ p['Wf2'].T + p['bf2'], 0.0)
    z = z @ p['Wf3'].T + p['bf3']
    return z


if __name__ == "__main__":
    key = jax.random.PRNGKey(0)
    kx, kp = jax.random.split(key)
    # fc_expr requires 100*25 flattened features -> L = 100; input_nc of layer3_expr is 4.
    x = jax.random.normal(kx, (2, 4, 100), jnp.float32)     # (B, C_in, L), PyTorch NCL
    params = init_params(kp)

    out = jax.jit(expr_predict_forward)(x, params)
    out = jax.block_until_ready(out)

    ref = reference_forward(x, params)
    assert out.shape == (2, 1)
    assert bool(jnp.all(jnp.isfinite(out)))
    assert bool(jnp.allclose(out, ref, rtol=2e-2, atol=2e-2)), (out, ref)
    print("KERNEL_OK")
</pallas_src>

<mosaic_0001>
module attributes {stable_mosaic.version = 11 : i64} {
  func.func @kernel(%arg0: memref<4x50x28xbf16, #tpu.memory_space<vmem>>, %arg1: memref<28x128xbf16, #tpu.memory_space<vmem>>, %arg2: memref<1x128xf32, #tpu.memory_space<vmem>>, %arg3: memref<1x128xf32, #tpu.memory_space<vmem>>, %arg4: memref<3x128x128xbf16, #tpu.memory_space<vmem>>, %arg5: memref<1x128xf32, #tpu.memory_space<vmem>>, %arg6: memref<1x128xf32, #tpu.memory_space<vmem>>, %arg7: memref<25x128x256xbf16, #tpu.memory_space<vmem>>, %arg8: memref<1x256xf32, #tpu.memory_space<vmem>>, %arg9: memref<256x128xbf16, #tpu.memory_space<vmem>>, %arg10: memref<1x128xf32, #tpu.memory_space<vmem>>, %arg11: memref<128x1xf32, #tpu.memory_space<vmem>>, %arg12: memref<1x1xf32, #tpu.memory_space<vmem>>, %arg13: memref<2x1xf32, #tpu.memory_space<vmem>>, %arg14: memref<50x128xf32, #tpu.memory_space<vmem>>, %arg15: memref<50x128xf32, #tpu.memory_space<vmem>>, %arg16: memref<50x128xf32, #tpu.memory_space<vmem>>) attributes {dimension_semantics = [], scalar_prefetch = 0 : i64, scratch_operands = 3 : i64, tpu.core_type = #tpu.core_type<tc>} {
    %c0 = arith.constant 0 : index
    %c0_0 = arith.constant 0 : index
    %0 = vector.load %arg1[%c0, %c0_0] : memref<28x128xbf16, #tpu.memory_space<vmem>>, vector<28x128xbf16>
    %c0_1 = arith.constant 0 : index
    %c0_2 = arith.constant 0 : index
    %c0_3 = arith.constant 0 : index
    %1 = vector.load %arg0[%c0_1, %c0_2, %c0_3] : memref<4x50x28xbf16, #tpu.memory_space<vmem>>, vector<1x50x28xbf16>
    %2 = vector.shape_cast %1 : vector<1x50x28xbf16> to vector<50x28xbf16>
    %cst = arith.constant dense<0.000000e+00> : vector<50x128xf32>
    %3 = tpu.matmul %2, %0, %cst {dimension_numbers = #tpu.dot_dimension_numbers<[1], [0], [0], [1], [0, 0, 1, 1], [], []>} : vector<50x28xbf16>, vector<28x128xbf16>, vector<50x128xf32> -> vector<50x128xf32>
    %c1 = arith.constant 1 : index
    %c0_4 = arith.constant 0 : index
    %c0_5 = arith.constant 0 : index
    %4 = vector.load %arg0[%c1, %c0_4, %c0_5] : memref<4x50x28xbf16, #tpu.memory_space<vmem>>, vector<1x50x28xbf16>
    %5 = vector.shape_cast %4 : vector<1x50x28xbf16> to vector<50x28xbf16>
    %cst_6 = arith.constant dense<0.000000e+00> : vector<50x128xf32>
    %6 = tpu.matmul %5, %0, %cst_6 {dimension_numbers = #tpu.dot_dimension_numbers<[1], [0], [0], [1], [0, 0, 1, 1], [], []>} : vector<50x28xbf16>, vector<28x128xbf16>, vector<50x128xf32> -> vector<50x128xf32>
    %c2 = arith.constant 2 : index
    %c0_7 = arith.constant 0 : index
    %c0_8 = arith.constant 0 : index
    %7 = vector.load %arg0[%c2, %c0_7, %c0_8] : memref<4x50x28xbf16, #tpu.memory_space<vmem>>, vector<1x50x28xbf16>
    %8 = vector.shape_cast %7 : vector<1x50x28xbf16> to vector<50x28xbf16>
    %cst_9 = arith.constant dense<0.000000e+00> : vector<50x128xf32>
    %9 = tpu.matmul %8, %0, %cst_9 {dimension_numbers = #tpu.dot_dimension_numbers<[1], [0], [0], [1], [0, 0, 1, 1], [], []>} : vector<50x28xbf16>, vector<28x128xbf16>, vector<50x128xf32> -> vector<50x128xf32>
    %c3 = arith.constant 3 : index
    %c0_10 = arith.constant 0 : index
    %c0_11 = arith.constant 0 : index
    %10 = vector.load %arg0[%c3, %c0_10, %c0_11] : memref<4x50x28xbf16, #tpu.memory_space<vmem>>, vector<1x50x28xbf16>
    %11 = vector.shape_cast %10 : vector<1x50x28xbf16> to vector<50x28xbf16>
    %cst_12 = arith.constant dense<0.000000e+00> : vector<50x128xf32>
    %12 = tpu.matmul %11, %0, %cst_12 {dimension_numbers = #tpu.dot_dimension_numbers<[1], [0], [0], [1], [0, 0, 1, 1], [], []>} : vector<50x28xbf16>, vector<28x128xbf16>, vector<50x128xf32> -> vector<50x128xf32>
    %cst_13 = arith.constant dense<0.000000e+00> : vector<128xf32>
    %13 = vector.multi_reduction <add>, %3, %cst_13 [0] : vector<50x128xf32> to vector<128xf32>
    %14 = vector.shape_cast %13 : vector<128xf32> to vector<1x128xf32>
    %cst_14 = arith.constant dense<0.000000e+00> : vector<128xf32>
    %15 = vector.multi_reduction <add>, %6, %cst_14 [0] : vector<50x128xf32> to vector<128xf32>
    %16 = vector.shape_cast %15 : vector<128xf32> to vector<1x128xf32>
    %17 = arith.addf %14, %16 : vector<1x128xf32>
    %cst_15 = arith.constant dense<0.000000e+00> : vector<128xf32>
    %18 = vector.multi_reduction <add>, %9, %cst_15 [0] : vector<50x128xf32> to vector<128xf32>
    %19 = vector.shape_cast %18 : vector<128xf32> to vector<1x128xf32>
    %20 = arith.addf %17, %19 : vector<1x128xf32>
    %cst_16 = arith.constant dense<0.000000e+00> : vector<128xf32>
    %21 = vector.multi_reduction <add>, %12, %cst_16 [0] : vector<50x128xf32> to vector<128xf32>
    %22 = vector.shape_cast %21 : vector<128xf32> to vector<1x128xf32>
    %23 = arith.addf %20, %22 : vector<1x128xf32>
    %cst_17 = arith.constant 2.000000e+02 : f32
    %24 = vector.broadcast %cst_17 : f32 to vector<1x128xf32>
    %25 = arith.divf %23, %24 : vector<1x128xf32>
    %26 = arith.mulf %3, %3 : vector<50x128xf32>
    %cst_18 = arith.constant dense<0.000000e+00> : vector<128xf32>
    %27 = vector.multi_reduction <add>, %26, %cst_18 [0] : vector<50x128xf32> to vector<128xf32>
    %28 = vector.shape_cast %27 : vector<128xf32> to vector<1x128xf32>
    %29 = arith.mulf %6, %6 : vector<50x128xf32>
    %cst_19 = arith.constant dense<0.000000e+00> : vector<128xf32>
    %30 = vector.multi_reduction <add>, %29, %cst_19 [0] : vector<50x128xf32> to vector<128xf32>
    %31 = vector.shape_cast %30 : vector<128xf32> to vector<1x128xf32>
    %32 = arith.addf %28, %31 : vector<1x128xf32>
    %33 = arith.mulf %9, %9 : vector<50x128xf32>
    %cst_20 = arith.constant dense<0.000000e+00> : vector<128xf32>
    %34 = vector.multi_reduction <add>, %33, %cst_20 [0] : vector<50x128xf32> to vector<128xf32>
    %35 = vector.shape_cast %34 : vector<128xf32> to vector<1x128xf32>
    %36 = arith.addf %32, %35 : vector<1x128xf32>
    %37 = arith.mulf %12, %12 : vector<50x128xf32>
    %cst_21 = arith.constant dense<0.000000e+00> : vector<128xf32>
    %38 = vector.multi_reduction <add>, %37, %cst_21 [0] : vector<50x128xf32> to vector<128xf32>
    %39 = vector.shape_cast %38 : vector<128xf32> to vector<1x128xf32>
    %40 = arith.addf %36, %39 : vector<1x128xf32>
    %cst_22 = arith.constant 2.000000e+02 : f32
    %41 = vector.broadcast %cst_22 : f32 to vector<1x128xf32>
    %42 = arith.divf %40, %41 : vector<1x128xf32>
    %43 = arith.mulf %25, %25 : vector<1x128xf32>
    %44 = arith.subf %42, %43 : vector<1x128xf32>
    %c0_23 = arith.constant 0 : index
    %c0_24 = arith.constant 0 : index
    %45 = vector.load %arg2[%c0_23, %c0_24] : memref<1x128xf32, #tpu.memory_space<vmem>>, vector<1x128xf32>
    %cst_25 = arith.constant 9.99999974E-6 : f32
    %46 = vector.broadcast %cst_25 : f32 to vector<1x128xf32>
    %47 = arith.addf %44, %46 : vector<1x128xf32>
    %48 = math.rsqrt %47 : vector<1x128xf32>
    %49 = arith.mulf %45, %48 : vector<1x128xf32>
    %c0_26 = arith.constant 0 : index
    %c0_27 = arith.constant 0 : index
    %50 = vector.load %arg3[%c0_26, %c0_27] : memref<1x128xf32, #tpu.memory_space<vmem>>, vector<1x128xf32>
    %51 = arith.mulf %25, %49 : vector<1x128xf32>
    %52 = arith.subf %50, %51 : vector<1x128xf32>
    %53 = vector.broadcast %49 : vector<1x128xf32> to vector<50x128xf32>
    %54 = arith.mulf %3, %53 : vector<50x128xf32>
    %55 = vector.broadcast %52 : vector<1x128xf32> to vector<50x128xf32>
    %56 = arith.addf %54, %55 : vector<50x128xf32>
    %cst_28 = arith.constant 0.000000e+00 : f32
    %57 = vector.broadcast %cst_28 : f32 to vector<50x128xf32>
    %58 = arith.maximumf %56, %57 : vector<50x128xf32>
    %59 = vector.broadcast %49 : vector<1x128xf32> to vector<50x128xf32>
    %60 = arith.mulf %6, %59 : vector<50x128xf32>
    %61 = vector.broadcast %52 : vector<1x128xf32> to vector<50x128xf32>
    %62 = arith.addf %60, %61 : vector<50x128xf32>
    %cst_29 = arith.constant 0.000000e+00 : f32
    %63 = vector.broadcast %cst_29 : f32 to vector<50x128xf32>
    %64 = arith.maximumf %62, %63 : vector<50x128xf32>
    %65 = vector.broadcast %49 : vector<1x128xf32> to vector<50x128xf32>
    %66 = arith.mulf %9, %65 : vector<50x128xf32>
    %67 = vector.broadcast %52 : vector<1x128xf32> to vector<50x128xf32>
    %68 = arith.addf %66, %67 : vector<50x128xf32>
    %cst_30 = arith.constant 0.000000e+00 : f32
    %69 = vector.broadcast %cst_30 : f32 to vector<50x128xf32>
    %70 = arith.maximumf %68, %69 : vector<50x128xf32>
    %71 = vector.broadcast %49 : vector<1x128xf32> to vector<50x128xf32>
    %72 = arith.mulf %12, %71 : vector<50x128xf32>
    %73 = vector.broadcast %52 : vector<1x128xf32> to vector<50x128xf32>
    %74 = arith.addf %72, %73 : vector<50x128xf32>
    %cst_31 = arith.constant 0.000000e+00 : f32
    %75 = vector.broadcast %cst_31 : f32 to vector<50x128xf32>
    %76 = arith.maximumf %74, %75 : vector<50x128xf32>
    %77 = arith.maximumf %58, %64 : vector<50x128xf32>
    %78 = arith.maximumf %70, %76 : vector<50x128xf32>
    %c0_32 = arith.constant 0 : index
    %c0_33 = arith.constant 0 : index
    %79 = vector.load %arg14[%c0_32, %c0_33] : memref<50x128xf32, #tpu.memory_space<vmem>>, vector<50x128xf32>
    tpu.vector_store %arg14[%c0_32, %c0_33], %77 {strides = array<i32>} : memref<50x128xf32, #tpu.memory_space<vmem>>, vector<50x128xf32>,
    %c0_34 = arith.constant 0 : index
    %c0_35 = arith.constant 0 : index
    %80 = vector.load %arg15[%c0_34, %c0_35] : memref<50x128xf32, #tpu.memory_space<vmem>>, vector<50x128xf32>
    tpu.vector_store %arg15[%c0_34, %c0_35], %78 {strides = array<i32>} : memref<50x128xf32, #tpu.memory_space<vmem>>, vector<50x128xf32>,
    %cst_36 = arith.constant 0.000000e+00 : f32
    %81 = vector.broadcast %cst_36 : f32 to vector<2x128xf32>
    %c0_37 = arith.constant 0 : index
    %c0_38 = arith.constant 0 : index
    %82 = vector.load %arg15[%c0_37, %c0_38] : memref<50x128xf32, #tpu.memory_space<vmem>>, vector<48x128xf32>
    %83 = tpu.concatenate %81, %82 in 0 : vector<2x128xf32>, vector<48x128xf32> -> vector<50x128xf32>
    %c2_39 = arith.constant 2 : index
    %c0_40 = arith.constant 0 : index
    %84 = vector.load %arg14[%c2_39, %c0_40] : memref<50x128xf32, #tpu.memory_space<vmem>>, vector<48x128xf32>
    %85 = tpu.concatenate %84, %81 in 0 : vector<48x128xf32>, vector<2x128xf32> -> vector<50x128xf32>
    %86 = arith.truncf %77 : vector<50x128xf32> to vector<50x128xbf16>
    %87 = arith.truncf %78 : vector<50x128xf32> to vector<50x128xbf16>
    %c0_41 = arith.constant 0 : index
    %c0_42 = arith.constant 0 : index
    %c0_43 = arith.constant 0 : index
    %88 = vector.load %arg4[%c0_41, %c0_42, %c0_43] : memref<3x128x128xbf16, #tpu.memory_space<vmem>>, vector<1x128x128xbf16>
    %89 = vector.shape_cast %88 : vector<1x128x128xbf16> to vector<128x128xbf16>
    %c1_44 = arith.constant 1 : index
    %c0_45 = arith.constant 0 : index
    %c0_46 = arith.constant 0 : index
    %90 = vector.load %arg4[%c1_44, %c0_45, %c0_46] : memref<3x128x128xbf16, #tpu.memory_space<vmem>>, vector<1x128x128xbf16>
    %91 = vector.shape_cast %90 : vector<1x128x128xbf16> to vector<128x128xbf16>
    %c2_47 = arith.constant 2 : index
    %c0_48 = arith.constant 0 : index
    %c0_49 = arith.constant 0 : index
    %92 = vector.load %arg4[%c2_47, %c0_48, %c0_49] : memref<3x128x128xbf16, #tpu.memory_space<vmem>>, vector<1x128x128xbf16>
    %93 = vector.shape_cast %92 : vector<1x128x128xbf16> to vector<128x128xbf16>
    %94 = arith.truncf %83 : vector<50x128xf32> to vector<50x128xbf16>
    %cst_50 = arith.constant dense<0.000000e+00> : vector<50x128xf32>
    %95 = tpu.matmul %94, %89, %cst_50 {dimension_numbers = #tpu.dot_dimension_numbers<[1], [0], [0], [1], [0, 0, 1, 1], [], []>} : vector<50x128xbf16>, vector<128x128xbf16>, vector<50x128xf32> -> vector<50x128xf32>
    %cst_51 = arith.constant dense<0.000000e+00> : vector<50x128xf32>
    %96 = tpu.matmul %86, %91, %cst_51 {dimension_numbers = #tpu.dot_dimension_numbers<[1], [0], [0], [1], [0, 0, 1, 1], [], []>} : vector<50x128xbf16>, vector<128x128xbf16>, vector<50x128xf32> -> vector<50x128xf32>
    %97 = arith.addf %95, %96 : vector<50x128xf32>
    %cst_52 = arith.constant dense<0.000000e+00> : vector<50x128xf32>
    %98 = tpu.matmul %87, %93, %cst_52 {dimension_numbers = #tpu.dot_dimension_numbers<[1], [0], [0], [1], [0, 0, 1, 1], [], []>} : vector<50x128xbf16>, vector<128x128xbf16>, vector<50x128xf32> -> vector<50x128xf32>
    %99 = arith.addf %97, %98 : vector<50x128xf32>
    %cst_53 = arith.constant dense<0.000000e+00> : vector<50x128xf32>
    %100 = tpu.matmul %86, %89, %cst_53 {dimension_numbers = #tpu.dot_dimension_numbers<[1], [0], [0], [1], [0, 0, 1, 1], [], []>} : vector<50x128xbf16>, vector<128x128xbf16>, vector<50x128xf32> -> vector<50x128xf32>
    %cst_54 = arith.constant dense<0.000000e+00> : vector<50x128xf32>
    %101 = tpu.matmul %87, %91, %cst_54 {dimension_numbers = #tpu.dot_dimension_numbers<[1], [0], [0], [1], [0, 0, 1, 1], [], []>} : vector<50x128xbf16>, vector<128x128xbf16>, vector<50x128xf32> -> vector<50x128xf32>
    %102 = arith.addf %100, %101 : vector<50x128xf32>
    %103 = arith.truncf %85 : vector<50x128xf32> to vector<50x128xbf16>
    %cst_55 = arith.constant dense<0.000000e+00> : vector<50x128xf32>
    %104 = tpu.matmul %103, %93, %cst_55 {dimension_numbers = #tpu.dot_dimension_numbers<[1], [0], [0], [1], [0, 0, 1, 1], [], []>} : vector<50x128xbf16>, vector<128x128xbf16>, vector<50x128xf32> -> vector<50x128xf32>
    %105 = arith.addf %102, %104 : vector<50x128xf32>
    %cst_56 = arith.constant dense<0.000000e+00> : vector<128xf32>
    %106 = vector.multi_reduction <add>, %99, %cst_56 [0] : vector<50x128xf32> to vector<128xf32>
    %107 = vector.shape_cast %106 : vector<128xf32> to vector<1x128xf32>
    %cst_57 = arith.constant dense<0.000000e+00> : vector<128xf32>
    %108 = vector.multi_reduction <add>, %105, %cst_57 [0] : vector<50x128xf32> to vector<128xf32>
    %109 = vector.shape_cast %108 : vector<128xf32> to vector<1x128xf32>
    %110 = arith.addf %107, %109 : vector<1x128xf32>
    %cst_58 = arith.constant 1.000000e+02 : f32
    %111 = vector.broadcast %cst_58 : f32 to vector<1x128xf32>
    %112 = arith.divf %110, %111 : vector<1x128xf32>
    %113 = arith.mulf %99, %99 : vector<50x128xf32>
    %cst_59 = arith.constant dense<0.000000e+00> : vector<128xf32>
    %114 = vector.multi_reduction <add>, %113, %cst_59 [0] : vector<50x128xf32> to vector<128xf32>
    %115 = vector.shape_cast %114 : vector<128xf32> to vector<1x128xf32>
    %116 = arith.mulf %105, %105 : vector<50x128xf32>
    %cst_60 = arith.constant dense<0.000000e+00> : vector<128xf32>
    %117 = vector.multi_reduction <add>, %116, %cst_60 [0] : vector<50x128xf32> to vector<128xf32>
    %118 = vector.shape_cast %117 : vector<128xf32> to vector<1x128xf32>
    %119 = arith.addf %115, %118 : vector<1x128xf32>
    %cst_61 = arith.constant 1.000000e+02 : f32
    %120 = vector.broadcast %cst_61 : f32 to vector<1x128xf32>
    %121 = arith.divf %119, %120 : vector<1x128xf32>
    %122 = arith.mulf %112, %112 : vector<1x128xf32>
    %123 = arith.subf %121, %122 : vector<1x128xf32>
    %c0_62 = arith.constant 0 : index
    %c0_63 = arith.constant 0 : index
    %124 = vector.load %arg5[%c0_62, %c0_63] : memref<1x128xf32, #tpu.memory_space<vmem>>, vector<1x128xf32>
    %cst_64 = arith.constant 9.99999974E-6 : f32
    %125 = vector.broadcast %cst_64 : f32 to vector<1x128xf32>
    %126 = arith.addf %123, %125 : vector<1x128xf32>
    %127 = math.rsqrt %126 : vector<1x128xf32>
    %128 = arith.mulf %124, %127 : vector<1x128xf32>
    %c0_65 = arith.constant 0 : index
    %c0_66 = arith.constant 0 : index
    %129 = vector.load %arg6[%c0_65, %c0_66] : memref<1x128xf32, #tpu.memory_space<vmem>>, vector<1x128xf32>
    %130 = arith.mulf %112, %128 : vector<1x128xf32>
    %131 = arith.subf %129, %130 : vector<1x128xf32>
    %132 = vector.broadcast %128 : vector<1x128xf32> to vector<50x128xf32>
    %133 = arith.mulf %99, %132 : vector<50x128xf32>
    %134 = vector.broadcast %131 : vector<1x128xf32> to vector<50x128xf32>
    %135 = arith.addf %133, %134 : vector<50x128xf32>
    %cst_67 = arith.constant 0.000000e+00 : f32
    %136 = vector.broadcast %cst_67 : f32 to vector<50x128xf32>
    %137 = arith.maximumf %135, %136 : vector<50x128xf32>
    %138 = vector.broadcast %128 : vector<1x128xf32> to vector<50x128xf32>
    %139 = arith.mulf %105, %138 : vector<50x128xf32>
    %140 = vector.broadcast %131 : vector<1x128xf32> to vector<50x128xf32>
    %141 = arith.addf %139, %140 : vector<50x128xf32>
    %cst_68 = arith.constant 0.000000e+00 : f32
    %142 = vector.broadcast %cst_68 : f32 to vector<50x128xf32>
    %143 = arith.maximumf %141, %142 : vector<50x128xf32>
    %144 = arith.maximumf %137, %143 : vector<50x128xf32>
    %c0_69 = arith.constant 0 : index
    %c0_70 = arith.constant 0 : index
    %145 = vector.load %arg16[%c0_69, %c0_70] : memref<50x128xf32, #tpu.memory_space<vmem>>, vector<50x128xf32>
    tpu.vector_store %arg16[%c0_69, %c0_70], %144 {strides = array<i32>} : memref<50x128xf32, #tpu.memory_space<vmem>>, vector<50x128xf32>,
    %cst_71 = arith.constant 0.000000e+00 : f32
    %146 = vector.broadcast %cst_71 : f32 to vector<2x256xf32>
    %c0_72 = arith.constant 0 : index
    %c0_73 = arith.constant 0 : index
    %147 = vector.load %arg16[%c0_72, %c0_73] : memref<50x128xf32, #tpu.memory_space<vmem>>, vector<2x128xf32>
    %148 = arith.truncf %147 : vector<2x128xf32> to vector<2x128xbf16>
    %c0_74 = arith.constant 0 : index
    %c0_75 = arith.constant 0 : index
    %c0_76 = arith.constant 0 : index
    %149 = vector.load %arg7[%c0_74, %c0_75, %c0_76] : memref<25x128x256xbf16, #tpu.memory_space<vmem>>, vector<1x128x256xbf16>
    %150 = vector.shape_cast %149 : vector<1x128x256xbf16> to vector<128x256xbf16>
    %cst_77 = arith.constant dense<0.000000e+00> : vector<2x256xf32>
    %151 = tpu.matmul %148, %150, %cst_77 {dimension_numbers = #tpu.dot_dimension_numbers<[1], [0], [0], [1], [0, 0, 1, 1], [], []>} : vector<2x128xbf16>, vector<128x256xbf16>, vector<2x256xf32> -> vector<2x256xf32>
    %152 = arith.addf %146, %151 : vector<2x256xf32>
    %c2_78 = arith.constant 2 : index
    %c0_79 = arith.constant 0 : index
    %153 = vector.load %arg16[%c2_78, %c0_79] : memref<50x128xf32, #tpu.memory_space<vmem>>, vector<2x128xf32>
    %154 = arith.truncf %153 : vector<2x128xf32> to vector<2x128xbf16>
    %c1_80 = arith.constant 1 : index
    %c0_81 = arith.constant 0 : index
    %c0_82 = arith.constant 0 : index
    %155 = vector.load %arg7[%c1_80, %c0_81, %c0_82] : memref<25x128x256xbf16, #tpu.memory_space<vmem>>, vector<1x128x256xbf16>
    %156 = vector.shape_cast %155 : vector<1x128x256xbf16> to vector<128x256xbf16>
    %cst_83 = arith.constant dense<0.000000e+00> : vector<2x256xf32>
    %157 = tpu.matmul %154, %156, %cst_83 {dimension_numbers = #tpu.dot_dimension_numbers<[1], [0], [0], [1], [0, 0, 1, 1], [], []>} : vector<2x128xbf16>, vector<128x256xbf16>, vector<2x256xf32> -> vector<2x256xf32>
    %158 = arith.addf %152, %157 : vector<2x256xf32>
    %c4 = arith.constant 4 : index
    %c0_84 = arith.constant 0 : index
    %159 = vector.load %arg16[%c4, %c0_84] : memref<50x128xf32, #tpu.memory_space<vmem>>, vector<2x128xf32>
    %160 = arith.truncf %159 : vector<2x128xf32> to vector<2x128xbf16>
    %c2_85 = arith.constant 2 : index
    %c0_86 = arith.constant 0 : index
    %c0_87 = arith.constant 0 : index
    %161 = vector.load %arg7[%c2_85, %c0_86, %c0_87] : memref<25x128x256xbf16, #tpu.memory_space<vmem>>, vector<1x128x256xbf16>
    %162 = vector.shape_cast %161 : vector<1x128x256xbf16> to vector<128x256xbf16>
    %cst_88 = arith.constant dense<0.000000e+00> : vector<2x256xf32>
    %163 = tpu.matmul %160, %162, %cst_88 {dimension_numbers = #tpu.dot_dimension_numbers<[1], [0], [0], [1], [0, 0, 1, 1], [], []>} : vector<2x128xbf16>, vector<128x256xbf16>, vector<2x256xf32> -> vector<2x256xf32>
    %164 = arith.addf %158, %163 : vector<2x256xf32>
    %c6 = arith.constant 6 : index
    %c0_89 = arith.constant 0 : index
    %165 = vector.load %arg16[%c6, %c0_89] : memref<50x128xf32, #tpu.memory_space<vmem>>, vector<2x128xf32>
    %166 = arith.truncf %165 : vector<2x128xf32> to vector<2x128xbf16>
    %c3_90 = arith.constant 3 : index
    %c0_91 = arith.constant 0 : index
    %c0_92 = arith.constant 0 : index
    %167 = vector.load %arg7[%c3_90, %c0_91, %c0_92] : memref<25x128x256xbf16, #tpu.memory_space<vmem>>, vector<1x128x256xbf16>
    %168 = vector.shape_cast %167 : vector<1x128x256xbf16> to vector<128x256xbf16>
    %cst_93 = arith.constant dense<0.000000e+00> : vector<2x256xf32>
    %169 = tpu.matmul %166, %168, %cst_93 {dimension_numbers = #tpu.dot_dimension_numbers<[1], [0], [0], [1], [0, 0, 1, 1], [], []>} : vector<2x128xbf16>, vector<128x256xbf16>, vector<2x256xf32> -> vector<2x256xf32>
    %170 = arith.addf %164, %169 : vector<2x256xf32>
    %c8 = arith.constant 8 : index
    %c0_94 = arith.constant 0 : index
    %171 = vector.load %arg16[%c8, %c0_94] : memref<50x128xf32, #tpu.memory_space<vmem>>, vector<2x128xf32>
    %172 = arith.truncf %171 : vector<2x128xf32> to vector<2x128xbf16>
    %c4_95 = arith.constant 4 : index
    %c0_96 = arith.constant 0 : index
    %c0_97 = arith.constant 0 : index
    %173 = vector.load %arg7[%c4_95, %c0_96, %c0_97] : memref<25x128x256xbf16, #tpu.memory_space<vmem>>, vector<1x128x256xbf16>
    %174 = vector.shape_cast %173 : vector<1x128x256xbf16> to vector<128x256xbf16>
    %cst_98 = arith.constant dense<0.000000e+00> : vector<2x256xf32>
    %175 = tpu.matmul %172, %174, %cst_98 {dimension_numbers = #tpu.dot_dimension_numbers<[1], [0], [0], [1], [0, 0, 1, 1], [], []>} : vector<2x128xbf16>, vector<128x256xbf16>, vector<2x256xf32> -> vector<2x256xf32>
    %176 = arith.addf %170, %175 : vector<2x256xf32>
    %c10 = arith.constant 10 : index
    %c0_99 = arith.constant 0 : index
    %177 = vector.load %arg16[%c10, %c0_99] : memref<50x128xf32, #tpu.memory_space<vmem>>, vector<2x128xf32>
    %178 = arith.truncf %177 : vector<2x128xf32> to vector<2x128xbf16>
    %c5 = arith.constant 5 : index
    %c0_100 = arith.constant 0 : index
    %c0_101 = arith.constant 0 : index
    %179 = vector.load %arg7[%c5, %c0_100, %c0_101] : memref<25x128x256xbf16, #tpu.memory_space<vmem>>, vector<1x128x256xbf16>
    %180 = vector.shape_cast %179 : vector<1x128x256xbf16> to vector<128x256xbf16>
    %cst_102 = arith.constant dense<0.000000e+00> : vector<2x256xf32>
    %181 = tpu.matmul %178, %180, %cst_102 {dimension_numbers = #tpu.dot_dimension_numbers<[1], [0], [0], [1], [0, 0, 1, 1], [], []>} : vector<2x128xbf16>, vector<128x256xbf16>, vector<2x256xf32> -> vector<2x256xf32>
    %182 = arith.addf %176, %181 : vector<2x256xf32>
    %c12 = arith.constant 12 : index
    %c0_103 = arith.constant 0 : index
    %183 = vector.load %arg16[%c12, %c0_103] : memref<50x128xf32, #tpu.memory_space<vmem>>, vector<2x128xf32>
    %184 = arith.truncf %183 : vector<2x128xf32> to vector<2x128xbf16>
    %c6_104 = arith.constant 6 : index
    %c0_105 = arith.constant 0 : index
    %c0_106 = arith.constant 0 : index
    %185 = vector.load %arg7[%c6_104, %c0_105, %c0_106] : memref<25x128x256xbf16, #tpu.memory_space<vmem>>, vector<1x128x256xbf16>
    %186 = vector.shape_cast %185 : vector<1x128x256xbf16> to vector<128x256xbf16>
    %cst_107 = arith.constant dense<0.000000e+00> : vector<2x256xf32>
    %187 = tpu.matmul %184, %186, %cst_107 {dimension_numbers = #tpu.dot_dimension_numbers<[1], [0], [0], [1], [0, 0, 1, 1], [], []>} : vector<2x128xbf16>, vector<128x256xbf16>, vector<2x256xf32> -> vector<2x256xf32>
    %188 = arith.addf %182, %187 : vector<2x256xf32>
    %c14 = arith.constant 14 : index
    %c0_108 = arith.constant 0 : index
    %189 = vector.load %arg16[%c14, %c0_108] : memref<50x128xf32, #tpu.memory_space<vmem>>, vector<2x128xf32>
    %190 = arith.truncf %189 : vector<2x128xf32> to vector<2x128xbf16>
    %c7 = arith.constant 7 : index
    %c0_109 = arith.constant 0 : index
    %c0_110 = arith.constant 0 : index
    %191 = vector.load %arg7[%c7, %c0_109, %c0_110] : memref<25x128x256xbf16, #tpu.memory_space<vmem>>, vector<1x128x256xbf16>
    %192 = vector.shape_cast %191 : vector<1x128x256xbf16> to vector<128x256xbf16>
    %cst_111 = arith.constant dense<0.000000e+00> : vector<2x256xf32>
    %193 = tpu.matmul %190, %192, %cst_111 {dimension_numbers = #tpu.dot_dimension_numbers<[1], [0], [0], [1], [0, 0, 1, 1], [], []>} : vector<2x128xbf16>, vector<128x256xbf16>, vector<2x256xf32> -> vector<2x256xf32>
    %194 = arith.addf %188, %193 : vector<2x256xf32>
    %c16 = arith.constant 16 : index
    %c0_112 = arith.constant 0 : index
    %195 = vector.load %arg16[%c16, %c0_112] : memref<50x128xf32, #tpu.memory_space<vmem>>, vector<2x128xf32>
    %196 = arith.truncf %195 : vector<2x128xf32> to vector<2x128xbf16>
    %c8_113 = arith.constant 8 : index
    %c0_114 = arith.constant 0 : index
    %c0_115 = arith.constant 0 : index
    %197 = vector.load %arg7[%c8_113, %c0_114, %c0_115] : memref<25x128x256xbf16, #tpu.memory_space<vmem>>, vector<1x128x256xbf16>
    %198 = vector.shape_cast %197 : vector<1x128x256xbf16> to vector<128x256xbf16>
    %cst_116 = arith.constant dense<0.000000e+00> : vector<2x256xf32>
    %199 = tpu.matmul %196, %198, %cst_116 {dimension_numbers = #tpu.dot_dimension_numbers<[1], [0], [0], [1], [0, 0, 1, 1], [], []>} : vector<2x128xbf16>, vector<128x256xbf16>, vector<2x256xf32> -> vector<2x256xf32>
    %200 = arith.addf %194, %199 : vector<2x256xf32>
    %c18 = arith.constant 18 : index
    %c0_117 = arith.constant 0 : index
    %201 = vector.load %arg16[%c18, %c0_117] : memref<50x128xf32, #tpu.memory_space<vmem>>, vector<2x128xf32>
    %202 = arith.truncf %201 : vector<2x128xf32> to vector<2x128xbf16>
    %c9 = arith.constant 9 : index
    %c0_118 = arith.constant 0 : index
    %c0_119 = arith.constant 0 : index
    %203 = vector.load %arg7[%c9, %c0_118, %c0_119] : memref<25x128x256xbf16, #tpu.memory_space<vmem>>, vector<1x128x256xbf16>
    %204 = vector.shape_cast %203 : vector<1x128x256xbf16> to vector<128x256xbf16>
    %cst_120 = arith.constant dense<0.000000e+00> : vector<2x256xf32>
    %205 = tpu.matmul %202, %204, %cst_120 {dimension_numbers = #tpu.dot_dimension_numbers<[1], [0], [0], [1], [0, 0, 1, 1], [], []>} : vector<2x128xbf16>, vector<128x256xbf16>, vector<2x256xf32> -> vector<2x256xf32>
    %206 = arith.addf %200, %205 : vector<2x256xf32>
    %c20 = arith.constant 20 : index
    %c0_121 = arith.constant 0 : index
    %207 = vector.load %arg16[%c20, %c0_121] : memref<50x128xf32, #tpu.memory_space<vmem>>, vector<2x128xf32>
    %208 = arith.truncf %207 : vector<2x128xf32> to vector<2x128xbf16>
    %c10_122 = arith.constant 10 : index
    %c0_123 = arith.constant 0 : index
    %c0_124 = arith.constant 0 : index
    %209 = vector.load %arg7[%c10_122, %c0_123, %c0_124] : memref<25x128x256xbf16, #tpu.memory_space<vmem>>, vector<1x128x256xbf16>
    %210 = vector.shape_cast %209 : vector<1x128x256xbf16> to vector<128x256xbf16>
    %cst_125 = arith.constant dense<0.000000e+00> : vector<2x256xf32>
    %211 = tpu.matmul %208, %210, %cst_125 {dimension_numbers = #tpu.dot_dimension_numbers<[1], [0], [0], [1], [0, 0, 1, 1], [], []>} : vector<2x128xbf16>, vector<128x256xbf16>, vector<2x256xf32> -> vector<2x256xf32>
    %212 = arith.addf %206, %211 : vector<2x256xf32>
    %c22 = arith.constant 22 : index
    %c0_126 = arith.constant 0 : index
    %213 = vector.load %arg16[%c22, %c0_126] : memref<50x128xf32, #tpu.memory_space<vmem>>, vector<2x128xf32>
    %214 = arith.truncf %213 : vector<2x128xf32> to vector<2x128xbf16>
    %c11 = arith.constant 11 : index
    %c0_127 = arith.constant 0 : index
    %c0_128 = arith.constant 0 : index
    %215 = vector.load %arg7[%c11, %c0_127, %c0_128] : memref<25x128x256xbf16, #tpu.memory_space<vmem>>, vector<1x128x256xbf16>
    %216 = vector.shape_cast %215 : vector<1x128x256xbf16> to vector<128x256xbf16>
    %cst_129 = arith.constant dense<0.000000e+00> : vector<2x256xf32>
    %217 = tpu.matmul %214, %216, %cst_129 {dimension_numbers = #tpu.dot_dimension_numbers<[1], [0], [0], [1], [0, 0, 1, 1], [], []>} : vector<2x128xbf16>, vector<128x256xbf16>, vector<2x256xf32> -> vector<2x256xf32>
    %218 = arith.addf %212, %217 : vector<2x256xf32>
    %c24 = arith.constant 24 : index
    %c0_130 = arith.constant 0 : index
    %219 = vector.load %arg16[%c24, %c0_130] : memref<50x128xf32, #tpu.memory_space<vmem>>, vector<2x128xf32>
    %220 = arith.truncf %219 : vector<2x128xf32> to vector<2x128xbf16>
    %c12_131 = arith.constant 12 : index
    %c0_132 = arith.constant 0 : index
    %c0_133 = arith.constant 0 : index
    %221 = vector.load %arg7[%c12_131, %c0_132, %c0_133] : memref<25x128x256xbf16, #tpu.memory_space<vmem>>, vector<1x128x256xbf16>
    %222 = vector.shape_cast %221 : vector<1x128x256xbf16> to vector<128x256xbf16>
    %cst_134 = arith.constant dense<0.000000e+00> : vector<2x256xf32>
    %223 = tpu.matmul %220, %222, %cst_134 {dimension_numbers = #tpu.dot_dimension_numbers<[1], [0], [0], [1], [0, 0, 1, 1], [], []>} : vector<2x128xbf16>, vector<128x256xbf16>, vector<2x256xf32> -> vector<2x256xf32>
    %224 = arith.addf %218, %223 : vector<2x256xf32>
    %c26 = arith.constant 26 : index
    %c0_135 = arith.constant 0 : index
    %225 = vector.load %arg16[%c26, %c0_135] : memref<50x128xf32, #tpu.memory_space<vmem>>, vector<2x128xf32>
    %226 = arith.truncf %225 : vector<2x128xf32> to vector<2x128xbf16>
    %c13 = arith.constant 13 : index
    %c0_136 = arith.constant 0 : index
    %c0_137 = arith.constant 0 : index
    %227 = vector.load %arg7[%c13, %c0_136, %c0_137] : memref<25x128x256xbf16, #tpu.memory_space<vmem>>, vector<1x128x256xbf16>
    %228 = vector.shape_cast %227 : vector<1x128x256xbf16> to vector<128x256xbf16>
    %cst_138 = arith.constant dense<0.000000e+00> : vector<2x256xf32>
    %229 = tpu.matmul %226, %228, %cst_138 {dimension_numbers = #tpu.dot_dimension_numbers<[1], [0], [0], [1], [0, 0, 1, 1], [], []>} : vector<2x128xbf16>, vector<128x256xbf16>, vector<2x256xf32> -> vector<2x256xf32>
    %230 = arith.addf %224, %229 : vector<2x256xf32>
    %c28 = arith.constant 28 : index
    %c0_139 = arith.constant 0 : index
    %231 = vector.load %arg16[%c28, %c0_139] : memref<50x128xf32, #tpu.memory_space<vmem>>, vector<2x128xf32>
    %232 = arith.truncf %231 : vector<2x128xf32> to vector<2x128xbf16>
    %c14_140 = arith.constant 14 : index
    %c0_141 = arith.constant 0 : index
    %c0_142 = arith.constant 0 : index
    %233 = vector.load %arg7[%c14_140, %c0_141, %c0_142] : memref<25x128x256xbf16, #tpu.memory_space<vmem>>, vector<1x128x256xbf16>
    %234 = vector.shape_cast %233 : vector<1x128x256xbf16> to vector<128x256xbf16>
    %cst_143 = arith.constant dense<0.000000e+00> : vector<2x256xf32>
    %235 = tpu.matmul %232, %234, %cst_143 {dimension_numbers = #tpu.dot_dimension_numbers<[1], [0], [0], [1], [0, 0, 1, 1], [], []>} : vector<2x128xbf16>, vector<128x256xbf16>, vector<2x256xf32> -> vector<2x256xf32>
    %236 = arith.addf %230, %235 : vector<2x256xf32>
    %c30 = arith.constant 30 : index
    %c0_144 = arith.constant 0 : index
    %237 = vector.load %arg16[%c30, %c0_144] : memref<50x128xf32, #tpu.memory_space<vmem>>, vector<2x128xf32>
    %238 = arith.truncf %237 : vector<2x128xf32> to vector<2x128xbf16>
    %c15 = arith.constant 15 : index
    %c0_145 = arith.constant 0 : index
    %c0_146 = arith.constant 0 : index
    %239 = vector.load %arg7[%c15, %c0_145, %c0_146] : memref<25x128x256xbf16, #tpu.memory_space<vmem>>, vector<1x128x256xbf16>
    %240 = vector.shape_cast %239 : vector<1x128x256xbf16> to vector<128x256xbf16>
    %cst_147 = arith.constant dense<0.000000e+00> : vector<2x256xf32>
    %241 = tpu.matmul %238, %240, %cst_147 {dimension_numbers = #tpu.dot_dimension_numbers<[1], [0], [0], [1], [0, 0, 1, 1], [], []>} : vector<2x128xbf16>, vector<128x256xbf16>, vector<2x256xf32> -> vector<2x256xf32>
    %242 = arith.addf %236, %241 : vector<2x256xf32>
    %c32 = arith.constant 32 : index
    %c0_148 = arith.constant 0 : index
    %243 = vector.load %arg16[%c32, %c0_148] : memref<50x128xf32, #tpu.memory_space<vmem>>, vector<2x128xf32>
    %244 = arith.truncf %243 : vector<2x128xf32> to vector<2x128xbf16>
    %c16_149 = arith.constant 16 : index
    %c0_150 = arith.constant 0 : index
    %c0_151 = arith.constant 0 : index
    %245 = vector.load %arg7[%c16_149, %c0_150, %c0_151] : memref<25x128x256xbf16, #tpu.memory_space<vmem>>, vector<1x128x256xbf16>
    %246 = vector.shape_cast %245 : vector<1x128x256xbf16> to vector<128x256xbf16>
    %cst_152 = arith.constant dense<0.000000e+00> : vector<2x256xf32>
    %247 = tpu.matmul %244, %246, %cst_152 {dimension_numbers = #tpu.dot_dimension_numbers<[1], [0], [0], [1], [0, 0, 1, 1], [], []>} : vector<2x128xbf16>, vector<128x256xbf16>, vector<2x256xf32> -> vector<2x256xf32>
    %248 = arith.addf %242, %247 : vector<2x256xf32>
    %c34 = arith.constant 34 : index
    %c0_153 = arith.constant 0 : index
    %249 = vector.load %arg16[%c34, %c0_153] : memref<50x128xf32, #tpu.memory_space<vmem>>, vector<2x128xf32>
    %250 = arith.truncf %249 : vector<2x128xf32> to vector<2x128xbf16>
    %c17 = arith.constant 17 : index
    %c0_154 = arith.constant 0 : index
    %c0_155 = arith.constant 0 : index
    %251 = vector.load %arg7[%c17, %c0_154, %c0_155] : memref<25x128x256xbf16, #tpu.memory_space<vmem>>, vector<1x128x256xbf16>
    %252 = vector.shape_cast %251 : vector<1x128x256xbf16> to vector<128x256xbf16>
    %cst_156 = arith.constant dense<0.000000e+00> : vector<2x256xf32>
    %253 = tpu.matmul %250, %252, %cst_156 {dimension_numbers = #tpu.dot_dimension_numbers<[1], [0], [0], [1], [0, 0, 1, 1], [], []>} : vector<2x128xbf16>, vector<128x256xbf16>, vector<2x256xf32> -> vector<2x256xf32>
    %254 = arith.addf %248, %253 : vector<2x256xf32>
    %c36 = arith.constant 36 : index
    %c0_157 = arith.constant 0 : index
    %255 = vector.load %arg16[%c36, %c0_157] : memref<50x128xf32, #tpu.memory_space<vmem>>, vector<2x128xf32>
    %256 = arith.truncf %255 : vector<2x128xf32> to vector<2x128xbf16>
    %c18_158 = arith.constant 18 : index
    %c0_159 = arith.constant 0 : index
    %c0_160 = arith.constant 0 : index
    %257 = vector.load %arg7[%c18_158, %c0_159, %c0_160] : memref<25x128x256xbf16, #tpu.memory_space<vmem>>, vector<1x128x256xbf16>
    %258 = vector.shape_cast %257 : vector<1x128x256xbf16> to vector<128x256xbf16>
    %cst_161 = arith.constant dense<0.000000e+00> : vector<2x256xf32>
    %259 = tpu.matmul %256, %258, %cst_161 {dimension_numbers = #tpu.dot_dimension_numbers<[1], [0], [0], [1], [0, 0, 1, 1], [], []>} : vector<2x128xbf16>, vector<128x256xbf16>, vector<2x256xf32> -> vector<2x256xf32>
    %260 = arith.addf %254, %259 : vector<2x256xf32>
    %c38 = arith.constant 38 : index
    %c0_162 = arith.constant 0 : index
    %261 = vector.load %arg16[%c38, %c0_162] : memref<50x128xf32, #tpu.memory_space<vmem>>, vector<2x128xf32>
    %262 = arith.truncf %261 : vector<2x128xf32> to vector<2x128xbf16>
    %c19 = arith.constant 19 : index
    %c0_163 = arith.constant 0 : index
    %c0_164 = arith.constant 0 : index
    %263 = vector.load %arg7[%c19, %c0_163, %c0_164] : memref<25x128x256xbf16, #tpu.memory_space<vmem>>, vector<1x128x256xbf16>
    %264 = vector.shape_cast %263 : vector<1x128x256xbf16> to vector<128x256xbf16>
    %cst_165 = arith.constant dense<0.000000e+00> : vector<2x256xf32>
    %265 = tpu.matmul %262, %264, %cst_165 {dimension_numbers = #tpu.dot_dimension_numbers<[1], [0], [0], [1], [0, 0, 1, 1], [], []>} : vector<2x128xbf16>, vector<128x256xbf16>, vector<2x256xf32> -> vector<2x256xf32>
    %266 = arith.addf %260, %265 : vector<2x256xf32>
    %c40 = arith.constant 40 : index
    %c0_166 = arith.constant 0 : index
    %267 = vector.load %arg16[%c40, %c0_166] : memref<50x128xf32, #tpu.memory_space<vmem>>, vector<2x128xf32>
    %268 = arith.truncf %267 : vector<2x128xf32> to vector<2x128xbf16>
    %c20_167 = arith.constant 20 : index
    %c0_168 = arith.constant 0 : index
    %c0_169 = arith.constant 0 : index
    %269 = vector.load %arg7[%c20_167, %c0_168, %c0_169] : memref<25x128x256xbf16, #tpu.memory_space<vmem>>, vector<1x128x256xbf16>
    %270 = vector.shape_cast %269 : vector<1x128x256xbf16> to vector<128x256xbf16>
    %cst_170 = arith.constant dense<0.000000e+00> : vector<2x256xf32>
    %271 = tpu.matmul %268, %270, %cst_170 {dimension_numbers = #tpu.dot_dimension_numbers<[1], [0], [0], [1], [0, 0, 1, 1], [], []>} : vector<2x128xbf16>, vector<128x256xbf16>, vector<2x256xf32> -> vector<2x256xf32>
    %272 = arith.addf %266, %271 : vector<2x256xf32>
    %c42 = arith.constant 42 : index
    %c0_171 = arith.constant 0 : index
    %273 = vector.load %arg16[%c42, %c0_171] : memref<50x128xf32, #tpu.memory_space<vmem>>, vector<2x128xf32>
    %274 = arith.truncf %273 : vector<2x128xf32> to vector<2x128xbf16>
    %c21 = arith.constant 21 : index
    %c0_172 = arith.constant 0 : index
    %c0_173 = arith.constant 0 : index
    %275 = vector.load %arg7[%c21, %c0_172, %c0_173] : memref<25x128x256xbf16, #tpu.memory_space<vmem>>, vector<1x128x256xbf16>
    %276 = vector.shape_cast %275 : vector<1x128x256xbf16> to vector<128x256xbf16>
    %cst_174 = arith.constant dense<0.000000e+00> : vector<2x256xf32>
    %277 = tpu.matmul %274, %276, %cst_174 {dimension_numbers = #tpu.dot_dimension_numbers<[1], [0], [0], [1], [0, 0, 1, 1], [], []>} : vector<2x128xbf16>, vector<128x256xbf16>, vector<2x256xf32> -> vector<2x256xf32>
    %278 = arith.addf %272, %277 : vector<2x256xf32>
    %c44 = arith.constant 44 : index
    %c0_175 = arith.constant 0 : index
    %279 = vector.load %arg16[%c44, %c0_175] : memref<50x128xf32, #tpu.memory_space<vmem>>, vector<2x128xf32>
    %280 = arith.truncf %279 : vector<2x128xf32> to vector<2x128xbf16>
    %c22_176 = arith.constant 22 : index
    %c0_177 = arith.constant 0 : index
    %c0_178 = arith.constant 0 : index
    %281 = vector.load %arg7[%c22_176, %c0_177, %c0_178] : memref<25x128x256xbf16, #tpu.memory_space<vmem>>, vector<1x128x256xbf16>
    %282 = vector.shape_cast %281 : vector<1x128x256xbf16> to vector<128x256xbf16>
    %cst_179 = arith.constant dense<0.000000e+00> : vector<2x256xf32>
    %283 = tpu.matmul %280, %282, %cst_179 {dimension_numbers = #tpu.dot_dimension_numbers<[1], [0], [0], [1], [0, 0, 1, 1], [], []>} : vector<2x128xbf16>, vector<128x256xbf16>, vector<2x256xf32> -> vector<2x256xf32>
    %284 = arith.addf %278, %283 : vector<2x256xf32>
    %c46 = arith.constant 46 : index
    %c0_180 = arith.constant 0 : index
    %285 = vector.load %arg16[%c46, %c0_180] : memref<50x128xf32, #tpu.memory_space<vmem>>, vector<2x128xf32>
    %286 = arith.truncf %285 : vector<2x128xf32> to vector<2x128xbf16>
    %c23 = arith.constant 23 : index
    %c0_181 = arith.constant 0 : index
    %c0_182 = arith.constant 0 : index
    %287 = vector.load %arg7[%c23, %c0_181, %c0_182] : memref<25x128x256xbf16, #tpu.memory_space<vmem>>, vector<1x128x256xbf16>
    %288 = vector.shape_cast %287 : vector<1x128x256xbf16> to vector<128x256xbf16>
    %cst_183 = arith.constant dense<0.000000e+00> : vector<2x256xf32>
    %289 = tpu.matmul %286, %288, %cst_183 {dimension_numbers = #tpu.dot_dimension_numbers<[1], [0], [0], [1], [0, 0, 1, 1], [], []>} : vector<2x128xbf16>, vector<128x256xbf16>, vector<2x256xf32> -> vector<2x256xf32>
    %290 = arith.addf %284, %289 : vector<2x256xf32>
    %c48 = arith.constant 48 : index
    %c0_184 = arith.constant 0 : index
    %291 = vector.load %arg16[%c48, %c0_184] : memref<50x128xf32, #tpu.memory_space<vmem>>, vector<2x128xf32>
    %292 = arith.truncf %291 : vector<2x128xf32> to vector<2x128xbf16>
    %c24_185 = arith.constant 24 : index
    %c0_186 = arith.constant 0 : index
    %c0_187 = arith.constant 0 : index
    %293 = vector.load %arg7[%c24_185, %c0_186, %c0_187] : memref<25x128x256xbf16, #tpu.memory_space<vmem>>, vector<1x128x256xbf16>
    %294 = vector.shape_cast %293 : vector<1x128x256xbf16> to vector<128x256xbf16>
    %cst_188 = arith.constant dense<0.000000e+00> : vector<2x256xf32>
    %295 = tpu.matmul %292, %294, %cst_188 {dimension_numbers = #tpu.dot_dimension_numbers<[1], [0], [0], [1], [0, 0, 1, 1], [], []>} : vector<2x128xbf16>, vector<128x256xbf16>, vector<2x256xf32> -> vector<2x256xf32>
    %296 = arith.addf %290, %295 : vector<2x256xf32>
    %c0_189 = arith.constant 0 : index
    %c0_190 = arith.constant 0 : index
    %297 = vector.load %arg8[%c0_189, %c0_190] : memref<1x256xf32, #tpu.memory_space<vmem>>, vector<1x256xf32>
    %298 = vector.broadcast %297 : vector<1x256xf32> to vector<2x256xf32>
    %299 = arith.addf %296, %298 : vector<2x256xf32>
    %cst_191 = arith.constant 0.000000e+00 : f32
    %300 = vector.broadcast %cst_191 : f32 to vector<2x256xf32>
    %301 = arith.maximumf %299, %300 : vector<2x256xf32>
    %302 = arith.truncf %301 : vector<2x256xf32> to vector<2x256xbf16>
    %c0_192 = arith.constant 0 : index
    %c0_193 = arith.constant 0 : index
    %303 = vector.load %arg9[%c0_192, %c0_193] : memref<256x128xbf16, #tpu.memory_space<vmem>>, vector<256x128xbf16>
    %cst_194 = arith.constant dense<0.000000e+00> : vector<2x128xf32>
    %304 = tpu.matmul %302, %303, %cst_194 {dimension_numbers = #tpu.dot_dimension_numbers<[1], [0], [0], [1], [0, 0, 1, 1], [], []>} : vector<2x256xbf16>, vector<256x128xbf16>, vector<2x128xf32> -> vector<2x128xf32>
    %c0_195 = arith.constant 0 : index
    %c0_196 = arith.constant 0 : index
    %305 = vector.load %arg10[%c0_195, %c0_196] : memref<1x128xf32, #tpu.memory_space<vmem>>, vector<1x128xf32>
    %306 = vector.broadcast %305 : vector<1x128xf32> to vector<2x128xf32>
    %307 = arith.addf %304, %306 : vector<2x128xf32>
    %cst_197 = arith.constant 0.000000e+00 : f32
    %308 = vector.broadcast %cst_197 : f32 to vector<2x128xf32>
    %309 = arith.maximumf %307, %308 : vector<2x128xf32>
    %c0_198 = arith.constant 0 : index
    %c0_199 = arith.constant 0 : index
    %310 = vector.load %arg11[%c0_198, %c0_199] : memref<128x1xf32, #tpu.memory_space<vmem>>, vector<128x1xf32>
    %cst_200 = arith.constant dense<0.000000e+00> : vector<2x1xf32>
    %311 = tpu.matmul %309, %310, %cst_200 {dimension_numbers = #tpu.dot_dimension_numbers<[1], [0], [0], [1], [0, 0, 1, 1], [], []>} : vector<2x128xf32>, vector<128x1xf32>, vector<2x1xf32> -> vector<2x1xf32>
    %c0_201 = arith.constant 0 : index
    %c0_202 = arith.constant 0 : index
    %312 = vector.load %arg12[%c0_201, %c0_202] : memref<1x1xf32, #tpu.memory_space<vmem>>, vector<1x1xf32>
    %313 = vector.broadcast %312 : vector<1x1xf32> to vector<2x1xf32>
    %314 = arith.addf %311, %313 : vector<2x1xf32>
    %c0_203 = arith.constant 0 : index
    %c0_204 = arith.constant 0 : index
    %315 = vector.load %arg13[%c0_203, %c0_204] : memref<2x1xf32, #tpu.memory_space<vmem>>, vector<2x1xf32>
    tpu.vector_store %arg13[%c0_203, %c0_204], %314 {strides = array<i32>} : memref<2x1xf32, #tpu.memory_space<vmem>>, vector<2x1xf32>,
    return
  }
}

</mosaic_0001>

<llo_original>
// kernel: expr_predict_forward.1
$region0: #{expr_predict_forward.1}
  #allocation0 [shape = 'u32[]', space=smem, size = 0x4, offset = 0x4, fixed_abs, tag = 'smem constant byte address 0x4 - core index']
  #allocation1 [shape = 'u32[144,128]{1,0:T(1,128)}', space=vmem, size = 0x12000, scoped, tag = 'internal scratch']
  #allocation2 [shape = 'f32[50,128]{1,0:T(8,128)}', space=vmem, size = 0x7000, scoped, tag = 'scratch operand']
  #allocation3 [shape = 'f32[50,128]{1,0:T(8,128)}', space=vmem, size = 0x7000, scoped, tag = 'scratch operand']
  #allocation4 [shape = 'f32[50,128]{1,0:T(8,128)}', space=vmem, size = 0x7000, scoped, tag = 'scratch operand']
  #allocation5 [shape = 'f32[1,1]{1,0:T(1,128)S(1)}', space=vmem, size = 0x200, scoped, tag = 'scoped memory for expr_predict_forward.1']
  %s0 = inlined_call_operand.vmem [shape: bf16[4,50,28], index: 0, kind: input, shape index: {}]
  %s1 = inlined_call_operand.vmem [shape: bf16[28,128], index: 1, kind: input, shape index: {}]
  %s2 = inlined_call_operand.vmem [shape: f32[1,128], index: 2, kind: input, shape index: {}]
  %s3 = inlined_call_operand.vmem [shape: f32[1,128], index: 3, kind: input, shape index: {}]
  %s4 = inlined_call_operand.vmem [shape: bf16[3,128,128], index: 4, kind: input, shape index: {}]
  %s5 = inlined_call_operand.vmem [shape: f32[1,128], index: 5, kind: input, shape index: {}]
  %s6 = inlined_call_operand.vmem [shape: f32[1,128], index: 6, kind: input, shape index: {}]
  %s7 = inlined_call_operand.vmem [shape: bf16[25,128,256], index: 7, kind: input, shape index: {}]
  %s8 = inlined_call_operand.vmem [shape: f32[1,256], index: 8, kind: input, shape index: {}]
  %s9 = inlined_call_operand.vmem [shape: bf16[256,128], index: 9, kind: input, shape index: {}]
  %s10 = inlined_call_operand.vmem [shape: f32[1,128], index: 10, kind: input, shape index: {}]
  %s11 = inlined_call_operand.vmem [shape: f32[128,1], index: 11, kind: input, shape index: {}]
  %s12 = inlined_call_operand.<no memory space> [shape: f32[1,1], index: 12, kind: input, shape index: {}]
  %s13 = inlined_call_operand.vmem [shape: f32[2,1], index: 13, kind: output, shape index: {}]
  %s14 = sld [smem:[#allocation0]]
  $region62: #{expr_predict_forward.1} parent=0
    _
  %s16 = ssub.s32 1, %s14
  %s17 = scalar_select 0, %s16, %s14
  %v18 = vstv %s12
  %19 = vst [vmem:[#allocation5] sm:$0x1] %v18
  // Predicated region
  $region2: #{expr_predict_forward.1} parent=0 // pred_check
    _
  $region3: #{expr_predict_forward.1} parent=0 // pred_check_branch
    %21 = sbr.rel (0) target = $region5
  $region4: #{expr_predict_forward.1} parent=0 // pred_region
    _
  $region5: #{expr_predict_forward.1} parent=0 // pred_fallthru
    _
  // Predicated region
  $region6: #{expr_predict_forward.1} parent=0 // pred_check
    _
  $region7: #{expr_predict_forward.1} parent=0 // pred_check_branch
    %23 = sbr.rel (0) target = $region9
  $region8: #{expr_predict_forward.1} parent=0 // pred_region
    _
  $region9: #{expr_predict_forward.1} parent=0 // pred_fallthru
    _
  // Predicated region
  $region10: #{expr_predict_forward.1} parent=0 // pred_check
    _
  $region11: #{expr_predict_forward.1} parent=0 // pred_check_branch
    %25 = sbr.rel (0) target = $region13
  $region12: #{expr_predict_forward.1} parent=0 // pred_region
    _
  $region13: #{expr_predict_forward.1} parent=0 // pred_fallthru
    _
  // Predicated region
  $region14: #{expr_predict_forward.1} parent=0 // pred_check
    _
  $region15: #{expr_predict_forward.1} parent=0 // pred_check_branch
    %27 = sbr.rel (0) target = $region17
  $region16: #{expr_predict_forward.1} parent=0 // pred_region
    _
  $region17: #{expr_predict_forward.1} parent=0 // pred_fallthru
    _
  // Predicated region
  $region18: #{expr_predict_forward.1} parent=0 // pred_check
    _
  $region19: #{expr_predict_forward.1} parent=0 // pred_check_branch
    %29 = sbr.rel (0) target = $region21
  $region20: #{expr_predict_forward.1} parent=0 // pred_region
    _
  $region21: #{expr_predict_forward.1} parent=0 // pred_fallthru
    _
  // Predicated region
  $region22: #{expr_predict_forward.1} parent=0 // pred_check
    _
  $region23: #{expr_predict_forward.1} parent=0 // pred_check_branch
    %31 = sbr.rel (0) target = $region25
  $region24: #{expr_predict_forward.1} parent=0 // pred_region
    _
  $region25: #{expr_predict_forward.1} parent=0 // pred_fallthru
    _
  // Predicated region
  $region26: #{expr_predict_forward.1} parent=0 // pred_check
    _
  $region27: #{expr_predict_forward.1} parent=0 // pred_check_branch
    %33 = sbr.rel (0) target = $region29
  $region28: #{expr_predict_forward.1} parent=0 // pred_region
    _
  $region29: #{expr_predict_forward.1} parent=0 // pred_fallthru
    _
  // Predicated region
  $region30: #{expr_predict_forward.1} parent=0 // pred_check
    _
  $region31: #{expr_predict_forward.1} parent=0 // pred_check_branch
    %35 = sbr.rel (0) target = $region33
  $region32: #{expr_predict_forward.1} parent=0 // pred_region
    _
  $region33: #{expr_predict_forward.1} parent=0 // pred_fallthru
    _
  // Predicated region
  $region34: #{expr_predict_forward.1} parent=0 // pred_check
    _
  $region35: #{expr_predict_forward.1} parent=0 // pred_check_branch
    %37 = sbr.rel (0) target = $region37
  $region36: #{expr_predict_forward.1} parent=0 // pred_region
    _
  $region37: #{expr_predict_forward.1} parent=0 // pred_fallthru
    _
  // Predicated region
  $region38: #{expr_predict_forward.1} parent=0 // pred_check
    _
  $region39: #{expr_predict_forward.1} parent=0 // pred_check_branch
    %39 = sbr.rel (0) target = $region41
  $region40: #{expr_predict_forward.1} parent=0 // pred_region
    _
  $region41: #{expr_predict_forward.1} parent=0 // pred_fallthru
    _
  // Predicated region
  $region42: #{expr_predict_forward.1} parent=0 // pred_check
    _
  $region43: #{expr_predict_forward.1} parent=0 // pred_check_branch
    %41 = sbr.rel (0) target = $region45
  $region44: #{expr_predict_forward.1} parent=0 // pred_region
    _
  $region45: #{expr_predict_forward.1} parent=0 // pred_fallthru
    _
  // Predicated region
  $region46: #{expr_predict_forward.1} parent=0 // pred_check
    _
  $region47: #{expr_predict_forward.1} parent=0 // pred_check_branch
    %43 = sbr.rel (0) target = $region49
  $region48: #{expr_predict_forward.1} parent=0 // pred_region
    _
  $region49: #{expr_predict_forward.1} parent=0 // pred_fallthru
    _
  // Predicated region
  $region50: #{expr_predict_forward.1} parent=0 // pred_check
    _
  $region51: #{expr_predict_forward.1} parent=0 // pred_check_branch
    %45 = sbr.rel (0) target = $region53
  $region52: #{expr_predict_forward.1} parent=0 // pred_region
    _
  $region53: #{expr_predict_forward.1} parent=0 // pred_fallthru
    _
  %v47 = vld [vmem:[%s1] sm:$0xf]
  %v48 = vld [vmem:[%s1 + $0x4] sm:$0xf]
  %v49 = vld [vmem:[%s1 + $0x8] sm:$0xf]
  %v50 = vld [vmem:[%s1 + $0xc] sm:$0x3]
  %v51 = vld [vmem:[%s0] sm:$0xf]
  %v52 = vld [vmem:[%s0 + $0x4] sm:$0xf]
  %v53 = vld [vmem:[%s0 + $0x8] sm:$0xf]
  %v54 = vld [vmem:[%s0 + $0xc] sm:$0xf]
  %v55 = vld [vmem:[%s0 + $0x10] sm:$0xf]
  %v56 = vld [vmem:[%s0 + $0x14] sm:$0xf]
  %v57 = vld [vmem:[%s0 + $0x18] sm:$0x1]
  %v65 = vunpack.c.l.b16 %v51
  %v66 = vunpack.c.l.b16 %v52
  %v67 = vunpack.c.l.b16 %v53
  %v68 = vunpack.c.l.b16 %v54
  %v69 = vunpack.c.l.b16 %v55
  %v70 = vunpack.c.l.b16 %v56
  %v71 = vunpack.c.l.b16 %v57
  %v72 = vpack.c.b16 %v66, %v65
  %v73 = vpack.c.b16 %v68, %v67
  %v74 = vpack.c.b16 %v70, %v69
  %v75 = vpack.c.b16 %v71, %v71
  %v80 = vunpack.c.l.b16 %v47
  %v81 = vunpack.c.l.b16 %v48
  %v82 = vunpack.c.l.b16 %v49
  %v83 = vunpack.c.l.b16 %v50
  %v84 = vpack.c.b16 %v81, %v80
  %v85 = vpack.c.b16 %v83, %v82
  %vm87 = vcmask 228352
  %v89 = vsel %vm87, %v72, 0
  %v92 = vsel %vm87, %v73, 0
  %v95 = vsel %vm87, %v74, 0
  %v98 = vsel %vm87, %v75, 0
  %vm100 = vcmask 1045504
  %v102 = vsel %vm100, %v85, 0
  %104 = vmatprep.subr.bf16.mxu0 0
  %105 = vmatpush1.bf16.msra.mxu0 %v84
  %106 = vmatprep.subr.bf16.mxu0 0
  %107 = vmatpush1.bf16.msra.mxu0 %v102
  %108 = vmatprep.subr.bf16.mxu0 0
  %109 = vmatpush1.bf16.msra.mxu0 0
  %110 = vmatprep.subr.bf16.mxu0 0
  %111 = vmatpush1.bf16.msra.mxu0 0
  %112 = vmatprep.subr.bf16.mxu0 0
  %113 = vmatpush1.bf16.msra.mxu0 0
  %114 = vmatprep.subr.bf16.mxu0 0
  %115 = vmatpush1.bf16.msra.mxu0 0
  %116 = vmatprep.subr.bf16.mxu0 0
  %117 = vmatpush1.bf16.msra.mxu0 0
  %118 = vmatprep.subr.bf16.mxu0 0
  %119 = vmatpush1.bf16.msra.mxu0 0
  %120 = vmatprep.subr.bf16.mxu0 0
  %121 = vmatpush1.bf16.msra.mxu0 0
  %122 = vmatprep.subr.bf16.mxu0 0
  %123 = vmatpush1.bf16.msra.mxu0 0
  %124 = vmatprep.subr.bf16.mxu0 0
  %125 = vmatpush1.bf16.msra.mxu0 0
  %126 = vmatprep.subr.bf16.mxu0 0
  %127 = vmatpush1.bf16.msra.mxu0 0
  %128 = vmatprep.subr.bf16.mxu0 0
  %129 = vmatpush1.bf16.msra.mxu0 0
  %130 = vmatprep.subr.bf16.mxu0 0
  %131 = vmatpush1.bf16.msra.mxu0 0
  %132 = vmatprep.subr.bf16.mxu0 0
  %133 = vmatpush1.bf16.msra.mxu0 0
  %134 = vmatprep.subr.bf16.mxu0 0
  %135 = vmatpush1.bf16.msra.mxu0 0
  %136 = vmatprep.mubr.bf16.mxu0 0
  %137 = vmatmul.mubr.bf16.gmra.mrb[0].mxu0 %v89
  %v138 = vpop.f32.mrb[0].mxu0
  %v139 = vadd.f32 0.0, %v138
  %v140 = vpop.f32.mrb[0].mxu0
  %v141 = vpop.f32.mrb[0].mxu0
  %v142 = vadd.f32 0.0, %v141
  %v143 = vpop.f32.mrb[0].mxu0
  %144 = vmatprep.mubr.bf16.mxu0 0
  %145 = vmatmul.mubr.bf16.gmra.mrb[0].mxu0 %v92
  %v146 = vpop.f32.mrb[0].mxu0
  %v147 = vadd.f32 0.0, %v146
  %v148 = vpop.f32.mrb[0].mxu0
  %v149 = vpop.f32.mrb[0].mxu0
  %v150 = vadd.f32 0.0, %v149
  %v151 = vpop.f32.mrb[0].mxu0
  %152 = vmatprep.mubr.bf16.mxu0 0
  %153 = vmatmul.mubr.bf16.gmra.mrb[0].mxu0 %v95
  %v154 = vpop.f32.mrb[0].mxu0
  %v155 = vadd.f32 0.0, %v154
  %v156 = vpop.f32.mrb[0].mxu0
  %v157 = vpop.f32.mrb[0].mxu0
  %v158 = vadd.f32 0.0, %v157
  %v159 = vpop.f32.mrb[0].mxu0
  %160 = vmatprep.mubr.bf16.mxu0 0
  %161 = vmatmul.mubr.bf16.gmra.mrb[0].mxu0 %v98
  %v162 = vpop.f32.mrb[0].mxu0
  %v163 = vadd.f32 0.0, %v162
  %v164 = vpop.f32.mrb[0].mxu0
  %v165 = vpop.f32.mrb[0].mxu0
  %v166 = vpop.f32.mrb[0].mxu0
  %167 = vdwg.mxu0
  %s168 = scalar_lea.vmem %s0, 28
  %v169 = vld [vmem:[%s168] sm:$0xf]
  %v170 = vld [vmem:[%s168 + $0x4] sm:$0xf]
  %v171 = vld [vmem:[%s168 + $0x8] sm:$0xf]
  %v172 = vld [vmem:[%s168 + $0xc] sm:$0xf]
  %v173 = vld [vmem:[%s168 + $0x10] sm:$0xf]
  %v174 = vld [vmem:[%s168 + $0x14] sm:$0xf]
  %v175 = vld [vmem:[%s168 + $0x18] sm:$0x1]
  %v183 = vunpack.c.l.b16 %v169
  %v184 = vunpack.c.l.b16 %v170
  %v185 = vunpack.c.l.b16 %v171
  %v186 = vunpack.c.l.b16 %v172
  %v187 = vunpack.c.l.b16 %v173
  %v188 = vunpack.c.l.b16 %v174
  %v189 = vunpack.c.l.b16 %v175
  %v190 = vpack.c.b16 %v184, %v183
  %v191 = vpack.c.b16 %v186, %v185
  %v192 = vpack.c.b16 %v188, %v187
  %v193 = vpack.c.b16 %v189, %v189
  %v195 = vsel %vm87, %v190, 0
  %v198 = vsel %vm87, %v191, 0
  %v201 = vsel %vm87, %v192, 0
  %v204 = vsel %vm87, %v193, 0
  %206 = vmatprep.subr.bf16.mxu0 0
  %207 = vmatpush1.bf16.msra.mxu0 %v84
  %208 = vmatprep.subr.bf16.mxu0 0
  %209 = vmatpush1.bf16.msra.mxu0 %v102
  %210 = vmatprep.subr.bf16.mxu0 0
  %211 = vmatpush1.bf16.msra.mxu0 0
  %212 = vmatprep.subr.bf16.mxu0 0
  %213 = vmatpush1.bf16.msra.mxu0 0
  %214 = vmatprep.subr.bf16.mxu0 0
  %215 = vmatpush1.bf16.msra.mxu0 0
  %216 = vmatprep.subr.bf16.mxu0 0
  %217 = vmatpush1.bf16.msra.mxu0 0
  %218 = vmatprep.subr.bf16.mxu0 0
  %219 = vmatpush1.bf16.msra.mxu0 0
  %220 = vmatprep.subr.bf16.mxu0 0
  %221 = vmatpush1.bf16.msra.mxu0 0
  %222 = vmatprep.subr.bf16.mxu0 0
  %223 = vmatpush1.bf16.msra.mxu0 0
  %224 = vmatprep.subr.bf16.mxu0 0
  %225 = vmatpush1.bf16.msra.mxu0 0
  %226 = vmatprep.subr.bf16.mxu0 0
  %227 = vmatpush1.bf16.msra.mxu0 0
  %228 = vmatprep.subr.bf16.mxu0 0
  %229 = vmatpush1.bf16.msra.mxu0 0
  %230 = vmatprep.subr.bf16.mxu0 0
  %231 = vmatpush1.bf16.msra.mxu0 0
  %232 = vmatprep.subr.bf16.mxu0 0
  %233 = vmatpush1.bf16.msra.mxu0 0
  %234 = vmatprep.subr.bf16.mxu0 0
  %235 = vmatpush1.bf16.msra.mxu0 0
  %236 = vmatprep.subr.bf16.mxu0 0
  %237 = vmatpush1.bf16.msra.mxu0 0
  %238 = vmatprep.mubr.bf16.mxu0 0
  %239 = vmatmul.mubr.bf16.gmra.mrb[0].mxu0 %v195
  %v240 = vpop.f32.mrb[0].mxu0
  %v241 = vadd.f32 0.0, %v240
  %v242 = vpop.f32.mrb[0].mxu0
  %v243 = vpop.f32.mrb[0].mxu0
  %v244 = vadd.f32 0.0, %v243
  %v245 = vpop.f32.mrb[0].mxu0
  %246 = vmatprep.mubr.bf16.mxu0 0
  %247 = vmatmul.mubr.bf16.gmra.mrb[0].mxu0 %v198
  %v248 = vpop.f32.mrb[0].mxu0
  %v249 = vadd.f32 0.0, %v248
  %v250 = vpop.f32.mrb[0].mxu0
  %v251 = vpop.f32.mrb[0].mxu0
  %v252 = vadd.f32 0.0, %v251
  %v253 = vpop.f32.mrb[0].mxu0
  %254 = vmatprep.mubr.bf16.mxu0 0
  %255 = vmatmul.mubr.bf16.gmra.mrb[0].mxu0 %v201
  %v256 = vpop.f32.mrb[0].mxu0
  %v257 = vadd.f32 0.0, %v256
  %v258 = vpop.f32.mrb[0].mxu0
  %v259 = vpop.f32.mrb[0].mxu0
  %v260 = vadd.f32 0.0, %v259
  %v261 = vpop.f32.mrb[0].mxu0
  %262 = vmatprep.mubr.bf16.mxu0 0
  %263 = vmatmul.mubr.bf16.gmra.mrb[0].mxu0 %v204
  %v264 = vpop.f32.mrb[0].mxu0
  %v265 = vadd.f32 0.0, %v264
  %v266 = vpop.f32.mrb[0].mxu0
  %v267 = vpop.f32.mrb[0].mxu0
  %v268 = vpop.f32.mrb[0].mxu0
  %269 = vdwg.mxu0
  %s270 = scalar_lea.vmem %s0, 56
  %v271 = vld [vmem:[%s270] sm:$0xf]
  %v272 = vld [vmem:[%s270 + $0x4] sm:$0xf]
  %v273 = vld [vmem:[%s270 + $0x8] sm:$0xf]
  %v274 = vld [vmem:[%s270 + $0xc] sm:$0xf]
  %v275 = vld [vmem:[%s270 + $0x10] sm:$0xf]
  %v276 = vld [vmem:[%s270 + $0x14] sm:$0xf]
  %v277 = vld [vmem:[%s270 + $0x18] sm:$0x1]
  %v285 = vunpack.c.l.b16 %v271
  %v286 = vunpack.c.l.b16 %v272
  %v287 = vunpack.c.l.b16 %v273
  %v288 = vunpack.c.l.b16 %v274
  %v289 = vunpack.c.l.b16 %v275
  %v290 = vunpack.c.l.b16 %v276
  %v291 = vunpack.c.l.b16 %v277
  %v292 = vpack.c.b16 %v286, %v285
  %v293 = vpack.c.b16 %v288, %v287
  %v294 = vpack.c.b16 %v290, %v289
  %v295 = vpack.c.b16 %v291, %v291
  %v297 = vsel %vm87, %v292, 0
  %v300 = vsel %vm87, %v293, 0
  %v303 = vsel %vm87, %v294, 0
  %v306 = vsel %vm87, %v295, 0
  %308 = vmatprep.subr.bf16.mxu0 0
  %309 = vmatpush1.bf16.msra.mxu0 %v84
  %310 = vmatprep.subr.bf16.mxu0 0
  %311 = vmatpush1.bf16.msra.mxu0 %v102
  %312 = vmatprep.subr.bf16.mxu0 0
  %313 = vmatpush1.bf16.msra.mxu0 0
  %314 = vmatprep.subr.bf16.mxu0 0
  %315 = vmatpush1.bf16.msra.mxu0 0
  %316 = vmatprep.subr.bf16.mxu0 0
  %317 = vmatpush1.bf16.msra.mxu0 0
  %318 = vmatprep.subr.bf16.mxu0 0
  %319 = vmatpush1.bf16.msra.mxu0 0
  %320 = vmatprep.subr.bf16.mxu0 0
  %321 = vmatpush1.bf16.msra.mxu0 0
  %322 = vmatprep.subr.bf16.mxu0 0
  %323 = vmatpush1.bf16.msra.mxu0 0
  %324 = vmatprep.subr.bf16.mxu0 0
  %325 = vmatpush1.bf16.msra.mxu0 0
  %326 = vmatprep.subr.bf16.mxu0 0
  %327 = vmatpush1.bf16.msra.mxu0 0
  %328 = vmatprep.subr.bf16.mxu0 0
  %329 = vmatpush1.bf16.msra.mxu0 0
  %330 = vmatprep.subr.bf16.mxu0 0
  %331 = vmatpush1.bf16.msra.mxu0 0
  %332 = vmatprep.subr.bf16.mxu0 0
  %333 = vmatpush1.bf16.msra.mxu0 0
  %334 = vmatprep.subr.bf16.mxu0 0
  %335 = vmatpush1.bf16.msra.mxu0 0
  %336 = vmatprep.subr.bf16.mxu0 0
  %337 = vmatpush1.bf16.msra.mxu0 0
  %338 = vmatprep.subr.bf16.mxu0 0
  %339 = vmatpush1.bf16.msra.mxu0 0
  %340 = vmatprep.mubr.bf16.mxu0 0
  %341 = vmatmul.mubr.bf16.gmra.mrb[0].mxu0 %v297
  %v342 = vpop.f32.mrb[0].mxu0
  %v343 = vadd.f32 0.0, %v342
  %v344 = vpop.f32.mrb[0].mxu0
  %v345 = vpop.f32.mrb[0].mxu0
  %v346 = vadd.f32 0.0, %v345
  %v347 = vpop.f32.mrb[0].mxu0
  %348 = vmatprep.mubr.bf16.mxu0 0
  %349 = vmatmul.mubr.bf16.gmra.mrb[0].mxu0 %v300
  %v350 = vpop.f32.mrb[0].mxu0
  %v351 = vadd.f32 0.0, %v350
  %v352 = vpop.f32.mrb[0].mxu0
  %v353 = vpop.f32.mrb[0].mxu0
  %v354 = vadd.f32 0.0, %v353
  %v355 = vpop.f32.mrb[0].mxu0
  %356 = vmatprep.mubr.bf16.mxu0 0
  %357 = vmatmul.mubr.bf16.gmra.mrb[0].mxu0 %v303
  %v358 = vpop.f32.mrb[0].mxu0
  %v359 = vadd.f32 0.0, %v358
  %v360 = vpop.f32.mrb[0].mxu0
  %v361 = vpop.f32.mrb[0].mxu0
  %v362 = vadd.f32 0.0, %v361
  %v363 = vpop.f32.mrb[0].mxu0
  %364 = vmatprep.mubr.bf16.mxu0 0
  %365 = vmatmul.mubr.bf16.gmra.mrb[0].mxu0 %v306
  %v366 = vpop.f32.mrb[0].mxu0
  %v367 = vadd.f32 0.0, %v366
  %v368 = vpop.f32.mrb[0].mxu0
  %v369 = vpop.f32.mrb[0].mxu0
  %v370 = vpop.f32.mrb[0].mxu0
  %371 = vdwg.mxu0
  %s372 = scalar_lea.vmem %s0, 84
  %v373 = vld [vmem:[%s372] sm:$0xf]
  %v374 = vld [vmem:[%s372 + $0x4] sm:$0xf]
  %v375 = vld [vmem:[%s372 + $0x8] sm:$0xf]
  %v376 = vld [vmem:[%s372 + $0xc] sm:$0xf]
  %v377 = vld [vmem:[%s372 + $0x10] sm:$0xf]
  %v378 = vld [vmem:[%s372 + $0x14] sm:$0xf]
  %v379 = vld [vmem:[%s372 + $0x18] sm:$0x1]
  %v387 = vunpack.c.l.b16 %v373
  %v388 = vunpack.c.l.b16 %v374
  %v389 = vunpack.c.l.b16 %v375
  %v390 = vunpack.c.l.b16 %v376
  %v391 = vunpack.c.l.b16 %v377
  %v392 = vunpack.c.l.b16 %v378
  %v393 = vunpack.c.l.b16 %v379
  %v394 = vpack.c.b16 %v388, %v387
  %v395 = vpack.c.b16 %v390, %v389
  %v396 = vpack.c.b16 %v392, %v391
  %v397 = vpack.c.b16 %v393, %v393
  %v399 = vsel %vm87, %v394, 0
  %v402 = vsel %vm87, %v395, 0
  %v405 = vsel %vm87, %v396, 0
  %v408 = vsel %vm87, %v397, 0
  %410 = vmatprep.subr.bf16.mxu0 0
  %411 = vmatpush1.bf16.msra.mxu0 %v84
  %412 = vmatprep.subr.bf16.mxu0 0
  %413 = vmatpush1.bf16.msra.mxu0 %v102
  %414 = vmatprep.subr.bf16.mxu0 0
  %415 = vmatpush1.bf16.msra.mxu0 0
  %416 = vmatprep.subr.bf16.mxu0 0
  %417 = vmatpush1.bf16.msra.mxu0 0
  %418 = vmatprep.subr.bf16.mxu0 0
  %419 = vmatpush1.bf16.msra.mxu0 0
  %420 = vmatprep.subr.bf16.mxu0 0
  %421 = vmatpush1.bf16.msra.mxu0 0
  %422 = vmatprep.subr.bf16.mxu0 0
  %423 = vmatpush1.bf16.msra.mxu0 0
  %424 = vmatprep.subr.bf16.mxu0 0
  %425 = vmatpush1.bf16.msra.mxu0 0
  %426 = vmatprep.subr.bf16.mxu0 0
  %427 = vmatpush1.bf16.msra.mxu0 0
  %428 = vmatprep.subr.bf16.mxu0 0
  %429 = vmatpush1.bf16.msra.mxu0 0
  %430 = vmatprep.subr.bf16.mxu0 0
  %431 = vmatpush1.bf16.msra.mxu0 0
  %432 = vmatprep.subr.bf16.mxu0 0
  %433 = vmatpush1.bf16.msra.mxu0 0
  %434 = vmatprep.subr.bf16.mxu0 0
  %435 = vmatpush1.bf16.msra.mxu0 0
  %436 = vmatprep.subr.bf16.mxu0 0
  %437 = vmatpush1.bf16.msra.mxu0 0
  %438 = vmatprep.subr.bf16.mxu0 0
  %439 = vmatpush1.bf16.msra.mxu0 0
  %440 = vmatprep.subr.bf16.mxu0 0
  %441 = vmatpush1.bf16.msra.mxu0 0
  %442 = vmatprep.mubr.bf16.mxu0 0
  %443 = vmatmul.mubr.bf16.gmra.mrb[0].mxu0 %v399
  %v444 = vpop.f32.mrb[0].mxu0
  %v445 = vadd.f32 0.0, %v444
  %v446 = vpop.f32.mrb[0].mxu0
  %v447 = vpop.f32.mrb[0].mxu0
  %v448 = vadd.f32 0.0, %v447
  %v449 = vpop.f32.mrb[0].mxu0
  %450 = vmatprep.mubr.bf16.mxu0 0
  %451 = vmatmul.mubr.bf16.gmra.mrb[0].mxu0 %v402
  %v452 = vpop.f32.mrb[0].mxu0
  %v453 = vadd.f32 0.0, %v452
  %v454 = vpop.f32.mrb[0].mxu0
  %v455 = vpop.f32.mrb[0].mxu0
  %v456 = vadd.f32 0.0, %v455
  %v457 = vpop.f32.mrb[0].mxu0
  %458 = vmatprep.mubr.bf16.mxu0 0
  %459 = vmatmul.mubr.bf16.gmra.mrb[0].mxu0 %v405
  %v460 = vpop.f32.mrb[0].mxu0
  %v461 = vadd.f32 0.0, %v460
  %v462 = vpop.f32.mrb[0].mxu0
  %v463 = vpop.f32.mrb[0].mxu0
  %v464 = vadd.f32 0.0, %v463
  %v465 = vpop.f32.mrb[0].mxu0
  %466 = vmatprep.mubr.bf16.mxu0 0
  %467 = vmatmul.mubr.bf16.gmra.mrb[0].mxu0 %v408
  %v468 = vpop.f32.mrb[0].mxu0
  %v469 = vadd.f32 0.0, %v468
  %v470 = vpop.f32.mrb[0].mxu0
  %v471 = vpop.f32.mrb[0].mxu0
  %v472 = vpop.f32.mrb[0].mxu0
  %473 = vdwg.mxu0
  %v474 = vadd.f32 %v139, %v142
  %v475 = vadd.f32 %v474, %v147
  %v476 = vadd.f32 %v475, %v150
  %v477 = vadd.f32 %v476, %v155
  %v478 = vadd.f32 %v477, %v158
  %vm479 = vcmask 1041408
  %v480 = vsel %vm479, %v163, 0.0
  %v481 = vadd.f32 %v478, %v480
  %v482 = vrot.slane %v481, 4
  %v483 = vadd.f32 %v481, %v482
  %v484 = vrot.slane %v483, 2
  %v485 = vadd.f32 %v483, %v484
  %v486 = vrot.slane %v485, 1
  %v487 = vadd.f32 %v485, %v486
  %v488 = vadd.f32 %v241, %v244
  %v489 = vadd.f32 %v488, %v249
  %v490 = vadd.f32 %v489, %v252
  %v491 = vadd.f32 %v490, %v257
  %v492 = vadd.f32 %v491, %v260
  %v493 = vsel %vm479, %v265, 0.0
  %v494 = vadd.f32 %v492, %v493
  %v495 = vrot.slane %v494, 4
  %v496 = vadd.f32 %v494, %v495
  %v497 = vrot.slane %v496, 2
  %v498 = vadd.f32 %v496, %v497
  %v499 = vrot.slane %v498, 1
  %v500 = vadd.f32 %v498, %v499
  %v501 = vadd.f32 %v487, %v500
  %v502 = vadd.f32 %v343, %v346
  %v503 = vadd.f32 %v502, %v351
  %v504 = vadd.f32 %v503, %v354
  %v505 = vadd.f32 %v504, %v359
  %v506 = vadd.f32 %v505, %v362
  %v507 = vsel %vm479, %v367, 0.0
  %v508 = vadd.f32 %v506, %v507
  %v509 = vrot.slane %v508, 4
  %v510 = vadd.f32 %v508, %v509
  %v511 = vrot.slane %v510, 2
  %v512 = vadd.f32 %v510, %v511
  %v513 = vrot.slane %v512, 1
  %v514 = vadd.f32 %v512, %v513
  %v515 = vadd.f32 %v501, %v514
  %v516 = vadd.f32 %v445, %v448
  %v517 = vadd.f32 %v516, %v453
  %v518 = vadd.f32 %v517, %v456
  %v519 = vadd.f32 %v518, %v461
  %v520 = vadd.f32 %v519, %v464
  %v521 = vsel %vm479, %v469, 0.0
  %v522 = vadd.f32 %v520, %v521
  %v523 = vrot.slane %v522, 4
  %v524 = vadd.f32 %v522, %v523
  %v525 = vrot.slane %v524, 2
  %v526 = vadd.f32 %v524, %v525
  %v527 = vrot.slane %v526, 1
  %v528 = vadd.f32 %v526, %v527
  %v529 = vadd.f32 %v515, %v528
  %v530 = vrcp.pop 200.0
  %v531 = vmul.f32 %v529, %v530
  %v532 = vmul.f32 %v139, %v139
  %v533 = vmul.f32 %v142, %v142
  %v534 = vmul.f32 %v147, %v147
  %v535 = vmul.f32 %v150, %v150
  %v536 = vmul.f32 %v155, %v155
  %v537 = vmul.f32 %v158, %v158
  %v538 = vmul.f32 %v163, %v163
  %v539 = vadd.f32 %v532, %v533
  %v540 = vadd.f32 %v539, %v534
  %v541 = vadd.f32 %v540, %v535
  %v542 = vadd.f32 %v541, %v536
  %v543 = vadd.f32 %v542, %v537
  %v544 = vsel %vm479, %v538, 0.0
  %v545 = vadd.f32 %v543, %v544
  %v546 = vrot.slane %v545, 4
  %v547 = vadd.f32 %v545, %v546
  %v548 = vrot.slane %v547, 2
  %v549 = vadd.f32 %v547, %v548
  %v550 = vrot.slane %v549, 1
  %v551 = vadd.f32 %v549, %v550
  %v552 = vmul.f32 %v241, %v241
  %v553 = vmul.f32 %v244, %v244
  %v554 = vmul.f32 %v249, %v249
  %v555 = vmul.f32 %v252, %v252
  %v556 = vmul.f32 %v257, %v257
  %v557 = vmul.f32 %v260, %v260
  %v558 = vmul.f32 %v265, %v265
  %v559 = vadd.f32 %v552, %v553
  %v560 = vadd.f32 %v559, %v554
  %v561 = vadd.f32 %v560, %v555
  %v562 = vadd.f32 %v561, %v556
  %v563 = vadd.f32 %v562, %v557
  %v564 = vsel %vm479, %v558, 0.0
  %v565 = vadd.f32 %v563, %v564
  %v566 = vrot.slane %v565, 4
  %v567 = vadd.f32 %v565, %v566
  %v568 = vrot.slane %v567, 2
  %v569 = vadd.f32 %v567, %v568
  %v570 = vrot.slane %v569, 1
  %v571 = vadd.f32 %v569, %v570
  %v572 = vadd.f32 %v551, %v571
  %v573 = vmul.f32 %v343, %v343
  %v574 = vmul.f32 %v346, %v346
  %v575 = vmul.f32 %v351, %v351
  %v576 = vmul.f32 %v354, %v354
  %v577 = vmul.f32 %v359, %v359
  %v578 = vmul.f32 %v362, %v362
  %v579 = vmul.f32 %v367, %v367
  %v580 = vadd.f32 %v573, %v574
  %v581 = vadd.f32 %v580, %v575
  %v582 = vadd.f32 %v581, %v576
  %v583 = vadd.f32 %v582, %v577
  %v584 = vadd.f32 %v583, %v578
  %v585 = vsel %vm479, %v579, 0.0
  %v586 = vadd.f32 %v584, %v585
  %v587 = vrot.slane %v586, 4
  %v588 = vadd.f32 %v586, %v587
  %v589 = vrot.slane %v588, 2
  %v590 = vadd.f32 %v588, %v589
  %v591 = vrot.slane %v590, 1
  %v592 = vadd.f32 %v590, %v591
  %v593 = vadd.f32 %v572, %v592
  %v594 = vmul.f32 %v445, %v445
  %v595 = vmul.f32 %v448, %v448
  %v596 = vmul.f32 %v453, %v453
  %v597 = vmul.f32 %v456, %v456
  %v598 = vmul.f32 %v461, %v461
  %v599 = vmul.f32 %v464, %v464
  %v600 = vmul.f32 %v469, %v469
  %v601 = vadd.f32 %v594, %v595
  %v602 = vadd.f32 %v601, %v596
  %v603 = vadd.f32 %v602, %v597
  %v604 = vadd.f32 %v603, %v598
  %v605 = vadd.f32 %v604, %v599
  %v606 = vsel %vm479, %v600, 0.0
  %v607 = vadd.f32 %v605, %v606
  %v608 = vrot.slane %v607, 4
  %v609 = vadd.f32 %v607, %v608
  %v610 = vrot.slane %v609, 2
  %v611 = vadd.f32 %v609, %v610
  %v612 = vrot.slane %v611, 1
  %v613 = vadd.f32 %v611, %v612
  %v614 = vadd.f32 %v593, %v613
  %v615 = vmul.f32 %v614, %v530
  %v616 = vmul.f32 %v531, %v531
  %v617 = vsub.f32 %v615, %v616
  %v618 = vld [vmem:[%s2] sm:$0x1]
  %v619 = vadd.f32 %v617, 1e-05
  %v620 = vrsqrt.pop %v619
  %v621 = vmul.f32 %v618, %v620
  %v622 = vld [vmem:[%s3] sm:$0x1]
  %v623 = vmul.f32 %v531, %v621
  %v624 = vsub.f32 %v622, %v623
  %v626 = vlaneseq
  %v627 = vshrl.u32 %v626, 7
  %v628 = vsub.s32 0, %v627
  %v629 = vrot.slane %v621, %v628
  %v631 = vmul.f32 %v139, %v629
  %v632 = vmul.f32 %v142, %v629
  %v633 = vmul.f32 %v147, %v629
  %v634 = vmul.f32 %v150, %v629
  %v635 = vmul.f32 %v155, %v629
  %v636 = vmul.f32 %v158, %v629
  %v637 = vmul.f32 %v163, %v629
  %v639 = vlaneseq
  %v640 = vshrl.u32 %v639, 7
  %v641 = vsub.s32 0, %v640
  %v642 = vrot.slane %v624, %v641
  %v644 = vadd.f32 %v631, %v642
  %v645 = vadd.f32 %v632, %v642
  %v646 = vadd.f32 %v633, %v642
  %v647 = vadd.f32 %v634, %v642
  %v648 = vadd.f32 %v635, %v642
  %v649 = vadd.f32 %v636, %v642
  %v650 = vadd.f32 %v637, %v642
  %v651 = vmax.f32 %v644, 0.0
  %v652 = vmax.f32 %v645, 0.0
  %v653 = vmax.f32 %v646, 0.0
  %v654 = vmax.f32 %v647, 0.0
  %v655 = vmax.f32 %v648, 0.0
  %v656 = vmax.f32 %v649, 0.0
  %v657 = vmax.f32 %v650, 0.0
  %v658 = vmul.f32 %v241, %v629
  %v659 = vmul.f32 %v244, %v629
  %v660 = vmul.f32 %v249, %v629
  %v661 = vmul.f32 %v252, %v629
  %v662 = vmul.f32 %v257, %v629
  %v663 = vmul.f32 %v260, %v629
  %v664 = vmul.f32 %v265, %v629
  %v665 = vadd.f32 %v658, %v642
  %v666 = vadd.f32 %v659, %v642
  %v667 = vadd.f32 %v660, %v642
  %v668 = vadd.f32 %v661, %v642
  %v669 = vadd.f32 %v662, %v642
  %v670 = vadd.f32 %v663, %v642
  %v671 = vadd.f32 %v664, %v642
  %v672 = vmax.f32 %v665, 0.0
  %v673 = vmax.f32 %v666, 0.0
  %v674 = vmax.f32 %v667, 0.0
  %v675 = vmax.f32 %v668, 0.0
  %v676 = vmax.f32 %v669, 0.0
  %v677 = vmax.f32 %v670, 0.0
  %v678 = vmax.f32 %v671, 0.0
  %v679 = vmul.f32 %v343, %v629
  %v680 = vmul.f32 %v346, %v629
  %v681 = vmul.f32 %v351, %v629
  %v682 = vmul.f32 %v354, %v629
  %v683 = vmul.f32 %v359, %v629
  %v684 = vmul.f32 %v362, %v629
  %v685 = vmul.f32 %v367, %v629
  %v686 = vadd.f32 %v679, %v642
  %v687 = vadd.f32 %v680, %v642
  %v688 = vadd.f32 %v681, %v642
  %v689 = vadd.f32 %v682, %v642
  %v690 = vadd.f32 %v683, %v642
  %v691 = vadd.f32 %v684, %v642
  %v692 = vadd.f32 %v685, %v642
  %v693 = vmax.f32 %v686, 0.0
  %v694 = vmax.f32 %v687, 0.0
  %v695 = vmax.f32 %v688, 0.0
  %v696 = vmax.f32 %v689, 0.0
  %v697 = vmax.f32 %v690, 0.0
  %v698 = vmax.f32 %v691, 0.0
  %v699 = vmax.f32 %v692, 0.0
  %v700 = vmul.f32 %v445, %v629
  %v701 = vmul.f32 %v448, %v629
  %v702 = vmul.f32 %v453, %v629
  %v703 = vmul.f32 %v456, %v629
  %v704 = vmul.f32 %v461, %v629
  %v705 = vmul.f32 %v464, %v629
  %v706 = vmul.f32 %v469, %v629
  %v707 = vadd.f32 %v700, %v642
  %v708 = vadd.f32 %v701, %v642
  %v709 = vadd.f32 %v702, %v642
  %v710 = vadd.f32 %v703, %v642
  %v711 = vadd.f32 %v704, %v642
  %v712 = vadd.f32 %v705, %v642
  %v713 = vadd.f32 %v706, %v642
  %v714 = vmax.f32 %v707, 0.0
  %v715 = vmax.f32 %v708, 0.0
  %v716 = vmax.f32 %v709, 0.0
  %v717 = vmax.f32 %v710, 0.0
  %v718 = vmax.f32 %v711, 0.0
  %v719 = vmax.f32 %v712, 0.0
  %v720 = vmax.f32 %v713, 0.0
  %v721 = vmax.f32 %v651, %v672
  %v722 = vmax.f32 %v652, %v673
  %v723 = vmax.f32 %v653, %v674
  %v724 = vmax.f32 %v654, %v675
  %v725 = vmax.f32 %v655, %v676
  %v726 = vmax.f32 %v656, %v677
  %v727 = vmax.f32 %v657, %v678
  %v728 = vmax.f32 %v693, %v714
  %v729 = vmax.f32 %v694, %v715
  %v730 = vmax.f32 %v695, %v716
  %v731 = vmax.f32 %v696, %v717
  %v732 = vmax.f32 %v697, %v718
  %v733 = vmax.f32 %v698, %v719
  %v734 = vmax.f32 %v699, %v720
  %735 = vst [vmem:[#allocation2] sm:$0xff] %v721
  %736 = vst [vmem:[#allocation2 + $0x8] sm:$0xff] %v722
  %737 = vst [vmem:[#allocation2 + $0x10] sm:$0xff] %v723
  %738 = vst [vmem:[#allocation2 + $0x18] sm:$0xff] %v724
  %739 = vst [vmem:[#allocation2 + $0x20] sm:$0xff] %v725
  %740 = vst [vmem:[#allocation2 + $0x28] sm:$0xff] %v726
  %741 = vst [vmem:[#allocation2 + $0x30] sm:$0x3] %v727
  %742 = vst [vmem:[#allocation3] sm:$0xff] %v728
  %743 = vst [vmem:[#allocation3 + $0x8] sm:$0xff] %v729
  %744 = vst [vmem:[#allocation3 + $0x10] sm:$0xff] %v730
  %745 = vst [vmem:[#allocation3 + $0x18] sm:$0xff] %v731
  %746 = vst [vmem:[#allocation3 + $0x20] sm:$0xff] %v732
  %747 = vst [vmem:[#allocation3 + $0x28] sm:$0xff] %v733
  %748 = vst [vmem:[#allocation3 + $0x30] sm:$0x3] %v734
  %v749 = vld [vmem:[#allocation3] sm:$0xff]
  %v750 = vld [vmem:[#allocation3 + $0x8] sm:$0xff]
  %v751 = vld [vmem:[#allocation3 + $0x10] sm:$0xff]
  %v752 = vld [vmem:[#allocation3 + $0x18] sm:$0xff]
  %v753 = vld [vmem:[#allocation3 + $0x20] sm:$0xff]
  %v754 = vld [vmem:[#allocation3 + $0x28] sm:$0xff]
  %v761 = vrot.slane %v749, 6
  %v762 = vrot.slane %v750, 6
  %v763 = vsel %vm479, %v761, %v762
  %v764 = vrot.slane %v751, 6
  %v765 = vsel %vm479, %v762, %v764
  %v766 = vrot.slane %v752, 6
  %v767 = vsel %vm479, %v764, %v766
  %v768 = vrot.slane %v753, 6
  %v769 = vsel %vm479, %v766, %v768
  %v770 = vrot.slane %v754, 6
  %v771 = vsel %vm479, %v768, %v770
  %v779 = vsel %vm479, 0.0, %v761
  %v780 = vld [vmem:[#allocation2 + $0x2] sm:$0xff]
  %v781 = vld [vmem:[#allocation2 + $0xa] sm:$0xff]
  %v782 = vld [vmem:[#allocation2 + $0x12] sm:$0xff]
  %v783 = vld [vmem:[#allocation2 + $0x1a] sm:$0xff]
  %v784 = vld [vmem:[#allocation2 + $0x22] sm:$0xff]
  %v785 = vld [vmem:[#allocation2 + $0x2a] sm:$0xff]
  %v786 = vpack.c.bf16 %v722, %v721
  %v787 = vpack.c.bf16 %v724, %v723
  %v788 = vpack.c.bf16 %v726, %v725
  %v789 = vpack.c.bf16 %v727, %v727
  %v790 = vpack.c.bf16 %v729, %v728
  %v791 = vpack.c.bf16 %v731, %v730
  %v792 = vpack.c.bf16 %v733, %v732
  %v793 = vpack.c.bf16 %v734, %v734
  %v794 = vld [vmem:[%s4] sm:$0xf]
  %v795 = vld [vmem:[%s4 + $0x4] sm:$0xf]
  %v796 = vld [vmem:[%s4 + $0x8] sm:$0xf]
  %v797 = vld [vmem:[%s4 + $0xc] sm:$0xf]
  %v798 = vld [vmem:[%s4 + $0x10] sm:$0xf]
  %v799 = vld [vmem:[%s4 + $0x14] sm:$0xf]
  %v800 = vld [vmem:[%s4 + $0x18] sm:$0xf]
  %v801 = vld [vmem:[%s4 + $0x1c] sm:$0xf]
  %v802 = vld [vmem:[%s4 + $0x20] sm:$0xf]
  %v803 = vld [vmem:[%s4 + $0x24] sm:$0xf]
  %v804 = vld [vmem:[%s4 + $0x28] sm:$0xf]
  %v805 = vld [vmem:[%s4 + $0x2c] sm:$0xf]
  %v806 = vld [vmem:[%s4 + $0x30] sm:$0xf]
  %v807 = vld [vmem:[%s4 + $0x34] sm:$0xf]
  %v808 = vld [vmem:[%s4 + $0x38] sm:$0xf]
  %v809 = vld [vmem:[%s4 + $0x3c] sm:$0xf]
  %s810 = scalar_lea.vmem %s4, 64
  %v811 = vld [vmem:[%s810] sm:$0xf]
  %v812 = vld [vmem:[%s810 + $0x4] sm:$0xf]
  %v813 = vld [vmem:[%s810 + $0x8] sm:$0xf]
  %v814 = vld [vmem:[%s810 + $0xc] sm:$0xf]
  %v815 = vld [vmem:[%s810 + $0x10] sm:$0xf]
  %v816 = vld [vmem:[%s810 + $0x14] sm:$0xf]
  %v817 = vld [vmem:[%s810 + $0x18] sm:$0xf]
  %v818 = vld [vmem:[%s810 + $0x1c] sm:$0xf]
  %v819 = vld [vmem:[%s810 + $0x20] sm:$0xf]
  %v820 = vld [vmem:[%s810 + $0x24] sm:$0xf]
  %v821 = vld [vmem:[%s810 + $0x28] sm:$0xf]
  %v822 = vld [vmem:[%s810 + $0x2c] sm:$0xf]
  %v823 = vld [vmem:[%s810 + $0x30] sm:$0xf]
  %v824 = vld [vmem:[%s810 + $0x34] sm:$0xf]
  %v825 = vld [vmem:[%s810 + $0x38] sm:$0xf]
  %v826 = vld [vmem:[%s810 + $0x3c] sm:$0xf]
  %s827 = scalar_lea.vmem %s4, 128
  %v828 = vld [vmem:[%s827] sm:$0xf]
  %v829 = vld [vmem:[%s827 + $0x4] sm:$0xf]
  %v830 = vld [vmem:[%s827 + $0x8] sm:$0xf]
  %v831 = vld [vmem:[%s827 + $0xc] sm:$0xf]
  %v832 = vld [vmem:[%s827 + $0x10] sm:$0xf]
  %v833 = vld [vmem:[%s827 + $0x14] sm:$0xf]
  %v834 = vld [vmem:[%s827 + $0x18] sm:$0xf]
  %v835 = vld [vmem:[%s827 + $0x1c] sm:$0xf]
  %v836 = vld [vmem:[%s827 + $0x20] sm:$0xf]
  %v837 = vld [vmem:[%s827 + $0x24] sm:$0xf]
  %v838 = vld [vmem:[%s827 + $0x28] sm:$0xf]
  %v839 = vld [vmem:[%s827 + $0x2c] sm:$0xf]
  %v840 = vld [vmem:[%s827 + $0x30] sm:$0xf]
  %v841 = vld [vmem:[%s827 + $0x34] sm:$0xf]
  %v842 = vld [vmem:[%s827 + $0x38] sm:$0xf]
  %v843 = vld [vmem:[%s827 + $0x3c] sm:$0xf]
  %v844 = vpack.c.bf16 %v763, %v779
  %v845 = vpack.c.bf16 %v767, %v765
  %v846 = vpack.c.bf16 %v771, %v769
  %v847 = vpack.c.bf16 %v770, %v770
  %v864 = vunpack.c.l.b16 %v811
  %v865 = vunpack.c.l.b16 %v812
  %v866 = vunpack.c.l.b16 %v813
  %v867 = vunpack.c.l.b16 %v814
  %v868 = vunpack.c.l.b16 %v815
  %v869 = vunpack.c.l.b16 %v816
  %v870 = vunpack.c.l.b16 %v817
  %v871 = vunpack.c.l.b16 %v818
  %v872 = vunpack.c.l.b16 %v819
  %v873 = vunpack.c.l.b16 %v820
  %v874 = vunpack.c.l.b16 %v821
  %v875 = vunpack.c.l.b16 %v822
  %v876 = vunpack.c.l.b16 %v823
  %v877 = vunpack.c.l.b16 %v824
  %v878 = vunpack.c.l.b16 %v825
  %v879 = vunpack.c.l.b16 %v826
  %v880 = vpack.c.b16 %v865, %v864
  %v881 = vpack.c.b16 %v867, %v866
  %v882 = vpack.c.b16 %v869, %v868
  %v883 = vpack.c.b16 %v871, %v870
  %v884 = vpack.c.b16 %v873, %v872
  %v885 = vpack.c.b16 %v875, %v874
  %v886 = vpack.c.b16 %v877, %v876
  %v887 = vpack.c.b16 %v879, %v878
  %896 = vmatprep.subr.bf16.mxu0 0
  %897 = vmatpush1.bf16.msra.mxu0 %v880
  %898 = vmatprep.subr.bf16.mxu0 0
  %899 = vmatpush1.bf16.msra.mxu0 %v881
  %900 = vmatprep.subr.bf16.mxu0 0
  %901 = vmatpush1.bf16.msra.mxu0 %v882
  %902 = vmatprep.subr.bf16.mxu0 0
  %903 = vmatpush1.bf16.msra.mxu0 %v883
  %904 = vmatprep.subr.bf16.mxu0 0
  %905 = vmatpush1.bf16.msra.mxu0 %v884
  %906 = vmatprep.subr.bf16.mxu0 0
  %907 = vmatpush1.bf16.msra.mxu0 %v885
  %908 = vmatprep.subr.bf16.mxu0 0
  %909 = vmatpush1.bf16.msra.mxu0 %v886
  %910 = vmatprep.subr.bf16.mxu0 0
  %911 = vmatpush1.bf16.msra.mxu0 %v887
  %912 = vmatprep.subr.bf16.mxu0 0
  %913 = vmatpush1.bf16.msra.mxu0 0
  %914 = vmatprep.subr.bf16.mxu0 0
  %915 = vmatpush1.bf16.msra.mxu0 0
  %916 = vmatprep.subr.bf16.mxu0 0
  %917 = vmatpush1.bf16.msra.mxu0 0
  %918 = vmatprep.subr.bf16.mxu0 0
  %919 = vmatpush1.bf16.msra.mxu0 0
  %920 = vmatprep.subr.bf16.mxu0 0
  %921 = vmatpush1.bf16.msra.mxu0 0
  %922 = vmatprep.subr.bf16.mxu0 0
  %923 = vmatpush1.bf16.msra.mxu0 0
  %924 = vmatprep.subr.bf16.mxu0 0
  %925 = vmatpush1.bf16.msra.mxu0 0
  %926 = vmatprep.subr.bf16.mxu0 0
  %927 = vmatpush1.bf16.msra.mxu0 0
  %928 = vmatprep.mubr.bf16.mxu0 0
  %929 = vmatmul.mubr.bf16.gmra.mrb[0].mxu0 %v786
  %v930 = vpop.f32.mrb[0].mxu0
  %v931 = vadd.f32 0.0, %v930
  %v932 = vpop.f32.mrb[0].mxu0
  %v933 = vpop.f32.mrb[0].mxu0
  %v934 = vadd.f32 0.0, %v933
  %v935 = vpop.f32.mrb[0].mxu0
  %936 = vmatprep.mubr.bf16.mxu0 0
  %937 = vmatmul.mubr.bf16.gmra.mrb[0].mxu0 %v787
  %v938 = vpop.f32.mrb[0].mxu0
  %v939 = vadd.f32 0.0, %v938
  %v940 = vpop.f32.mrb[0].mxu0
  %v941 = vpop.f32.mrb[0].mxu0
  %v942 = vadd.f32 0.0, %v941
  %v943 = vpop.f32.mrb[0].mxu0
  %944 = vmatprep.mubr.bf16.mxu0 0
  %945 = vmatmul.mubr.bf16.gmra.mrb[0].mxu0 %v788
  %v946 = vpop.f32.mrb[0].mxu0
  %v947 = vadd.f32 0.0, %v946
  %v948 = vpop.f32.mrb[0].mxu0
  %v949 = vpop.f32.mrb[0].mxu0
  %v950 = vadd.f32 0.0, %v949
  %v951 = vpop.f32.mrb[0].mxu0
  %952 = vmatprep.mubr.bf16.mxu0 0
  %953 = vmatmul.mubr.bf16.gmra.mrb[0].mxu0 %v789
  %v954 = vpop.f32.mrb[0].mxu0
  %v955 = vadd.f32 0.0, %v954
  %v956 = vpop.f32.mrb[0].mxu0
  %v957 = vpop.f32.mrb[0].mxu0
  %v958 = vpop.f32.mrb[0].mxu0
  %959 = vdwg.mxu0
  %v976 = vunpack.c.l.b16 %v794
  %v977 = vunpack.c.l.b16 %v795
  %v978 = vunpack.c.l.b16 %v796
  %v979 = vunpack.c.l.b16 %v797
  %v980 = vunpack.c.l.b16 %v798
  %v981 = vunpack.c.l.b16 %v799
  %v982 = vunpack.c.l.b16 %v800
  %v983 = vunpack.c.l.b16 %v801
  %v984 = vunpack.c.l.b16 %v802
  %v985 = vunpack.c.l.b16 %v803
  %v986 = vunpack.c.l.b16 %v804
  %v987 = vunpack.c.l.b16 %v805
  %v988 = vunpack.c.l.b16 %v806
  %v989 = vunpack.c.l.b16 %v807
  %v990 = vunpack.c.l.b16 %v808
  %v991 = vunpack.c.l.b16 %v809
  %v992 = vpack.c.b16 %v977, %v976
  %v993 = vpack.c.b16 %v979, %v978
  %v994 = vpack.c.b16 %v981, %v980
  %v995 = vpack.c.b16 %v983, %v982
  %v996 = vpack.c.b16 %v985, %v984
  %v997 = vpack.c.b16 %v987, %v986
  %v998 = vpack.c.b16 %v989, %v988
  %v999 = vpack.c.b16 %v991, %v990
  %1008 = vmatprep.subr.bf16.mxu0 0
  %1009 = vmatpush1.bf16.msra.mxu0 %v992
  %1010 = vmatprep.subr.bf16.mxu0 0
  %1011 = vmatpush1.bf16.msra.mxu0 %v993
  %1012 = vmatprep.subr.bf16.mxu0 0
  %1013 = vmatpush1.bf16.msra.mxu0 %v994
  %1014 = vmatprep.subr.bf16.mxu0 0
  %1015 = vmatpush1.bf16.msra.mxu0 %v995
  %1016 = vmatprep.subr.bf16.mxu0 0
  %1017 = vmatpush1.bf16.msra.mxu0 %v996
  %1018 = vmatprep.subr.bf16.mxu0 0
  %1019 = vmatpush1.bf16.msra.mxu0 %v997
  %1020 = vmatprep.subr.bf16.mxu0 0
  %1021 = vmatpush1.bf16.msra.mxu0 %v998
  %1022 = vmatprep.subr.bf16.mxu0 0
  %1023 = vmatpush1.bf16.msra.mxu0 %v999
  %1024 = vmatprep.subr.bf16.mxu0 0
  %1025 = vmatpush1.bf16.msra.mxu0 0
  %1026 = vmatprep.subr.bf16.mxu0 0
  %1027 = vmatpush1.bf16.msra.mxu0 0
  %1028 = vmatprep.subr.bf16.mxu0 0
  %1029 = vmatpush1.bf16.msra.mxu0 0
  %1030 = vmatprep.subr.bf16.mxu0 0
  %1031 = vmatpush1.bf16.msra.mxu0 0
  %1032 = vmatprep.subr.bf16.mxu0 0
  %1033 = vmatpush1.bf16.msra.mxu0 0
  %1034 = vmatprep.subr.bf16.mxu0 0
  %1035 = vmatpush1.bf16.msra.mxu0 0
  %1036 = vmatprep.subr.bf16.mxu0 0
  %1037 = vmatpush1.bf16.msra.mxu0 0
  %1038 = vmatprep.subr.bf16.mxu0 0
  %1039 = vmatpush1.bf16.msra.mxu0 0
  %1040 = vmatprep.mubr.bf16.mxu0 0
  %1041 = vmatmul.mubr.bf16.gmra.mrb[0].mxu0 %v844
  %v1042 = vpop.f32.mrb[0].mxu0
  %v1043 = vadd.f32 %v931, %v1042
  %v1044 = vpop.f32.mrb[0].mxu0
  %v1045 = vpop.f32.mrb[0].mxu0
  %v1046 = vadd.f32 %v934, %v1045
  %v1047 = vpop.f32.mrb[0].mxu0
  %1048 = vmatprep.mubr.bf16.mxu0 0
  %1049 = vmatmul.mubr.bf16.gmra.mrb[0].mxu0 %v845
  %v1050 = vpop.f32.mrb[0].mxu0
  %v1051 = vadd.f32 %v939, %v1050
  %v1052 = vpop.f32.mrb[0].mxu0
  %v1053 = vpop.f32.mrb[0].mxu0
  %v1054 = vadd.f32 %v942, %v1053
  %v1055 = vpop.f32.mrb[0].mxu0
  %1056 = vmatprep.mubr.bf16.mxu0 0
  %1057 = vmatmul.mubr.bf16.gmra.mrb[0].mxu0 %v846
  %v1058 = vpop.f32.mrb[0].mxu0
  %v1059 = vadd.f32 %v947, %v1058
  %v1060 = vpop.f32.mrb[0].mxu0
  %v1061 = vpop.f32.mrb[0].mxu0
  %v1062 = vadd.f32 %v950, %v1061
  %v1063 = vpop.f32.mrb[0].mxu0
  %1064 = vmatprep.mubr.bf16.mxu0 0
  %1065 = vmatmul.mubr.bf16.gmra.mrb[0].mxu0 %v847
  %v1066 = vpop.f32.mrb[0].mxu0
  %v1067 = vadd.f32 %v955, %v1066
  %v1068 = vpop.f32.mrb[0].mxu0
  %v1069 = vpop.f32.mrb[0].mxu0
  %v1070 = vpop.f32.mrb[0].mxu0
  %1071 = vdwg.mxu0
  %v1088 = vunpack.c.l.b16 %v828
  %v1089 = vunpack.c.l.b16 %v829
  %v1090 = vunpack.c.l.b16 %v830
  %v1091 = vunpack.c.l.b16 %v831
  %v1092 = vunpack.c.l.b16 %v832
  %v1093 = vunpack.c.l.b16 %v833
  %v1094 = vunpack.c.l.b16 %v834
  %v1095 = vunpack.c.l.b16 %v835
  %v1096 = vunpack.c.l.b16 %v836
  %v1097 = vunpack.c.l.b16 %v837
  %v1098 = vunpack.c.l.b16 %v838
  %v1099 = vunpack.c.l.b16 %v839
  %v1100 = vunpack.c.l.b16 %v840
  %v1101 = vunpack.c.l.b16 %v841
  %v1102 = vunpack.c.l.b16 %v842
  %v1103 = vunpack.c.l.b16 %v843
  %v1104 = vpack.c.b16 %v1089, %v1088
  %v1105 = vpack.c.b16 %v1091, %v1090
  %v1106 = vpack.c.b16 %v1093, %v1092
  %v1107 = vpack.c.b16 %v1095, %v1094
  %v1108 = vpack.c.b16 %v1097, %v1096
  %v1109 = vpack.c.b16 %v1099, %v1098
  %v1110 = vpack.c.b16 %v1101, %v1100
  %v1111 = vpack.c.b16 %v1103, %v1102
  %1120 = vmatprep.subr.bf16.mxu0 0
  %1121 = vmatpush1.bf16.msra.mxu0 %v1104
  %1122 = vmatprep.subr.bf16.mxu0 0
  %1123 = vmatpush1.bf16.msra.mxu0 %v1105
  %1124 = vmatprep.subr.bf16.mxu0 0
  %1125 = vmatpush1.bf16.msra.mxu0 %v1106
  %1126 = vmatprep.subr.bf16.mxu0 0
  %1127 = vmatpush1.bf16.msra.mxu0 %v1107
  %1128 = vmatprep.subr.bf16.mxu0 0
  %1129 = vmatpush1.bf16.msra.mxu0 %v1108
  %1130 = vmatprep.subr.bf16.mxu0 0
  %1131 = vmatpush1.bf16.msra.mxu0 %v1109
  %1132 = vmatprep.subr.bf16.mxu0 0
  %1133 = vmatpush1.bf16.msra.mxu0 %v1110
  %1134 = vmatprep.subr.bf16.mxu0 0
  %1135 = vmatpush1.bf16.msra.mxu0 %v1111
  %1136 = vmatprep.subr.bf16.mxu0 0
  %1137 = vmatpush1.bf16.msra.mxu0 0
  %1138 = vmatprep.subr.bf16.mxu0 0
  %1139 = vmatpush1.bf16.msra.mxu0 0
  %1140 = vmatprep.subr.bf16.mxu0 0
  %1141 = vmatpush1.bf16.msra.mxu0 0
  %1142 = vmatprep.subr.bf16.mxu0 0
  %1143 = vmatpush1.bf16.msra.mxu0 0
  %1144 = vmatprep.subr.bf16.mxu0 0
  %1145 = vmatpush1.bf16.msra.mxu0 0
  %1146 = vmatprep.subr.bf16.mxu0 0
  %1147 = vmatpush1.bf16.msra.mxu0 0
  %1148 = vmatprep.subr.bf16.mxu0 0
  %1149 = vmatpush1.bf16.msra.mxu0 0
  %1150 = vmatprep.subr.bf16.mxu0 0
  %1151 = vmatpush1.bf16.msra.mxu0 0
  %1152 = vmatprep.mubr.bf16.mxu0 0
  %1153 = vmatmul.mubr.bf16.gmra.mrb[0].mxu0 %v790
  %v1154 = vpop.f32.mrb[0].mxu0
  %v1155 = vadd.f32 0.0, %v1154
  %v1156 = vpop.f32.mrb[0].mxu0
  %v1157 = vpop.f32.mrb[0].mxu0
  %v1158 = vadd.f32 0.0, %v1157
  %v1159 = vpop.f32.mrb[0].mxu0
  %1160 = vmatprep.mubr.bf16.mxu0 0
  %1161 = vmatmul.mubr.bf16.gmra.mrb[0].mxu0 %v791
  %v1162 = vpop.f32.mrb[0].mxu0
  %v1163 = vadd.f32 0.0, %v1162
  %v1164 = vpop.f32.mrb[0].mxu0
  %v1165 = vpop.f32.mrb[0].mxu0
  %v1166 = vadd.f32 0.0, %v1165
  %v1167 = vpop.f32.mrb[0].mxu0
  %1168 = vmatprep.mubr.bf16.mxu0 0
  %1169 = vmatmul.mubr.bf16.gmra.mrb[0].mxu0 %v792
  %v1170 = vpop.f32.mrb[0].mxu0
  %v1171 = vadd.f32 0.0, %v1170
  %v1172 = vpop.f32.mrb[0].mxu0
  %v1173 = vpop.f32.mrb[0].mxu0
  %v1174 = vadd.f32 0.0, %v1173
  %v1175 = vpop.f32.mrb[0].mxu0
  %1176 = vmatprep.mubr.bf16.mxu0 0
  %1177 = vmatmul.mubr.bf16.gmra.mrb[0].mxu0 %v793
  %v1178 = vpop.f32.mrb[0].mxu0
  %v1179 = vadd.f32 0.0, %v1178
  %v1180 = vpop.f32.mrb[0].mxu0
  %v1181 = vpop.f32.mrb[0].mxu0
  %v1182 = vpop.f32.mrb[0].mxu0
  %1183 = vdwg.mxu0
  %v1184 = vadd.f32 %v1043, %v1155
  %v1185 = vadd.f32 %v1046, %v1158
  %v1186 = vadd.f32 %v1051, %v1163
  %v1187 = vadd.f32 %v1054, %v1166
  %v1188 = vadd.f32 %v1059, %v1171
  %v1189 = vadd.f32 %v1062, %v1174
  %v1190 = vadd.f32 %v1067, %v1179
  %1191 = vmatprep.subr.bf16.mxu0 0
  %1192 = vmatpush1.bf16.msra.mxu0 %v880
  %1193 = vmatprep.subr.bf16.mxu0 0
  %1194 = vmatpush1.bf16.msra.mxu0 %v881
  %1195 = vmatprep.subr.bf16.mxu0 0
  %1196 = vmatpush1.bf16.msra.mxu0 %v882
  %1197 = vmatprep.subr.bf16.mxu0 0
  %1198 = vmatpush1.bf16.msra.mxu0 %v883
  %1199 = vmatprep.subr.bf16.mxu0 0
  %1200 = vmatpush1.bf16.msra.mxu0 %v884
  %1201 = vmatprep.subr.bf16.mxu0 0
  %1202 = vmatpush1.bf16.msra.mxu0 %v885
  %1203 = vmatprep.subr.bf16.mxu0 0
  %1204 = vmatpush1.bf16.msra.mxu0 %v886
  %1205 = vmatprep.subr.bf16.mxu0 0
  %1206 = vmatpush1.bf16.msra.mxu0 %v887
  %1207 = vmatprep.subr.bf16.mxu0 0
  %1208 = vmatpush1.bf16.msra.mxu0 0
  %1209 = vmatprep.subr.bf16.mxu0 0
  %1210 = vmatpush1.bf16.msra.mxu0 0
  %1211 = vmatprep.subr.bf16.mxu0 0
  %1212 = vmatpush1.bf16.msra.mxu0 0
  %1213 = vmatprep.subr.bf16.mxu0 0
  %1214 = vmatpush1.bf16.msra.mxu0 0
  %1215 = vmatprep.subr.bf16.mxu0 0
  %1216 = vmatpush1.bf16.msra.mxu0 0
  %1217 = vmatprep.subr.bf16.mxu0 0
  %1218 = vmatpush1.bf16.msra.mxu0 0
  %1219 = vmatprep.subr.bf16.mxu0 0
  %1220 = vmatpush1.bf16.msra.mxu0 0
  %1221 = vmatprep.subr.bf16.mxu0 0
  %1222 = vmatpush1.bf16.msra.mxu0 0
  %1223 = vmatprep.mubr.bf16.mxu0 0
  %1224 = vmatmul.mubr.bf16.gmra.mrb[0].mxu0 %v790
  %v1225 = vpop.f32.mrb[0].mxu0
  %v1226 = vadd.f32 0.0, %v1225
  %v1227 = vpop.f32.mrb[0].mxu0
  %v1228 = vpop.f32.mrb[0].mxu0
  %v1229 = vadd.f32 0.0, %v1228
  %v1230 = vpop.f32.mrb[0].mxu0
  %1231 = vmatprep.mubr.bf16.mxu0 0
  %1232 = vmatmul.mubr.bf16.gmra.mrb[0].mxu0 %v791
  %v1233 = vpop.f32.mrb[0].mxu0
  %v1234 = vadd.f32 0.0, %v1233
  %v1235 = vpop.f32.mrb[0].mxu0
  %v1236 = vpop.f32.mrb[0].mxu0
  %v1237 = vadd.f32 0.0, %v1236
  %v1238 = vpop.f32.mrb[0].mxu0
  %1239 = vmatprep.mubr.bf16.mxu0 0
  %1240 = vmatmul.mubr.bf16.gmra.mrb[0].mxu0 %v792
  %v1241 = vpop.f32.mrb[0].mxu0
  %v1242 = vadd.f32 0.0, %v1241
  %v1243 = vpop.f32.mrb[0].mxu0
  %v1244 = vpop.f32.mrb[0].mxu0
  %v1245 = vadd.f32 0.0, %v1244
  %v1246 = vpop.f32.mrb[0].mxu0
  %1247 = vmatprep.mubr.bf16.mxu0 0
  %1248 = vmatmul.mubr.bf16.gmra.mrb[0].mxu0 %v793
  %v1249 = vpop.f32.mrb[0].mxu0
  %v1250 = vadd.f32 0.0, %v1249
  %v1251 = vpop.f32.mrb[0].mxu0
  %v1252 = vpop.f32.mrb[0].mxu0
  %v1253 = vpop.f32.mrb[0].mxu0
  %1254 = vdwg.mxu0
  %1255 = vmatprep.subr.bf16.mxu0 0
  %1256 = vmatpush1.bf16.msra.mxu0 %v992
  %1257 = vmatprep.subr.bf16.mxu0 0
  %1258 = vmatpush1.bf16.msra.mxu0 %v993
  %1259 = vmatprep.subr.bf16.mxu0 0
  %1260 = vmatpush1.bf16.msra.mxu0 %v994
  %1261 = vmatprep.subr.bf16.mxu0 0
  %1262 = vmatpush1.bf16.msra.mxu0 %v995
  %1263 = vmatprep.subr.bf16.mxu0 0
  %1264 = vmatpush1.bf16.msra.mxu0 %v996
  %1265 = vmatprep.subr.bf16.mxu0 0
  %1266 = vmatpush1.bf16.msra.mxu0 %v997
  %1267 = vmatprep.subr.bf16.mxu0 0
  %1268 = vmatpush1.bf16.msra.mxu0 %v998
  %1269 = vmatprep.subr.bf16.mxu0 0
  %1270 = vmatpush1.bf16.msra.mxu0 %v999
  %1271 = vmatprep.subr.bf16.mxu0 0
  %1272 = vmatpush1.bf16.msra.mxu0 0
  %1273 = vmatprep.subr.bf16.mxu0 0
  %1274 = vmatpush1.bf16.msra.mxu0 0
  %1275 = vmatprep.subr.bf16.mxu0 0
  %1276 = vmatpush1.bf16.msra.mxu0 0
  %1277 = vmatprep.subr.bf16.mxu0 0
  %1278 = vmatpush1.bf16.msra.mxu0 0
  %1279 = vmatprep.subr.bf16.mxu0 0
  %1280 = vmatpush1.bf16.msra.mxu0 0
  %1281 = vmatprep.subr.bf16.mxu0 0
  %1282 = vmatpush1.bf16.msra.mxu0 0
  %1283 = vmatprep.subr.bf16.mxu0 0
  %1284 = vmatpush1.bf16.msra.mxu0 0
  %1285 = vmatprep.subr.bf16.mxu0 0
  %1286 = vmatpush1.bf16.msra.mxu0 0
  %1287 = vmatprep.mubr.bf16.mxu0 0
  %1288 = vmatmul.mubr.bf16.gmra.mrb[0].mxu0 %v786
  %v1289 = vpop.f32.mrb[0].mxu0
  %v1290 = vadd.f32 %v1226, %v1289
  %v1291 = vpop.f32.mrb[0].mxu0
  %v1292 = vpop.f32.mrb[0].mxu0
  %v1293 = vadd.f32 %v1229, %v1292
  %v1294 = vpop.f32.mrb[0].mxu0
  %1295 = vmatprep.mubr.bf16.mxu0 0
  %1296 = vmatmul.mubr.bf16.gmra.mrb[0].mxu0 %v787
  %v1297 = vpop.f32.mrb[0].mxu0
  %v1298 = vadd.f32 %v1234, %v1297
  %v1299 = vpop.f32.mrb[0].mxu0
  %v1300 = vpop.f32.mrb[0].mxu0
  %v1301 = vadd.f32 %v1237, %v1300
  %v1302 = vpop.f32.mrb[0].mxu0
  %1303 = vmatprep.mubr.bf16.mxu0 0
  %1304 = vmatmul.mubr.bf16.gmra.mrb[0].mxu0 %v788
  %v1305 = vpop.f32.mrb[0].mxu0
  %v1306 = vadd.f32 %v1242, %v1305
  %v1307 = vpop.f32.mrb[0].mxu0
  %v1308 = vpop.f32.mrb[0].mxu0
  %v1309 = vadd.f32 %v1245, %v1308
  %v1310 = vpop.f32.mrb[0].mxu0
  %1311 = vmatprep.mubr.bf16.mxu0 0
  %1312 = vmatmul.mubr.bf16.gmra.mrb[0].mxu0 %v789
  %v1313 = vpop.f32.mrb[0].mxu0
  %v1314 = vadd.f32 %v1250, %v1313
  %v1315 = vpop.f32.mrb[0].mxu0
  %v1316 = vpop.f32.mrb[0].mxu0
  %v1317 = vpop.f32.mrb[0].mxu0
  %1318 = vdwg.mxu0
  %v1319 = vpack.c.bf16 %v781, %v780
  %v1320 = vpack.c.bf16 %v783, %v782
  %v1321 = vpack.c.bf16 %v785, %v784
  %v1322 = vpack.c.bf16 0.0, 0.0
  %1323 = vmatprep.subr.bf16.mxu0 0
  %1324 = vmatpush1.bf16.msra.mxu0 %v1104
  %1325 = vmatprep.subr.bf16.mxu0 0
  %1326 = vmatpush1.bf16.msra.mxu0 %v1105
  %1327 = vmatprep.subr.bf16.mxu0 0
  %1328 = vmatpush1.bf16.msra.mxu0 %v1106
  %1329 = vmatprep.subr.bf16.mxu0 0
  %1330 = vmatpush1.bf16.msra.mxu0 %v1107
  %1331 = vmatprep.subr.bf16.mxu0 0
  %1332 = vmatpush1.bf16.msra.mxu0 %v1108
  %1333 = vmatprep.subr.bf16.mxu0 0
  %1334 = vmatpush1.bf16.msra.mxu0 %v1109
  %1335 = vmatprep.subr.bf16.mxu0 0
  %1336 = vmatpush1.bf16.msra.mxu0 %v1110
  %1337 = vmatprep.subr.bf16.mxu0 0
  %1338 = vmatpush1.bf16.msra.mxu0 %v1111
  %1339 = vmatprep.subr.bf16.mxu0 0
  %1340 = vmatpush1.bf16.msra.mxu0 0
  %1341 = vmatprep.subr.bf16.mxu0 0
  %1342 = vmatpush1.bf16.msra.mxu0 0
  %1343 = vmatprep.subr.bf16.mxu0 0
  %1344 = vmatpush1.bf16.msra.mxu0 0
  %1345 = vmatprep.subr.bf16.mxu0 0
  %1346 = vmatpush1.bf16.msra.mxu0 0
  %1347 = vmatprep.subr.bf16.mxu0 0
  %1348 = vmatpush1.bf16.msra.mxu0 0
  %1349 = vmatprep.subr.bf16.mxu0 0
  %1350 = vmatpush1.bf16.msra.mxu0 0
  %1351 = vmatprep.subr.bf16.mxu0 0
  %1352 = vmatpush1.bf16.msra.mxu0 0
  %1353 = vmatprep.subr.bf16.mxu0 0
  %1354 = vmatpush1.bf16.msra.mxu0 0
  %1355 = vmatprep.mubr.bf16.mxu0 0
  %1356 = vmatmul.mubr.bf16.gmra.mrb[0].mxu0 %v1319
  %v1357 = vpop.f32.mrb[0].mxu0
  %v1358 = vadd.f32 0.0, %v1357
  %v1359 = vpop.f32.mrb[0].mxu0
  %v1360 = vpop.f32.mrb[0].mxu0
  %v1361 = vadd.f32 0.0, %v1360
  %v1362 = vpop.f32.mrb[0].mxu0
  %1363 = vmatprep.mubr.bf16.mxu0 0
  %1364 = vmatmul.mubr.bf16.gmra.mrb[0].mxu0 %v1320
  %v1365 = vpop.f32.mrb[0].mxu0
  %v1366 = vadd.f32 0.0, %v1365
  %v1367 = vpop.f32.mrb[0].mxu0
  %v1368 = vpop.f32.mrb[0].mxu0
  %v1369 = vadd.f32 0.0, %v1368
  %v1370 = vpop.f32.mrb[0].mxu0
  %1371 = vmatprep.mubr.bf16.mxu0 0
  %1372 = vmatmul.mubr.bf16.gmra.mrb[0].mxu0 %v1321
  %v1373 = vpop.f32.mrb[0].mxu0
  %v1374 = vadd.f32 0.0, %v1373
  %v1375 = vpop.f32.mrb[0].mxu0
  %v1376 = vpop.f32.mrb[0].mxu0
  %v1377 = vadd.f32 0.0, %v1376
  %v1378 = vpop.f32.mrb[0].mxu0
  %1379 = vmatprep.mubr.bf16.mxu0 0
  %1380 = vmatmul.mubr.bf16.gmra.mrb[0].mxu0 %v1322
  %v1381 = vpop.f32.mrb[0].mxu0
  %v1382 = vadd.f32 0.0, %v1381
  %v1383 = vpop.f32.mrb[0].mxu0
  %v1384 = vpop.f32.mrb[0].mxu0
  %v1385 = vpop.f32.mrb[0].mxu0
  %1386 = vdwg.mxu0
  %v1387 = vadd.f32 %v1290, %v1358
  %v1388 = vadd.f32 %v1293, %v1361
  %v1389 = vadd.f32 %v1298, %v1366
  %v1390 = vadd.f32 %v1301, %v1369
  %v1391 = vadd.f32 %v1306, %v1374
  %v1392 = vadd.f32 %v1309, %v1377
  %v1393 = vadd.f32 %v1314, %v1382
  %v1394 = vadd.f32 %v1184, %v1185
  %v1395 = vadd.f32 %v1394, %v1186
  %v1396 = vadd.f32 %v1395, %v1187
  %v1397 = vadd.f32 %v1396, %v1188
  %v1398 = vadd.f32 %v1397, %v1189
  %v1399 = vsel %vm479, %v1190, 0.0
  %v1400 = vadd.f32 %v1398, %v1399
  %v1401 = vrot.slane %v1400, 4
  %v1402 = vadd.f32 %v1400, %v1401
  %v1403 = vrot.slane %v1402, 2
  %v1404 = vadd.f32 %v1402, %v1403
  %v1405 = vrot.slane %v1404, 1
  %v1406 = vadd.f32 %v1404, %v1405
  %v1407 = vadd.f32 %v1387, %v1388
  %v1408 = vadd.f32 %v1407, %v1389
  %v1409 = vadd.f32 %v1408, %v1390
  %v1410 = vadd.f32 %v1409, %v1391
  %v1411 = vadd.f32 %v1410, %v1392
  %v1412 = vsel %vm479, %v1393, 0.0
  %v1413 = vadd.f32 %v1411, %v1412
  %v1414 = vrot.slane %v1413, 4
  %v1415 = vadd.f32 %v1413, %v1414
  %v1416 = vrot.slane %v1415, 2
  %v1417 = vadd.f32 %v1415, %v1416
  %v1418 = vrot.slane %v1417, 1
  %v1419 = vadd.f32 %v1417, %v1418
  %v1420 = vadd.f32 %v1406, %v1419
  %v1421 = vrcp.pop 100.0
  %v1422 = vmul.f32 %v1420, %v1421
  %v1423 = vmul.f32 %v1184, %v1184
  %v1424 = vmul.f32 %v1185, %v1185
  %v1425 = vmul.f32 %v1186, %v1186
  %v1426 = vmul.f32 %v1187, %v1187
  %v1427 = vmul.f32 %v1188, %v1188
  %v1428 = vmul.f32 %v1189, %v1189
  %v1429 = vmul.f32 %v1190, %v1190
  %v1430 = vadd.f32 %v1423, %v1424
  %v1431 = vadd.f32 %v1430, %v1425
  %v1432 = vadd.f32 %v1431, %v1426
  %v1433 = vadd.f32 %v1432, %v1427
  %v1434 = vadd.f32 %v1433, %v1428
  %v1435 = vsel %vm479, %v1429, 0.0
  %v1436 = vadd.f32 %v1434, %v1435
  %v1437 = vrot.slane %v1436, 4
  %v1438 = vadd.f32 %v1436, %v1437
  %v1439 = vrot.slane %v1438, 2
  %v1440 = vadd.f32 %v1438, %v1439
  %v1441 = vrot.slane %v1440, 1
  %v1442 = vadd.f32 %v1440, %v1441
  %v1443 = vmul.f32 %v1387, %v1387
  %v1444 = vmul.f32 %v1388, %v1388
  %v1445 = vmul.f32 %v1389, %v1389
  %v1446 = vmul.f32 %v1390, %v1390
  %v1447 = vmul.f32 %v1391, %v1391
  %v1448 = vmul.f32 %v1392, %v1392
  %v1449 = vmul.f32 %v1393, %v1393
  %v1450 = vadd.f32 %v1443, %v1444
  %v1451 = vadd.f32 %v1450, %v1445
  %v1452 = vadd.f32 %v1451, %v1446
  %v1453 = vadd.f32 %v1452, %v1447
  %v1454 = vadd.f32 %v1453, %v1448
  %v1455 = vsel %vm479, %v1449, 0.0
  %v1456 = vadd.f32 %v1454, %v1455
  %v1457 = vrot.slane %v1456, 4
  %v1458 = vadd.f32 %v1456, %v1457
  %v1459 = vrot.slane %v1458, 2
  %v1460 = vadd.f32 %v1458, %v1459
  %v1461 = vrot.slane %v1460, 1
  %v1462 = vadd.f32 %v1460, %v1461
  %v1463 = vadd.f32 %v1442, %v1462
  %v1464 = vmul.f32 %v1463, %v1421
  %v1465 = vmul.f32 %v1422, %v1422
  %v1466 = vsub.f32 %v1464, %v1465
  %v1467 = vld [vmem:[%s5] sm:$0x1]
  %v1468 = vadd.f32 %v1466, 1e-05
  %v1469 = vrsqrt.pop %v1468
  %v1470 = vmul.f32 %v1467, %v1469
  %v1471 = vld [vmem:[%s6] sm:$0x1]
  %v1472 = vmul.f32 %v1422, %v1470
  %v1473 = vsub.f32 %v1471, %v1472
  %v1475 = vlaneseq
  %v1476 = vshrl.u32 %v1475, 7
  %v1477 = vsub.s32 0, %v1476
  %v1478 = vrot.slane %v1470, %v1477
  %v1480 = vmul.f32 %v1184, %v1478
  %v1481 = vmul.f32 %v1185, %v1478
  %v1482 = vmul.f32 %v1186, %v1478
  %v1483 = vmul.f32 %v1187, %v1478
  %v1484 = vmul.f32 %v1188, %v1478
  %v1485 = vmul.f32 %v1189, %v1478
  %v1486 = vmul.f32 %v1190, %v1478
  %v1488 = vlaneseq
  %v1489 = vshrl.u32 %v1488, 7
  %v1490 = vsub.s32 0, %v1489
  %v1491 = vrot.slane %v1473, %v1490
  %v1493 = vadd.f32 %v1480, %v1491
  %v1494 = vadd.f32 %v1481, %v1491
  %v1495 = vadd.f32 %v1482, %v1491
  %v1496 = vadd.f32 %v1483, %v1491
  %v1497 = vadd.f32 %v1484, %v1491
  %v1498 = vadd.f32 %v1485, %v1491
  %v1499 = vadd.f32 %v1486, %v1491
  %v1500 = vmax.f32 %v1493, 0.0
  %v1501 = vmax.f32 %v1494, 0.0
  %v1502 = vmax.f32 %v1495, 0.0
  %v1503 = vmax.f32 %v1496, 0.0
  %v1504 = vmax.f32 %v1497, 0.0
  %v1505 = vmax.f32 %v1498, 0.0
  %v1506 = vmax.f32 %v1499, 0.0
  %v1507 = vmul.f32 %v1387, %v1478
  %v1508 = vmul.f32 %v1388, %v1478
  %v1509 = vmul.f32 %v1389, %v1478
  %v1510 = vmul.f32 %v1390, %v1478
  %v1511 = vmul.f32 %v1391, %v1478
  %v1512 = vmul.f32 %v1392, %v1478
  %v1513 = vmul.f32 %v1393, %v1478
  %v1514 = vadd.f32 %v1507, %v1491
  %v1515 = vadd.f32 %v1508, %v1491
  %v1516 = vadd.f32 %v1509, %v1491
  %v1517 = vadd.f32 %v1510, %v1491
  %v1518 = vadd.f32 %v1511, %v1491
  %v1519 = vadd.f32 %v1512, %v1491
  %v1520 = vadd.f32 %v1513, %v1491
  %v1521 = vmax.f32 %v1514, 0.0
  %v1522 = vmax.f32 %v1515, 0.0
  %v1523 = vmax.f32 %v1516, 0.0
  %v1524 = vmax.f32 %v1517, 0.0
  %v1525 = vmax.f32 %v1518, 0.0
  %v1526 = vmax.f32 %v1519, 0.0
  %v1527 = vmax.f32 %v1520, 0.0
  %v1528 = vmax.f32 %v1500, %v1521
  %v1529 = vmax.f32 %v1501, %v1522
  %v1530 = vmax.f32 %v1502, %v1523
  %v1531 = vmax.f32 %v1503, %v1524
  %v1532 = vmax.f32 %v1504, %v1525
  %v1533 = vmax.f32 %v1505, %v1526
  %v1534 = vmax.f32 %v1506, %v1527
  %1535 = vst [vmem:[#allocation4] sm:$0xff] %v1528
  %1536 = vst [vmem:[#allocation4 + $0x8] sm:$0xff] %v1529
  %1537 = vst [vmem:[#allocation4 + $0x10] sm:$0xff] %v1530
  %1538 = vst [vmem:[#allocation4 + $0x18] sm:$0xff] %v1531
  %1539 = vst [vmem:[#allocation4 + $0x20] sm:$0xff] %v1532
  %1540 = vst [vmem:[#allocation4 + $0x28] sm:$0xff] %v1533
  %1541 = vst [vmem:[#allocation4 + $0x30] sm:$0x3] %v1534
  %v1542 = vld [vmem:[#allocation4] sm:$0x3]
  %v1543 = vpack.c.bf16 %v1542, %v1542
  %v1544 = vld [vmem:[%s7] sm:$0xff]
  %v1545 = vld [vmem:[%s7 + $0x8] sm:$0xff]
  %v1546 = vld [vmem:[%s7 + $0x10] sm:$0xff]
  %v1547 = vld [vmem:[%s7 + $0x18] sm:$0xff]
  %v1548 = vld [vmem:[%s7 + $0x20] sm:$0xff]
  %v1549 = vld [vmem:[%s7 + $0x28] sm:$0xff]
  %v1550 = vld [vmem:[%s7 + $0x30] sm:$0xff]
  %v1551 = vld [vmem:[%s7 + $0x38] sm:$0xff]
  %v1552 = vld [vmem:[%s7 + $0x40] sm:$0xff]
  %v1553 = vld [vmem:[%s7 + $0x48] sm:$0xff]
  %v1554 = vld [vmem:[%s7 + $0x50] sm:$0xff]
  %v1555 = vld [vmem:[%s7 + $0x58] sm:$0xff]
  %v1556 = vld [vmem:[%s7 + $0x60] sm:$0xff]
  %v1557 = vld [vmem:[%s7 + $0x68] sm:$0xff]
  %v1558 = vld [vmem:[%s7 + $0x70] sm:$0xff]
  %v1559 = vld [vmem:[%s7 + $0x78] sm:$0xff]
  %v1560 = vld [vmem:[#allocation4 + $0x2] sm:$0x3]
  %v1561 = vpack.c.bf16 %v1560, %v1560
  %s1562 = scalar_lea.vmem %s7, 128
  %v1563 = vld [vmem:[%s1562] sm:$0xff]
  %v1564 = vld [vmem:[%s1562 + $0x8] sm:$0xff]
  %v1565 = vld [vmem:[%s1562 + $0x10] sm:$0xff]
  %v1566 = vld [vmem:[%s1562 + $0x18] sm:$0xff]
  %v1567 = vld [vmem:[%s1562 + $0x20] sm:$0xff]
  %v1568 = vld [vmem:[%s1562 + $0x28] sm:$0xff]
  %v1569 = vld [vmem:[%s1562 + $0x30] sm:$0xff]
  %v1570 = vld [vmem:[%s1562 + $0x38] sm:$0xff]
  %v1571 = vld [vmem:[%s1562 + $0x40] sm:$0xff]
  %v1572 = vld [vmem:[%s1562 + $0x48] sm:$0xff]
  %v1573 = vld [vmem:[%s1562 + $0x50] sm:$0xff]
  %v1574 = vld [vmem:[%s1562 + $0x58] sm:$0xff]
  %v1575 = vld [vmem:[%s1562 + $0x60] sm:$0xff]
  %v1576 = vld [vmem:[%s1562 + $0x68] sm:$0xff]
  %v1577 = vld [vmem:[%s1562 + $0x70] sm:$0xff]
  %v1578 = vld [vmem:[%s1562 + $0x78] sm:$0xff]
  %v1595 = vunpack.c.l.b16 %v1563
  %v1596 = vunpack.c.h.b16 %v1563
  %v1597 = vunpack.c.l.b16 %v1564
  %v1598 = vunpack.c.h.b16 %v1564
  %v1599 = vunpack.c.l.b16 %v1565
  %v1600 = vunpack.c.h.b16 %v1565
  %v1601 = vunpack.c.l.b16 %v1566
  %v1602 = vunpack.c.h.b16 %v1566
  %v1603 = vunpack.c.l.b16 %v1567
  %v1604 = vunpack.c.h.b16 %v1567
  %v1605 = vunpack.c.l.b16 %v1568
  %v1606 = vunpack.c.h.b16 %v1568
  %v1607 = vunpack.c.l.b16 %v1569
  %v1608 = vunpack.c.h.b16 %v1569
  %v1609 = vunpack.c.l.b16 %v1570
  %v1610 = vunpack.c.h.b16 %v1570
  %v1611 = vunpack.c.l.b16 %v1571
  %v1612 = vunpack.c.h.b16 %v1571
  %v1613 = vunpack.c.l.b16 %v1572
  %v1614 = vunpack.c.h.b16 %v1572
  %v1615 = vunpack.c.l.b16 %v1573
  %v1616 = vunpack.c.h.b16 %v1573
  %v1617 = vunpack.c.l.b16 %v1574
  %v1618 = vunpack.c.h.b16 %v1574
  %v1619 = vunpack.c.l.b16 %v1575
  %v1620 = vunpack.c.h.b16 %v1575
  %v1621 = vunpack.c.l.b16 %v1576
  %v1622 = vunpack.c.h.b16 %v1576
  %v1623 = vunpack.c.l.b16 %v1577
  %v1624 = vunpack.c.h.b16 %v1577
  %v1625 = vunpack.c.l.b16 %v1578
  %v1626 = vunpack.c.h.b16 %v1578
  %v1627 = vpack.c.b16 %v1597, %v1595
  %v1628 = vpack.c.b16 %v1598, %v1596
  %v1629 = vpack.c.b16 %v1601, %v1599
  %v1630 = vpack.c.b16 %v1602, %v1600
  %v1631 = vpack.c.b16 %v1605, %v1603
  %v1632 = vpack.c.b16 %v1606, %v1604
  %v1633 = vpack.c.b16 %v1609, %v1607
  %v1634 = vpack.c.b16 %v1610, %v1608
  %v1635 = vpack.c.b16 %v1613, %v1611
  %v1636 = vpack.c.b16 %v1614, %v1612
  %v1637 = vpack.c.b16 %v1617, %v1615
  %v1638 = vpack.c.b16 %v1618, %v1616
  %v1639 = vpack.c.b16 %v1621, %v1619
  %v1640 = vpack.c.b16 %v1622, %v1620
  %v1641 = vpack.c.b16 %v1625, %v1623
  %v1642 = vpack.c.b16 %v1626, %v1624
  %1659 = vmatprep.subr.bf16.mxu0 %v1628
  %1660 = vmatpush1.bf16.msra.mxu0 %v1627
  %1661 = vmatprep.subr.bf16.mxu0 %v1630
  %1662 = vmatpush1.bf16.msra.mxu0 %v1629
  %1663 = vmatprep.subr.bf16.mxu0 %v1632
  %1664 = vmatpush1.bf16.msra.mxu0 %v1631
  %1665 = vmatprep.subr.bf16.mxu0 %v1634
  %1666 = vmatpush1.bf16.msra.mxu0 %v1633
  %1667 = vmatprep.subr.bf16.mxu0 %v1636
  %1668 = vmatpush1.bf16.msra.mxu0 %v1635
  %1669 = vmatprep.subr.bf16.mxu0 %v1638
  %1670 = vmatpush1.bf16.msra.mxu0 %v1637
  %1671 = vmatprep.subr.bf16.mxu0 %v1640
  %1672 = vmatpush1.bf16.msra.mxu0 %v1639
  %1673 = vmatprep.subr.bf16.mxu0 %v1642
  %1674 = vmatpush1.bf16.msra.mxu0 %v1641
  %1675 = vmatprep.subr.bf16.mxu0 0
  %1676 = vmatpush1.bf16.msra.mxu0 0
  %1677 = vmatprep.subr.bf16.mxu0 0
  %1678 = vmatpush1.bf16.msra.mxu0 0
  %1679 = vmatprep.subr.bf16.mxu0 0
  %1680 = vmatpush1.bf16.msra.mxu0 0
  %1681 = vmatprep.subr.bf16.mxu0 0
  %1682 = vmatpush1.bf16.msra.mxu0 0
  %1683 = vmatprep.subr.bf16.mxu0 0
  %1684 = vmatpush1.bf16.msra.mxu0 0
  %1685 = vmatprep.subr.bf16.mxu0 0
  %1686 = vmatpush1.bf16.msra.mxu0 0
  %1687 = vmatprep.subr.bf16.mxu0 0
  %1688 = vmatpush1.bf16.msra.mxu0 0
  %1689 = vmatprep.subr.bf16.mxu0 0
  %1690 = vmatpush1.bf16.msra.mxu0 0
  %1691 = vmatprep.mubr.bf16.mxu0 0
  %1692 = vmatmul.mubr.bf16.gmra.mrb[0].mxu0 %v1561
  %v1693 = vpop.f32.mrb[0].mxu0
  %v1694 = vadd.f32 0.0, %v1693
  %v1695 = vpop.f32.mrb[0].mxu0
  %v1696 = vadd.f32 0.0, %v1695
  %v1697 = vpop.f32.mrb[0].mxu0
  %v1698 = vpop.f32.mrb[0].mxu0
  %1699 = vdwg.mxu0
  %v1716 = vunpack.c.l.b16 %v1544
  %v1717 = vunpack.c.h.b16 %v1544
  %v1718 = vunpack.c.l.b16 %v1545
  %v1719 = vunpack.c.h.b16 %v1545
  %v1720 = vunpack.c.l.b16 %v1546
  %v1721 = vunpack.c.h.b16 %v1546
  %v1722 = vunpack.c.l.b16 %v1547
  %v1723 = vunpack.c.h.b16 %v1547
  %v1724 = vunpack.c.l.b16 %v1548
  %v1725 = vunpack.c.h.b16 %v1548
  %v1726 = vunpack.c.l.b16 %v1549
  %v1727 = vunpack.c.h.b16 %v1549
  %v1728 = vunpack.c.l.b16 %v1550
  %v1729 = vunpack.c.h.b16 %v1550
  %v1730 = vunpack.c.l.b16 %v1551
  %v1731 = vunpack.c.h.b16 %v1551
  %v1732 = vunpack.c.l.b16 %v1552
  %v1733 = vunpack.c.h.b16 %v1552
  %v1734 = vunpack.c.l.b16 %v1553
  %v1735 = vunpack.c.h.b16 %v1553
  %v1736 = vunpack.c.l.b16 %v1554
  %v1737 = vunpack.c.h.b16 %v1554
  %v1738 = vunpack.c.l.b16 %v1555
  %v1739 = vunpack.c.h.b16 %v1555
  %v1740 = vunpack.c.l.b16 %v1556
  %v1741 = vunpack.c.h.b16 %v1556
  %v1742 = vunpack.c.l.b16 %v1557
  %v1743 = vunpack.c.h.b16 %v1557
  %v1744 = vunpack.c.l.b16 %v1558
  %v1745 = vunpack.c.h.b16 %v1558
  %v1746 = vunpack.c.l.b16 %v1559
  %v1747 = vunpack.c.h.b16 %v1559
  %v1748 = vpack.c.b16 %v1718, %v1716
  %v1749 = vpack.c.b16 %v1719, %v1717
  %v1750 = vpack.c.b16 %v1722, %v1720
  %v1751 = vpack.c.b16 %v1723, %v1721
  %v1752 = vpack.c.b16 %v1726, %v1724
  %v1753 = vpack.c.b16 %v1727, %v1725
  %v1754 = vpack.c.b16 %v1730, %v1728
  %v1755 = vpack.c.b16 %v1731, %v1729
  %v1756 = vpack.c.b16 %v1734, %v1732
  %v1757 = vpack.c.b16 %v1735, %v1733
  %v1758 = vpack.c.b16 %v1738, %v1736
  %v1759 = vpack.c.b16 %v1739, %v1737
  %v1760 = vpack.c.b16 %v1742, %v1740
  %v1761 = vpack.c.b16 %v1743, %v1741
  %v1762 = vpack.c.b16 %v1746, %v1744
  %v1763 = vpack.c.b16 %v1747, %v1745
  %1780 = vmatprep.subr.bf16.mxu0 %v1749
  %1781 = vmatpush1.bf16.msra.mxu0 %v1748
  %1782 = vmatprep.subr.bf16.mxu0 %v1751
  %1783 = vmatpush1.bf16.msra.mxu0 %v1750
  %1784 = vmatprep.subr.bf16.mxu0 %v1753
  %1785 = vmatpush1.bf16.msra.mxu0 %v1752
  %1786 = vmatprep.subr.bf16.mxu0 %v1755
  %1787 = vmatpush1.bf16.msra.mxu0 %v1754
  %1788 = vmatprep.subr.bf16.mxu0 %v1757
  %1789 = vmatpush1.bf16.msra.mxu0 %v1756
  %1790 = vmatprep.subr.bf16.mxu0 %v1759
  %1791 = vmatpush1.bf16.msra.mxu0 %v1758
  %1792 = vmatprep.subr.bf16.mxu0 %v1761
  %1793 = vmatpush1.bf16.msra.mxu0 %v1760
  %1794 = vmatprep.subr.bf16.mxu0 %v1763
  %1795 = vmatpush1.bf16.msra.mxu0 %v1762
  %1796 = vmatprep.subr.bf16.mxu0 0
  %1797 = vmatpush1.bf16.msra.mxu0 0
  %1798 = vmatprep.subr.bf16.mxu0 0
  %1799 = vmatpush1.bf16.msra.mxu0 0
  %1800 = vmatprep.subr.bf16.mxu0 0
  %1801 = vmatpush1.bf16.msra.mxu0 0
  %1802 = vmatprep.subr.bf16.mxu0 0
  %1803 = vmatpush1.bf16.msra.mxu0 0
  %1804 = vmatprep.subr.bf16.mxu0 0
  %1805 = vmatpush1.bf16.msra.mxu0 0
  %1806 = vmatprep.subr.bf16.mxu0 0
  %1807 = vmatpush1.bf16.msra.mxu0 0
  %1808 = vmatprep.subr.bf16.mxu0 0
  %1809 = vmatpush1.bf16.msra.mxu0 0
  %1810 = vmatprep.subr.bf16.mxu0 0
  %1811 = vmatpush1.bf16.msra.mxu0 0
  %1812 = vmatprep.mubr.bf16.mxu0 0
  %1813 = vmatmul.mubr.bf16.gmra.mrb[0].mxu0 %v1543
  %v1814 = vpop.f32.mrb[0].mxu0
  %v1815 = vadd.f32 %v1694, %v1814
  %v1816 = vpop.f32.mrb[0].mxu0
  %v1817 = vadd.f32 %v1696, %v1816
  %v1818 = vpop.f32.mrb[0].mxu0
  %v1819 = vpop.f32.mrb[0].mxu0
  %1820 = vdwg.mxu0
  %v1821 = vld [vmem:[#allocation4 + $0x4] sm:$0x3]
  %v1822 = vpack.c.bf16 %v1821, %v1821
  %s1823 = scalar_lea.vmem %s7, 256
  %v1824 = vld [vmem:[%s1823] sm:$0xff]
  %v1825 = vld [vmem:[%s1823 + $0x8] sm:$0xff]
  %v1826 = vld [vmem:[%s1823 + $0x10] sm:$0xff]
  %v1827 = vld [vmem:[%s1823 + $0x18] sm:$0xff]
  %v1828 = vld [vmem:[%s1823 + $0x20] sm:$0xff]
  %v1829 = vld [vmem:[%s1823 + $0x28] sm:$0xff]
  %v1830 = vld [vmem:[%s1823 + $0x30] sm:$0xff]
  %v1831 = vld [vmem:[%s1823 + $0x38] sm:$0xff]
  %v1832 = vld [vmem:[%s1823 + $0x40] sm:$0xff]
  %v1833 = vld [vmem:[%s1823 + $0x48] sm:$0xff]
  %v1834 = vld [vmem:[%s1823 + $0x50] sm:$0xff]
  %v1835 = vld [vmem:[%s1823 + $0x58] sm:$0xff]
  %v1836 = vld [vmem:[%s1823 + $0x60] sm:$0xff]
  %v1837 = vld [vmem:[%s1823 + $0x68] sm:$0xff]
  %v1838 = vld [vmem:[%s1823 + $0x70] sm:$0xff]
  %v1839 = vld [vmem:[%s1823 + $0x78] sm:$0xff]
  %v1856 = vunpack.c.l.b16 %v1824
  %v1857 = vunpack.c.h.b16 %v1824
  %v1858 = vunpack.c.l.b16 %v1825
  %v1859 = vunpack.c.h.b16 %v1825
  %v1860 = vunpack.c.l.b16 %v1826
  %v1861 = vunpack.c.h.b16 %v1826
  %v1862 = vunpack.c.l.b16 %v1827
  %v1863 = vunpack.c.h.b16 %v1827
  %v1864 = vunpack.c.l.b16 %v1828
  %v1865 = vunpack.c.h.b16 %v1828
  %v1866 = vunpack.c.l.b16 %v1829
  %v1867 = vunpack.c.h.b16 %v1829
  %v1868 = vunpack.c.l.b16 %v1830
  %v1869 = vunpack.c.h.b16 %v1830
  %v1870 = vunpack.c.l.b16 %v1831
  %v1871 = vunpack.c.h.b16 %v1831
  %v1872 = vunpack.c.l.b16 %v1832
  %v1873 = vunpack.c.h.b16 %v1832
  %v1874 = vunpack.c.l.b16 %v1833
  %v1875 = vunpack.c.h.b16 %v1833
  %v1876 = vunpack.c.l.b16 %v1834
  %v1877 = vunpack.c.h.b16 %v1834
  %v1878 = vunpack.c.l.b16 %v1835
  %v1879 = vunpack.c.h.b16 %v1835
  %v1880 = vunpack.c.l.b16 %v1836
  %v1881 = vunpack.c.h.b16 %v1836
  %v1882 = vunpack.c.l.b16 %v1837
  %v1883 = vunpack.c.h.b16 %v1837
  %v1884 = vunpack.c.l.b16 %v1838
  %v1885 = vunpack.c.h.b16 %v1838
  %v1886 = vunpack.c.l.b16 %v1839
  %v1887 = vunpack.c.h.b16 %v1839
  %v1888 = vpack.c.b16 %v1858, %v1856
  %v1889 = vpack.c.b16 %v1859, %v1857
  %v1890 = vpack.c.b16 %v1862, %v1860
  %v1891 = vpack.c.b16 %v1863, %v1861
  %v1892 = vpack.c.b16 %v1866, %v1864
  %v1893 = vpack.c.b16 %v1867, %v1865
  %v1894 = vpack.c.b16 %v1870, %v1868
  %v1895 = vpack.c.b16 %v1871, %v1869
  %v1896 = vpack.c.b16 %v1874, %v1872
  %v1897 = vpack.c.b16 %v1875, %v1873
  %v1898 = vpack.c.b16 %v1878, %v1876
  %v1899 = vpack.c.b16 %v1879, %v1877
  %v1900 = vpack.c.b16 %v1882, %v1880
  %v1901 = vpack.c.b16 %v1883, %v1881
  %v1902 = vpack.c.b16 %v1886, %v1884
  %v1903 = vpack.c.b16 %v1887, %v1885
  %1920 = vmatprep.subr.bf16.mxu0 %v1889
  %1921 = vmatpush1.bf16.msra.mxu0 %v1888
  %1922 = vmatprep.subr.bf16.mxu0 %v1891
  %1923 = vmatpush1.bf16.msra.mxu0 %v1890
  %1924 = vmatprep.subr.bf16.mxu0 %v1893
  %1925 = vmatpush1.bf16.msra.mxu0 %v1892
  %1926 = vmatprep.subr.bf16.mxu0 %v1895
  %1927 = vmatpush1.bf16.msra.mxu0 %v1894
  %1928 = vmatprep.subr.bf16.mxu0 %v1897
  %1929 = vmatpush1.bf16.msra.mxu0 %v1896
  %1930 = vmatprep.subr.bf16.mxu0 %v1899
  %1931 = vmatpush1.bf16.msra.mxu0 %v1898
  %1932 = vmatprep.subr.bf16.mxu0 %v1901
  %1933 = vmatpush1.bf16.msra.mxu0 %v1900
  %1934 = vmatprep.subr.bf16.mxu0 %v1903
  %1935 = vmatpush1.bf16.msra.mxu0 %v1902
  %1936 = vmatprep.subr.bf16.mxu0 0
  %1937 = vmatpush1.bf16.msra.mxu0 0
  %1938 = vmatprep.subr.bf16.mxu0 0
  %1939 = vmatpush1.bf16.msra.mxu0 0
  %1940 = vmatprep.subr.bf16.mxu0 0
  %1941 = vmatpush1.bf16.msra.mxu0 0
  %1942 = vmatprep.subr.bf16.mxu0 0
  %1943 = vmatpush1.bf16.msra.mxu0 0
  %1944 = vmatprep.subr.bf16.mxu0 0
  %1945 = vmatpush1.bf16.msra.mxu0 0
  %1946 = vmatprep.subr.bf16.mxu0 0
  %1947 = vmatpush1.bf16.msra.mxu0 0
  %1948 = vmatprep.subr.bf16.mxu0 0
  %1949 = vmatpush1.bf16.msra.mxu0 0
  %1950 = vmatprep.subr.bf16.mxu0 0
  %1951 = vmatpush1.bf16.msra.mxu0 0
  %1952 = vmatprep.mubr.bf16.mxu0 0
  %1953 = vmatmul.mubr.bf16.gmra.mrb[0].mxu0 %v1822
  %v1954 = vpop.f32.mrb[0].mxu0
  %v1955 = vadd.f32 0.0, %v1954
  %v1956 = vpop.f32.mrb[0].mxu0
  %v1957 = vadd.f32 0.0, %v1956
  %v1958 = vpop.f32.mrb[0].mxu0
  %v1959 = vpop.f32.mrb[0].mxu0
  %1960 = vdwg.mxu0
  %v1961 = vadd.f32 %v1815, %v1955
  %v1962 = vadd.f32 %v1817, %v1957
  %v1963 = vld [vmem:[#allocation4 + $0x6] sm:$0x3]
  %v1964 = vpack.c.bf16 %v1963, %v1963
  %s1965 = scalar_lea.vmem %s7, 384
  %v1966 = vld [vmem:[%s1965] sm:$0xff]
  %v1967 = vld [vmem:[%s1965 + $0x8] sm:$0xff]
  %v1968 = vld [vmem:[%s1965 + $0x10] sm:$0xff]
  %v1969 = vld [vmem:[%s1965 + $0x18] sm:$0xff]
  %v1970 = vld [vmem:[%s1965 + $0x20] sm:$0xff]
  %v1971 = vld [vmem:[%s1965 + $0x28] sm:$0xff]
  %v1972 = vld [vmem:[%s1965 + $0x30] sm:$0xff]
  %v1973 = vld [vmem:[%s1965 + $0x38] sm:$0xff]
  %v1974 = vld [vmem:[%s1965 + $0x40] sm:$0xff]
  %v1975 = vld [vmem:[%s1965 + $0x48] sm:$0xff]
  %v1976 = vld [vmem:[%s1965 + $0x50] sm:$0xff]
  %v1977 = vld [vmem:[%s1965 + $0x58] sm:$0xff]
  %v1978 = vld [vmem:[%s1965 + $0x60] sm:$0xff]
  %v1979 = vld [vmem:[%s1965 + $0x68] sm:$0xff]
  %v1980 = vld [vmem:[%s1965 + $0x70] sm:$0xff]
  %v1981 = vld [vmem:[%s1965 + $0x78] sm:$0xff]
  %v1998 = vunpack.c.l.b16 %v1966
  %v1999 = vunpack.c.h.b16 %v1966
  %v2000 = vunpack.c.l.b16 %v1967
  %v2001 = vunpack.c.h.b16 %v1967
  %v2002 = vunpack.c.l.b16 %v1968
  %v2003 = vunpack.c.h.b16 %v1968
  %v2004 = vunpack.c.l.b16 %v1969
  %v2005 = vunpack.c.h.b16 %v1969
  %v2006 = vunpack.c.l.b16 %v1970
  %v2007 = vunpack.c.h.b16 %v1970
  %v2008 = vunpack.c.l.b16 %v1971
  %v2009 = vunpack.c.h.b16 %v1971
  %v2010 = vunpack.c.l.b16 %v1972
  %v2011 = vunpack.c.h.b16 %v1972
  %v2012 = vunpack.c.l.b16 %v1973
  %v2013 = vunpack.c.h.b16 %v1973
  %v2014 = vunpack.c.l.b16 %v1974
  %v2015 = vunpack.c.h.b16 %v1974
  %v2016 = vunpack.c.l.b16 %v1975
  %v2017 = vunpack.c.h.b16 %v1975
  %v2018 = vunpack.c.l.b16 %v1976
  %v2019 = vunpack.c.h.b16 %v1976
  %v2020 = vunpack.c.l.b16 %v1977
  %v2021 = vunpack.c.h.b16 %v1977
  %v2022 = vunpack.c.l.b16 %v1978
  %v2023 = vunpack.c.h.b16 %v1978
  %v2024 = vunpack.c.l.b16 %v1979
  %v2025 = vunpack.c.h.b16 %v1979
  %v2026 = vunpack.c.l.b16 %v1980
  %v2027 = vunpack.c.h.b16 %v1980
  %v2028 = vunpack.c.l.b16 %v1981
  %v2029 = vunpack.c.h.b16 %v1981
  %v2030 = vpack.c.b16 %v2000, %v1998
  %v2031 = vpack.c.b16 %v2001, %v1999
  %v2032 = vpack.c.b16 %v2004, %v2002
  %v2033 = vpack.c.b16 %v2005, %v2003
  %v2034 = vpack.c.b16 %v2008, %v2006
  %v2035 = vpack.c.b16 %v2009, %v2007
  %v2036 = vpack.c.b16 %v2012, %v2010
  %v2037 = vpack.c.b16 %v2013, %v2011
  %v2038 = vpack.c.b16 %v2016, %v2014
  %v2039 = vpack.c.b16 %v2017, %v2015
  %v2040 = vpack.c.b16 %v2020, %v2018
  %v2041 = vpack.c.b16 %v2021, %v2019
  %v2042 = vpack.c.b16 %v2024, %v2022
  %v2043 = vpack.c.b16 %v2025, %v2023
  %v2044 = vpack.c.b16 %v2028, %v2026
  %v2045 = vpack.c.b16 %v2029, %v2027
  %2062 = vmatprep.subr.bf16.mxu0 %v2031
  %2063 = vmatpush1.bf16.msra.mxu0 %v2030
  %2064 = vmatprep.subr.bf16.mxu0 %v2033
  %2065 = vmatpush1.bf16.msra.mxu0 %v2032
  %2066 = vmatprep.subr.bf16.mxu0 %v2035
  %2067 = vmatpush1.bf16.msra.mxu0 %v2034
  %2068 = vmatprep.subr.bf16.mxu0 %v2037
  %2069 = vmatpush1.bf16.msra.mxu0 %v2036
  %2070 = vmatprep.subr.bf16.mxu0 %v2039
  %2071 = vmatpush1.bf16.msra.mxu0 %v2038
  %2072 = vmatprep.subr.bf16.mxu0 %v2041
  %2073 = vmatpush1.bf16.msra.mxu0 %v2040
  %2074 = vmatprep.subr.bf16.mxu0 %v2043
  %2075 = vmatpush1.bf16.msra.mxu0 %v2042
  %2076 = vmatprep.subr.bf16.mxu0 %v2045
  %2077 = vmatpush1.bf16.msra.mxu0 %v2044
  %2078 = vmatprep.subr.bf16.mxu0 0
  %2079 = vmatpush1.bf16.msra.mxu0 0
  %2080 = vmatprep.subr.bf16.mxu0 0
  %2081 = vmatpush1.bf16.msra.mxu0 0
  %2082 = vmatprep.subr.bf16.mxu0 0
  %2083 = vmatpush1.bf16.msra.mxu0 0
  %2084 = vmatprep.subr.bf16.mxu0 0
  %2085 = vmatpush1.bf16.msra.mxu0 0
  %2086 = vmatprep.subr.bf16.mxu0 0
  %2087 = vmatpush1.bf16.msra.mxu0 0
  %2088 = vmatprep.subr.bf16.mxu0 0
  %2089 = vmatpush1.bf16.msra.mxu0 0
  %2090 = vmatprep.subr.bf16.mxu0 0
  %2091 = vmatpush1.bf16.msra.mxu0 0
  %2092 = vmatprep.subr.bf16.mxu0 0
  %2093 = vmatpush1.bf16.msra.mxu0 0
  %2094 = vmatprep.mubr.bf16.mxu0 0
  %2095 = vmatmul.mubr.bf16.gmra.mrb[0].mxu0 %v1964
  %v2096 = vpop.f32.mrb[0].mxu0
  %v2097 = vadd.f32 0.0, %v2096
  %v2098 = vpop.f32.mrb[0].mxu0
  %v2099 = vadd.f32 0.0, %v2098
  %v2100 = vpop.f32.mrb[0].mxu0
  %v2101 = vpop.f32.mrb[0].mxu0
  %2102 = vdwg.mxu0
  %v2103 = vadd.f32 %v1961, %v2097
  %v2104 = vadd.f32 %v1962, %v2099
  %v2105 = vld [vmem:[#allocation4 + $0x8] sm:$0x3]
  %v2106 = vpack.c.bf16 %v2105, %v2105
  %s2107 = scalar_lea.vmem %s7, 512
  %v2108 = vld [vmem:[%s2107] sm:$0xff]
  %v2109 = vld [vmem:[%s2107 + $0x8] sm:$0xff]
  %v2110 = vld [vmem:[%s2107 + $0x10] sm:$0xff]
  %v2111 = vld [vmem:[%s2107 + $0x18] sm:$0xff]
  %v2112 = vld [vmem:[%s2107 + $0x20] sm:$0xff]
  %v2113 = vld [vmem:[%s2107 + $0x28] sm:$0xff]
  %v2114 = vld [vmem:[%s2107 + $0x30] sm:$0xff]
  %v2115 = vld [vmem:[%s2107 + $0x38] sm:$0xff]
  %v2116 = vld [vmem:[%s2107 + $0x40] sm:$0xff]
  %v2117 = vld [vmem:[%s2107 + $0x48] sm:$0xff]
  %v2118 = vld [vmem:[%s2107 + $0x50] sm:$0xff]
  %v2119 = vld [vmem:[%s2107 + $0x58] sm:$0xff]
  %v2120 = vld [vmem:[%s2107 + $0x60] sm:$0xff]
  %v2121 = vld [vmem:[%s2107 + $0x68] sm:$0xff]
  %v2122 = vld [vmem:[%s2107 + $0x70] sm:$0xff]
  %v2123 = vld [vmem:[%s2107 + $0x78] sm:$0xff]
  %v2140 = vunpack.c.l.b16 %v2108
  %v2141 = vunpack.c.h.b16 %v2108
  %v2142 = vunpack.c.l.b16 %v2109
  %v2143 = vunpack.c.h.b16 %v2109
  %v2144 = vunpack.c.l.b16 %v2110
  %v2145 = vunpack.c.h.b16 %v2110
  %v2146 = vunpack.c.l.b16 %v2111
  %v2147 = vunpack.c.h.b16 %v2111
  %v2148 = vunpack.c.l.b16 %v2112
  %v2149 = vunpack.c.h.b16 %v2112
  %v2150 = vunpack.c.l.b16 %v2113
  %v2151 = vunpack.c.h.b16 %v2113
  %v2152 = vunpack.c.l.b16 %v2114
  %v2153 = vunpack.c.h.b16 %v2114
  %v2154 = vunpack.c.l.b16 %v2115
  %v2155 = vunpack.c.h.b16 %v2115
  %v2156 = vunpack.c.l.b16 %v2116
  %v2157 = vunpack.c.h.b16 %v2116
  %v2158 = vunpack.c.l.b16 %v2117
  %v2159 = vunpack.c.h.b16 %v2117
  %v2160 = vunpack.c.l.b16 %v2118
  %v2161 = vunpack.c.h.b16 %v2118
  %v2162 = vunpack.c.l.b16 %v2119
  %v2163 = vunpack.c.h.b16 %v2119
  %v2164 = vunpack.c.l.b16 %v2120
  %v2165 = vunpack.c.h.b16 %v2120
  %v2166 = vunpack.c.l.b16 %v2121
  %v2167 = vunpack.c.h.b16 %v2121
  %v2168 = vunpack.c.l.b16 %v2122
  %v2169 = vunpack.c.h.b16 %v2122
  %v2170 = vunpack.c.l.b16 %v2123
  %v2171 = vunpack.c.h.b16 %v2123
  %v2172 = vpack.c.b16 %v2142, %v2140
  %v2173 = vpack.c.b16 %v2143, %v2141
  %v2174 = vpack.c.b16 %v2146, %v2144
  %v2175 = vpack.c.b16 %v2147, %v2145
  %v2176 = vpack.c.b16 %v2150, %v2148
  %v2177 = vpack.c.b16 %v2151, %v2149
  %v2178 = vpack.c.b16 %v2154, %v2152
  %v2179 = vpack.c.b16 %v2155, %v2153
  %v2180 = vpack.c.b16 %v2158, %v2156
  %v2181 = vpack.c.b16 %v2159, %v2157
  %v2182 = vpack.c.b16 %v2162, %v2160
  %v2183 = vpack.c.b16 %v2163, %v2161
  %v2184 = vpack.c.b16 %v2166, %v2164
  %v2185 = vpack.c.b16 %v2167, %v2165
  %v2186 = vpack.c.b16 %v2170, %v2168
  %v2187 = vpack.c.b16 %v2171, %v2169
  %2204 = vmatprep.subr.bf16.mxu0 %v2173
  %2205 = vmatpush1.bf16.msra.mxu0 %v2172
  %2206 = vmatprep.subr.bf16.mxu0 %v2175
  %2207 = vmatpush1.bf16.msra.mxu0 %v2174
  %2208 = vmatprep.subr.bf16.mxu0 %v2177
  %2209 = vmatpush1.bf16.msra.mxu0 %v2176
  %2210 = vmatprep.subr.bf16.mxu0 %v2179
  %2211 = vmatpush1.bf16.msra.mxu0 %v2178
  %2212 = vmatprep.subr.bf16.mxu0 %v2181
  %2213 = vmatpush1.bf16.msra.mxu0 %v2180
  %2214 = vmatprep.subr.bf16.mxu0 %v2183
  %2215 = vmatpush1.bf16.msra.mxu0 %v2182
  %2216 = vmatprep.subr.bf16.mxu0 %v2185
  %2217 = vmatpush1.bf16.msra.mxu0 %v2184
  %2218 = vmatprep.subr.bf16.mxu0 %v2187
  %2219 = vmatpush1.bf16.msra.mxu0 %v2186
  %2220 = vmatprep.subr.bf16.mxu0 0
  %2221 = vmatpush1.bf16.msra.mxu0 0
  %2222 = vmatprep.subr.bf16.mxu0 0
  %2223 = vmatpush1.bf16.msra.mxu0 0
  %2224 = vmatprep.subr.bf16.mxu0 0
  %2225 = vmatpush1.bf16.msra.mxu0 0
  %2226 = vmatprep.subr.bf16.mxu0 0
  %2227 = vmatpush1.bf16.msra.mxu0 0
  %2228 = vmatprep.subr.bf16.mxu0 0
  %2229 = vmatpush1.bf16.msra.mxu0 0
  %2230 = vmatprep.subr.bf16.mxu0 0
  %2231 = vmatpush1.bf16.msra.mxu0 0
  %2232 = vmatprep.subr.bf16.mxu0 0
  %2233 = vmatpush1.bf16.msra.mxu0 0
  %2234 = vmatprep.subr.bf16.mxu0 0
  %2235 = vmatpush1.bf16.msra.mxu0 0
  %2236 = vmatprep.mubr.bf16.mxu0 0
  %2237 = vmatmul.mubr.bf16.gmra.mrb[0].mxu0 %v2106
  %v2238 = vpop.f32.mrb[0].mxu0
  %v2239 = vadd.f32 0.0, %v2238
  %v2240 = vpop.f32.mrb[0].mxu0
  %v2241 = vadd.f32 0.0, %v2240
  %v2242 = vpop.f32.mrb[0].mxu0
  %v2243 = vpop.f32.mrb[0].mxu0
  %2244 = vdwg.mxu0
  %v2245 = vadd.f32 %v2103, %v2239
  %v2246 = vadd.f32 %v2104, %v2241
  %v2247 = vld [vmem:[#allocation4 + $0xa] sm:$0x3]
  %v2248 = vpack.c.bf16 %v2247, %v2247
  %s2249 = scalar_lea.vmem %s7, 640
  %v2250 = vld [vmem:[%s2249] sm:$0xff]
  %v2251 = vld [vmem:[%s2249 + $0x8] sm:$0xff]
  %v2252 = vld [vmem:[%s2249 + $0x10] sm:$0xff]
  %v2253 = vld [vmem:[%s2249 + $0x18] sm:$0xff]
  %v2254 = vld [vmem:[%s2249 + $0x20] sm:$0xff]
  %v2255 = vld [vmem:[%s2249 + $0x28] sm:$0xff]
  %v2256 = vld [vmem:[%s2249 + $0x30] sm:$0xff]
  %v2257 = vld [vmem:[%s2249 + $0x38] sm:$0xff]
  %v2258 = vld [vmem:[%s2249 + $0x40] sm:$0xff]
  %v2259 = vld [vmem:[%s2249 + $0x48] sm:$0xff]
  %v2260 = vld [vmem:[%s2249 + $0x50] sm:$0xff]
  %v2261 = vld [vmem:[%s2249 + $0x58] sm:$0xff]
  %v2262 = vld [vmem:[%s2249 + $0x60] sm:$0xff]
  %v2263 = vld [vmem:[%s2249 + $0x68] sm:$0xff]
  %v2264 = vld [vmem:[%s2249 + $0x70] sm:$0xff]
  %v2265 = vld [vmem:[%s2249 + $0x78] sm:$0xff]
  %v2282 = vunpack.c.l.b16 %v2250
  %v2283 = vunpack.c.h.b16 %v2250
  %v2284 = vunpack.c.l.b16 %v2251
  %v2285 = vunpack.c.h.b16 %v2251
  %v2286 = vunpack.c.l.b16 %v2252
  %v2287 = vunpack.c.h.b16 %v2252
  %v2288 = vunpack.c.l.b16 %v2253
  %v2289 = vunpack.c.h.b16 %v2253
  %v2290 = vunpack.c.l.b16 %v2254
  %v2291 = vunpack.c.h.b16 %v2254
  %v2292 = vunpack.c.l.b16 %v2255
  %v2293 = vunpack.c.h.b16 %v2255
  %v2294 = vunpack.c.l.b16 %v2256
  %v2295 = vunpack.c.h.b16 %v2256
  %v2296 = vunpack.c.l.b16 %v2257
  %v2297 = vunpack.c.h.b16 %v2257
  %v2298 = vunpack.c.l.b16 %v2258
  %v2299 = vunpack.c.h.b16 %v2258
  %v2300 = vunpack.c.l.b16 %v2259
  %v2301 = vunpack.c.h.b16 %v2259
  %v2302 = vunpack.c.l.b16 %v2260
  %v2303 = vunpack.c.h.b16 %v2260
  %v2304 = vunpack.c.l.b16 %v2261
  %v2305 = vunpack.c.h.b16 %v2261
  %v2306 = vunpack.c.l.b16 %v2262
  %v2307 = vunpack.c.h.b16 %v2262
  %v2308 = vunpack.c.l.b16 %v2263
  %v2309 = vunpack.c.h.b16 %v2263
  %v2310 = vunpack.c.l.b16 %v2264
  %v2311 = vunpack.c.h.b16 %v2264
  %v2312 = vunpack.c.l.b16 %v2265
  %v2313 = vunpack.c.h.b16 %v2265
  %v2314 = vpack.c.b16 %v2284, %v2282
  %v2315 = vpack.c.b16 %v2285, %v2283
  %v2316 = vpack.c.b16 %v2288, %v2286
  %v2317 = vpack.c.b16 %v2289, %v2287
  %v2318 = vpack.c.b16 %v2292, %v2290
  %v2319 = vpack.c.b16 %v2293, %v2291
  %v2320 = vpack.c.b16 %v2296, %v2294
  %v2321 = vpack.c.b16 %v2297, %v2295
  %v2322 = vpack.c.b16 %v2300, %v2298
  %v2323 = vpack.c.b16 %v2301, %v2299
  %v2324 = vpack.c.b16 %v2304, %v2302
  %v2325 = vpack.c.b16 %v2305, %v2303
  %v2326 = vpack.c.b16 %v2308, %v2306
  %v2327 = vpack.c.b16 %v2309, %v2307
  %v2328 = vpack.c.b16 %v2312, %v2310
  %v2329 = vpack.c.b16 %v2313, %v2311
  %2346 = vmatprep.subr.bf16.mxu0 %v2315
  %2347 = vmatpush1.bf16.msra.mxu0 %v2314
  %2348 = vmatprep.subr.bf16.mxu0 %v2317
  %2349 = vmatpush1.bf16.msra.mxu0 %v2316
  %2350 = vmatprep.subr.bf16.mxu0 %v2319
  %2351 = vmatpush1.bf16.msra.mxu0 %v2318
  %2352 = vmatprep.subr.bf16.mxu0 %v2321
  %2353 = vmatpush1.bf16.msra.mxu0 %v2320
  %2354 = vmatprep.subr.bf16.mxu0 %v2323
  %2355 = vmatpush1.bf16.msra.mxu0 %v2322
  %2356 = vmatprep.subr.bf16.mxu0 %v2325
  %2357 = vmatpush1.bf16.msra.mxu0 %v2324
  %2358 = vmatprep.subr.bf16.mxu0 %v2327
  %2359 = vmatpush1.bf16.msra.mxu0 %v2326
  %2360 = vmatprep.subr.bf16.mxu0 %v2329
  %2361 = vmatpush1.bf16.msra.mxu0 %v2328
  %2362 = vmatprep.subr.bf16.mxu0 0
  %2363 = vmatpush1.bf16.msra.mxu0 0
  %2364 = vmatprep.subr.bf16.mxu0 0
  %2365 = vmatpush1.bf16.msra.mxu0 0
  %2366 = vmatprep.subr.bf16.mxu0 0
  %2367 = vmatpush1.bf16.msra.mxu0 0
  %2368 = vmatprep.subr.bf16.mxu0 0
  %2369 = vmatpush1.bf16.msra.mxu0 0
  %2370 = vmatprep.subr.bf16.mxu0 0
  %2371 = vmatpush1.bf16.msra.mxu0 0
  %2372 = vmatprep.subr.bf16.mxu0 0
  %2373 = vmatpush1.bf16.msra.mxu0 0
  %2374 = vmatprep.subr.bf16.mxu0 0
  %2375 = vmatpush1.bf16.msra.mxu0 0
  %2376 = vmatprep.subr.bf16.mxu0 0
  %2377 = vmatpush1.bf16.msra.mxu0 0
  %2378 = vmatprep.mubr.bf16.mxu0 0
  %2379 = vmatmul.mubr.bf16.gmra.mrb[0].mxu0 %v2248
  %v2380 = vpop.f32.mrb[0].mxu0
  %v2381 = vadd.f32 0.0, %v2380
  %v2382 = vpop.f32.mrb[0].mxu0
  %v2383 = vadd.f32 0.0, %v2382
  %v2384 = vpop.f32.mrb[0].mxu0
  %v2385 = vpop.f32.mrb[0].mxu0
  %2386 = vdwg.mxu0
  %v2387 = vadd.f32 %v2245, %v2381
  %v2388 = vadd.f32 %v2246, %v2383
  %v2389 = vld [vmem:[#allocation4 + $0xc] sm:$0x3]
  %v2390 = vpack.c.bf16 %v2389, %v2389
  %s2391 = scalar_lea.vmem %s7, 768
  %v2392 = vld [vmem:[%s2391] sm:$0xff]
  %v2393 = vld [vmem:[%s2391 + $0x8] sm:$0xff]
  %v2394 = vld [vmem:[%s2391 + $0x10] sm:$0xff]
  %v2395 = vld [vmem:[%s2391 + $0x18] sm:$0xff]
  %v2396 = vld [vmem:[%s2391 + $0x20] sm:$0xff]
  %v2397 = vld [vmem:[%s2391 + $0x28] sm:$0xff]
  %v2398 = vld [vmem:[%s2391 + $0x30] sm:$0xff]
  %v2399 = vld [vmem:[%s2391 + $0x38] sm:$0xff]
  %v2400 = vld [vmem:[%s2391 + $0x40] sm:$0xff]
  %v2401 = vld [vmem:[%s2391 + $0x48] sm:$0xff]
  %v2402 = vld [vmem:[%s2391 + $0x50] sm:$0xff]
  %v2403 = vld [vmem:[%s2391 + $0x58] sm:$0xff]
  %v2404 = vld [vmem:[%s2391 + $0x60] sm:$0xff]
  %v2405 = vld [vmem:[%s2391 + $0x68] sm:$0xff]
  %v2406 = vld [vmem:[%s2391 + $0x70] sm:$0xff]
  %v2407 = vld [vmem:[%s2391 + $0x78] sm:$0xff]
  %v2424 = vunpack.c.l.b16 %v2392
  %v2425 = vunpack.c.h.b16 %v2392
  %v2426 = vunpack.c.l.b16 %v2393
  %v2427 = vunpack.c.h.b16 %v2393
  %v2428 = vunpack.c.l.b16 %v2394
  %v2429 = vunpack.c.h.b16 %v2394
  %v2430 = vunpack.c.l.b16 %v2395
  %v2431 = vunpack.c.h.b16 %v2395
  %v2432 = vunpack.c.l.b16 %v2396
  %v2433 = vunpack.c.h.b16 %v2396
  %v2434 = vunpack.c.l.b16 %v2397
  %v2435 = vunpack.c.h.b16 %v2397
  %v2436 = vunpack.c.l.b16 %v2398
  %v2437 = vunpack.c.h.b16 %v2398
  %v2438 = vunpack.c.l.b16 %v2399
  %v2439 = vunpack.c.h.b16 %v2399
  %v2440 = vunpack.c.l.b16 %v2400
  %v2441 = vunpack.c.h.b16 %v2400
  %v2442 = vunpack.c.l.b16 %v2401
  %v2443 = vunpack.c.h.b16 %v2401
  %v2444 = vunpack.c.l.b16 %v2402
  %v2445 = vunpack.c.h.b16 %v2402
  %v2446 = vunpack.c.l.b16 %v2403
  %v2447 = vunpack.c.h.b16 %v2403
  %v2448 = vunpack.c.l.b16 %v2404
  %v2449 = vunpack.c.h.b16 %v2404
  %v2450 = vunpack.c.l.b16 %v2405
  %v2451 = vunpack.c.h.b16 %v2405
  %v2452 = vunpack.c.l.b16 %v2406
  %v2453 = vunpack.c.h.b16 %v2406
  %v2454 = vunpack.c.l.b16 %v2407
  %v2455 = vunpack.c.h.b16 %v2407
  %v2456 = vpack.c.b16 %v2426, %v2424
  %v2457 = vpack.c.b16 %v2427, %v2425
  %v2458 = vpack.c.b16 %v2430, %v2428
  %v2459 = vpack.c.b16 %v2431, %v2429
  %v2460 = vpack.c.b16 %v2434, %v2432
  %v2461 = vpack.c.b16 %v2435, %v2433
  %v2462 = vpack.c.b16 %v2438, %v2436
  %v2463 = vpack.c.b16 %v2439, %v2437
  %v2464 = vpack.c.b16 %v2442, %v2440
  %v2465 = vpack.c.b16 %v2443, %v2441
  %v2466 = vpack.c.b16 %v2446, %v2444
  %v2467 = vpack.c.b16 %v2447, %v2445
  %v2468 = vpack.c.b16 %v2450, %v2448
  %v2469 = vpack.c.b16 %v2451, %v2449
  %v2470 = vpack.c.b16 %v2454, %v2452
  %v2471 = vpack.c.b16 %v2455, %v2453
  %2488 = vmatprep.subr.bf16.mxu0 %v2457
  %2489 = vmatpush1.bf16.msra.mxu0 %v2456
  %2490 = vmatprep.subr.bf16.mxu0 %v2459
  %2491 = vmatpush1.bf16.msra.mxu0 %v2458
  %2492 = vmatprep.subr.bf16.mxu0 %v2461
  %2493 = vmatpush1.bf16.msra.mxu0 %v2460
  %2494 = vmatprep.subr.bf16.mxu0 %v2463
  %2495 = vmatpush1.bf16.msra.mxu0 %v2462
  %2496 = vmatprep.subr.bf16.mxu0 %v2465
  %2497 = vmatpush1.bf16.msra.mxu0 %v2464
  %2498 = vmatprep.subr.bf16.mxu0 %v2467
  %2499 = vmatpush1.bf16.msra.mxu0 %v2466
  %2500 = vmatprep.subr.bf16.mxu0 %v2469
  %2501 = vmatpush1.bf16.msra.mxu0 %v2468
  %2502 = vmatprep.subr.bf16.mxu0 %v2471
  %2503 = vmatpush1.bf16.msra.mxu0 %v2470
  %2504 = vmatprep.subr.bf16.mxu0 0
  %2505 = vmatpush1.bf16.msra.mxu0 0
  %2506 = vmatprep.subr.bf16.mxu0 0
  %2507 = vmatpush1.bf16.msra.mxu0 0
  %2508 = vmatprep.subr.bf16.mxu0 0
  %2509 = vmatpush1.bf16.msra.mxu0 0
  %2510 = vmatprep.subr.bf16.mxu0 0
  %2511 = vmatpush1.bf16.msra.mxu0 0
  %2512 = vmatprep.subr.bf16.mxu0 0
  %2513 = vmatpush1.bf16.msra.mxu0 0
  %2514 = vmatprep.subr.bf16.mxu0 0
  %2515 = vmatpush1.bf16.msra.mxu0 0
  %2516 = vmatprep.subr.bf16.mxu0 0
  %2517 = vmatpush1.bf16.msra.mxu0 0
  %2518 = vmatprep.subr.bf16.mxu0 0
  %2519 = vmatpush1.bf16.msra.mxu0 0
  %2520 = vmatprep.mubr.bf16.mxu0 0
  %2521 = vmatmul.mubr.bf16.gmra.mrb[0].mxu0 %v2390
  %v2522 = vpop.f32.mrb[0].mxu0
  %v2523 = vadd.f32 0.0, %v2522
  %v2524 = vpop.f32.mrb[0].mxu0
  %v2525 = vadd.f32 0.0, %v2524
  %v2526 = vpop.f32.mrb[0].mxu0
  %v2527 = vpop.f32.mrb[0].mxu0
  %2528 = vdwg.mxu0
  %v2529 = vadd.f32 %v2387, %v2523
  %v2530 = vadd.f32 %v2388, %v2525
  %v2531 = vld [vmem:[#allocation4 + $0xe] sm:$0x3]
  %v2532 = vpack.c.bf16 %v2531, %v2531
  %s2533 = scalar_lea.vmem %s7, 896
  %v2534 = vld [vmem:[%s2533] sm:$0xff]
  %v2535 = vld [vmem:[%s2533 + $0x8] sm:$0xff]
  %v2536 = vld [vmem:[%s2533 + $0x10] sm:$0xff]
  %v2537 = vld [vmem:[%s2533 + $0x18] sm:$0xff]
  %v2538 = vld [vmem:[%s2533 + $0x20] sm:$0xff]
  %v2539 = vld [vmem:[%s2533 + $0x28] sm:$0xff]
  %v2540 = vld [vmem:[%s2533 + $0x30] sm:$0xff]
  %v2541 = vld [vmem:[%s2533 + $0x38] sm:$0xff]
  %v2542 = vld [vmem:[%s2533 + $0x40] sm:$0xff]
  %v2543 = vld [vmem:[%s2533 + $0x48] sm:$0xff]
  %v2544 = vld [vmem:[%s2533 + $0x50] sm:$0xff]
  %v2545 = vld [vmem:[%s2533 + $0x58] sm:$0xff]
  %v2546 = vld [vmem:[%s2533 + $0x60] sm:$0xff]
  %v2547 = vld [vmem:[%s2533 + $0x68] sm:$0xff]
  %v2548 = vld [vmem:[%s2533 + $0x70] sm:$0xff]
  %v2549 = vld [vmem:[%s2533 + $0x78] sm:$0xff]
  %v2566 = vunpack.c.l.b16 %v2534
  %v2567 = vunpack.c.h.b16 %v2534
  %v2568 = vunpack.c.l.b16 %v2535
  %v2569 = vunpack.c.h.b16 %v2535
  %v2570 = vunpack.c.l.b16 %v2536
  %v2571 = vunpack.c.h.b16 %v2536
  %v2572 = vunpack.c.l.b16 %v2537
  %v2573 = vunpack.c.h.b16 %v2537
  %v2574 = vunpack.c.l.b16 %v2538
  %v2575 = vunpack.c.h.b16 %v2538
  %v2576 = vunpack.c.l.b16 %v2539
  %v2577 = vunpack.c.h.b16 %v2539
  %v2578 = vunpack.c.l.b16 %v2540
  %v2579 = vunpack.c.h.b16 %v2540
  %v2580 = vunpack.c.l.b16 %v2541
  %v2581 = vunpack.c.h.b16 %v2541
  %v2582 = vunpack.c.l.b16 %v2542
  %v2583 = vunpack.c.h.b16 %v2542
  %v2584 = vunpack.c.l.b16 %v2543
  %v2585 = vunpack.c.h.b16 %v2543
  %v2586 = vunpack.c.l.b16 %v2544
  %v2587 = vunpack.c.h.b16 %v2544
  %v2588 = vunpack.c.l.b16 %v2545
  %v2589 = vunpack.c.h.b16 %v2545
  %v2590 = vunpack.c.l.b16 %v2546
  %v2591 = vunpack.c.h.b16 %v2546
  %v2592 = vunpack.c.l.b16 %v2547
  %v2593 = vunpack.c.h.b16 %v2547
  %v2594 = vunpack.c.l.b16 %v2548
  %v2595 = vunpack.c.h.b16 %v2548
  %v2596 = vunpack.c.l.b16 %v2549
  %v2597 = vunpack.c.h.b16 %v2549
  %v2598 = vpack.c.b16 %v2568, %v2566
  %v2599 = vpack.c.b16 %v2569, %v2567
  %v2600 = vpack.c.b16 %v2572, %v2570
  %v2601 = vpack.c.b16 %v2573, %v2571
  %v2602 = vpack.c.b16 %v2576, %v2574
  %v2603 = vpack.c.b16 %v2577, %v2575
  %v2604 = vpack.c.b16 %v2580, %v2578
  %v2605 = vpack.c.b16 %v2581, %v2579
  %v2606 = vpack.c.b16 %v2584, %v2582
  %v2607 = vpack.c.b16 %v2585, %v2583
  %v2608 = vpack.c.b16 %v2588, %v2586
  %v2609 = vpack.c.b16 %v2589, %v2587
  %v2610 = vpack.c.b16 %v2592, %v2590
  %v2611 = vpack.c.b16 %v2593, %v2591
  %v2612 = vpack.c.b16 %v2596, %v2594
  %v2613 = vpack.c.b16 %v2597, %v2595
  %2630 = vmatprep.subr.bf16.mxu0 %v2599
  %2631 = vmatpush1.bf16.msra.mxu0 %v2598
  %2632 = vmatprep.subr.bf16.mxu0 %v2601
  %2633 = vmatpush1.bf16.msra.mxu0 %v2600
  %2634 = vmatprep.subr.bf16.mxu0 %v2603
  %2635 = vmatpush1.bf16.msra.mxu0 %v2602
  %2636 = vmatprep.subr.bf16.mxu0 %v2605
  %2637 = vmatpush1.bf16.msra.mxu0 %v2604
  %2638 = vmatprep.subr.bf16.mxu0 %v2607
  %2639 = vmatpush1.bf16.msra.mxu0 %v2606
  %2640 = vmatprep.subr.bf16.mxu0 %v2609
  %2641 = vmatpush1.bf16.msra.mxu0 %v2608
  %2642 = vmatprep.subr.bf16.mxu0 %v2611
  %2643 = vmatpush1.bf16.msra.mxu0 %v2610
  %2644 = vmatprep.subr.bf16.mxu0 %v2613
  %2645 = vmatpush1.bf16.msra.mxu0 %v2612
  %2646 = vmatprep.subr.bf16.mxu0 0
  %2647 = vmatpush1.bf16.msra.mxu0 0
  %2648 = vmatprep.subr.bf16.mxu0 0
  %2649 = vmatpush1.bf16.msra.mxu0 0
  %2650 = vmatprep.subr.bf16.mxu0 0
  %2651 = vmatpush1.bf16.msra.mxu0 0
  %2652 = vmatprep.subr.bf16.mxu0 0
  %2653 = vmatpush1.bf16.msra.mxu0 0
  %2654 = vmatprep.subr.bf16.mxu0 0
  %2655 = vmatpush1.bf16.msra.mxu0 0
  %2656 = vmatprep.subr.bf16.mxu0 0
  %2657 = vmatpush1.bf16.msra.mxu0 0
  %2658 = vmatprep.subr.bf16.mxu0 0
  %2659 = vmatpush1.bf16.msra.mxu0 0
  %2660 = vmatprep.subr.bf16.mxu0 0
  %2661 = vmatpush1.bf16.msra.mxu0 0
  %2662 = vmatprep.mubr.bf16.mxu0 0
  %2663 = vmatmul.mubr.bf16.gmra.mrb[0].mxu0 %v2532
  %v2664 = vpop.f32.mrb[0].mxu0
  %v2665 = vadd.f32 0.0, %v2664
  %v2666 = vpop.f32.mrb[0].mxu0
  %v2667 = vadd.f32 0.0, %v2666
  %v2668 = vpop.f32.mrb[0].mxu0
  %v2669 = vpop.f32.mrb[0].mxu0
  %2670 = vdwg.mxu0
  %v2671 = vadd.f32 %v2529, %v2665
  %v2672 = vadd.f32 %v2530, %v2667
  %v2673 = vld [vmem:[#allocation4 + $0x10] sm:$0x3]
  %v2674 = vpack.c.bf16 %v2673, %v2673
  %s2675 = scalar_lea.vmem %s7, 1024
  %v2676 = vld [vmem:[%s2675] sm:$0xff]
  %v2677 = vld [vmem:[%s2675 + $0x8] sm:$0xff]
  %v2678 = vld [vmem:[%s2675 + $0x10] sm:$0xff]
  %v2679 = vld [vmem:[%s2675 + $0x18] sm:$0xff]
  %v2680 = vld [vmem:[%s2675 + $0x20] sm:$0xff]
  %v2681 = vld [vmem:[%s2675 + $0x28] sm:$0xff]
  %v2682 = vld [vmem:[%s2675 + $0x30] sm:$0xff]
  %v2683 = vld [vmem:[%s2675 + $0x38] sm:$0xff]
  %v2684 = vld [vmem:[%s2675 + $0x40] sm:$0xff]
  %v2685 = vld [vmem:[%s2675 + $0x48] sm:$0xff]
  %v2686 = vld [vmem:[%s2675 + $0x50] sm:$0xff]
  %v2687 = vld [vmem:[%s2675 + $0x58] sm:$0xff]
  %v2688 = vld [vmem:[%s2675 + $0x60] sm:$0xff]
  %v2689 = vld [vmem:[%s2675 + $0x68] sm:$0xff]
  %v2690 = vld [vmem:[%s2675 + $0x70] sm:$0xff]
  %v2691 = vld [vmem:[%s2675 + $0x78] sm:$0xff]
  %v2708 = vunpack.c.l.b16 %v2676
  %v2709 = vunpack.c.h.b16 %v2676
  %v2710 = vunpack.c.l.b16 %v2677
  %v2711 = vunpack.c.h.b16 %v2677
  %v2712 = vunpack.c.l.b16 %v2678
  %v2713 = vunpack.c.h.b16 %v2678
  %v2714 = vunpack.c.l.b16 %v2679
  %v2715 = vunpack.c.h.b16 %v2679
  %v2716 = vunpack.c.l.b16 %v2680
  %v2717 = vunpack.c.h.b16 %v2680
  %v2718 = vunpack.c.l.b16 %v2681
  %v2719 = vunpack.c.h.b16 %v2681
  %v2720 = vunpack.c.l.b16 %v2682
  %v2721 = vunpack.c.h.b16 %v2682
  %v2722 = vunpack.c.l.b16 %v2683
  %v2723 = vunpack.c.h.b16 %v2683
  %v2724 = vunpack.c.l.b16 %v2684
  %v2725 = vunpack.c.h.b16 %v2684
  %v2726 = vunpack.c.l.b16 %v2685
  %v2727 = vunpack.c.h.b16 %v2685
  %v2728 = vunpack.c.l.b16 %v2686
  %v2729 = vunpack.c.h.b16 %v2686
  %v2730 = vunpack.c.l.b16 %v2687
  %v2731 = vunpack.c.h.b16 %v2687
  %v2732 = vunpack.c.l.b16 %v2688
  %v2733 = vunpack.c.h.b16 %v2688
  %v2734 = vunpack.c.l.b16 %v2689
  %v2735 = vunpack.c.h.b16 %v2689
  %v2736 = vunpack.c.l.b16 %v2690
  %v2737 = vunpack.c.h.b16 %v2690
  %v2738 = vunpack.c.l.b16 %v2691
  %v2739 = vunpack.c.h.b16 %v2691
  %v2740 = vpack.c.b16 %v2710, %v2708
  %v2741 = vpack.c.b16 %v2711, %v2709
  %v2742 = vpack.c.b16 %v2714, %v2712
  %v2743 = vpack.c.b16 %v2715, %v2713
  %v2744 = vpack.c.b16 %v2718, %v2716
  %v2745 = vpack.c.b16 %v2719, %v2717
  %v2746 = vpack.c.b16 %v2722, %v2720
  %v2747 = vpack.c.b16 %v2723, %v2721
  %v2748 = vpack.c.b16 %v2726, %v2724
  %v2749 = vpack.c.b16 %v2727, %v2725
  %v2750 = vpack.c.b16 %v2730, %v2728
  %v2751 = vpack.c.b16 %v2731, %v2729
  %v2752 = vpack.c.b16 %v2734, %v2732
  %v2753 = vpack.c.b16 %v2735, %v2733
  %v2754 = vpack.c.b16 %v2738, %v2736
  %v2755 = vpack.c.b16 %v2739, %v2737
  %2772 = vmatprep.subr.bf16.mxu0 %v2741
  %2773 = vmatpush1.bf16.msra.mxu0 %v2740
  %2774 = vmatprep.subr.bf16.mxu0 %v2743
  %2775 = vmatpush1.bf16.msra.mxu0 %v2742
  %2776 = vmatprep.subr.bf16.mxu0 %v2745
  %2777 = vmatpush1.bf16.msra.mxu0 %v2744
  %2778 = vmatprep.subr.bf16.mxu0 %v2747
  %2779 = vmatpush1.bf16.msra.mxu0 %v2746
  %2780 = vmatprep.subr.bf16.mxu0 %v2749
  %2781 = vmatpush1.bf16.msra.mxu0 %v2748
  %2782 = vmatprep.subr.bf16.mxu0 %v2751
  %2783 = vmatpush1.bf16.msra.mxu0 %v2750
  %2784 = vmatprep.subr.bf16.mxu0 %v2753
  %2785 = vmatpush1.bf16.msra.mxu0 %v2752
  %2786 = vmatprep.subr.bf16.mxu0 %v2755
  %2787 = vmatpush1.bf16.msra.mxu0 %v2754
  %2788 = vmatprep.subr.bf16.mxu0 0
  %2789 = vmatpush1.bf16.msra.mxu0 0
  %2790 = vmatprep.subr.bf16.mxu0 0
  %2791 = vmatpush1.bf16.msra.mxu0 0
  %2792 = vmatprep.subr.bf16.mxu0 0
  %2793 = vmatpush1.bf16.msra.mxu0 0
  %2794 = vmatprep.subr.bf16.mxu0 0
  %2795 = vmatpush1.bf16.msra.mxu0 0
  %2796 = vmatprep.subr.bf16.mxu0 0
  %2797 = vmatpush1.bf16.msra.mxu0 0
  %2798 = vmatprep.subr.bf16.mxu0 0
  %2799 = vmatpush1.bf16.msra.mxu0 0
  %2800 = vmatprep.subr.bf16.mxu0 0
  %2801 = vmatpush1.bf16.msra.mxu0 0
  %2802 = vmatprep.subr.bf16.mxu0 0
  %2803 = vmatpush1.bf16.msra.mxu0 0
  %2804 = vmatprep.mubr.bf16.mxu0 0
  %2805 = vmatmul.mubr.bf16.gmra.mrb[0].mxu0 %v2674
  %v2806 = vpop.f32.mrb[0].mxu0
  %v2807 = vadd.f32 0.0, %v2806
  %v2808 = vpop.f32.mrb[0].mxu0
  %v2809 = vadd.f32 0.0, %v2808
  %v2810 = vpop.f32.mrb[0].mxu0
  %v2811 = vpop.f32.mrb[0].mxu0
  %2812 = vdwg.mxu0
  %v2813 = vadd.f32 %v2671, %v2807
  %v2814 = vadd.f32 %v2672, %v2809
  %v2815 = vld [vmem:[#allocation4 + $0x12] sm:$0x3]
  %v2816 = vpack.c.bf16 %v2815, %v2815
  %s2817 = scalar_lea.vmem %s7, 1152
  %v2818 = vld [vmem:[%s2817] sm:$0xff]
  %v2819 = vld [vmem:[%s2817 + $0x8] sm:$0xff]
  %v2820 = vld [vmem:[%s2817 + $0x10] sm:$0xff]
  %v2821 = vld [vmem:[%s2817 + $0x18] sm:$0xff]
  %v2822 = vld [vmem:[%s2817 + $0x20] sm:$0xff]
  %v2823 = vld [vmem:[%s2817 + $0x28] sm:$0xff]
  %v2824 = vld [vmem:[%s2817 + $0x30] sm:$0xff]
  %v2825 = vld [vmem:[%s2817 + $0x38] sm:$0xff]
  %v2826 = vld [vmem:[%s2817 + $0x40] sm:$0xff]
  %v2827 = vld [vmem:[%s2817 + $0x48] sm:$0xff]
  %v2828 = vld [vmem:[%s2817 + $0x50] sm:$0xff]
  %v2829 = vld [vmem:[%s2817 + $0x58] sm:$0xff]
  %v2830 = vld [vmem:[%s2817 + $0x60] sm:$0xff]
  %v2831 = vld [vmem:[%s2817 + $0x68] sm:$0xff]
  %v2832 = vld [vmem:[%s2817 + $0x70] sm:$0xff]
  %v2833 = vld [vmem:[%s2817 + $0x78] sm:$0xff]
  %v2850 = vunpack.c.l.b16 %v2818
  %v2851 = vunpack.c.h.b16 %v2818
  %v2852 = vunpack.c.l.b16 %v2819
  %v2853 = vunpack.c.h.b16 %v2819
  %v2854 = vunpack.c.l.b16 %v2820
  %v2855 = vunpack.c.h.b16 %v2820
  %v2856 = vunpack.c.l.b16 %v2821
  %v2857 = vunpack.c.h.b16 %v2821
  %v2858 = vunpack.c.l.b16 %v2822
  %v2859 = vunpack.c.h.b16 %v2822
  %v2860 = vunpack.c.l.b16 %v2823
  %v2861 = vunpack.c.h.b16 %v2823
  %v2862 = vunpack.c.l.b16 %v2824
  %v2863 = vunpack.c.h.b16 %v2824
  %v2864 = vunpack.c.l.b16 %v2825
  %v2865 = vunpack.c.h.b16 %v2825
  %v2866 = vunpack.c.l.b16 %v2826
  %v2867 = vunpack.c.h.b16 %v2826
  %v2868 = vunpack.c.l.b16 %v2827
  %v2869 = vunpack.c.h.b16 %v2827
  %v2870 = vunpack.c.l.b16 %v2828
  %v2871 = vunpack.c.h.b16 %v2828
  %v2872 = vunpack.c.l.b16 %v2829
  %v2873 = vunpack.c.h.b16 %v2829
  %v2874 = vunpack.c.l.b16 %v2830
  %v2875 = vunpack.c.h.b16 %v2830
  %v2876 = vunpack.c.l.b16 %v2831
  %v2877 = vunpack.c.h.b16 %v2831
  %v2878 = vunpack.c.l.b16 %v2832
  %v2879 = vunpack.c.h.b16 %v2832
  %v2880 = vunpack.c.l.b16 %v2833
  %v2881 = vunpack.c.h.b16 %v2833
  %v2882 = vpack.c.b16 %v2852, %v2850
  %v2883 = vpack.c.b16 %v2853, %v2851
  %v2884 = vpack.c.b16 %v2856, %v2854
  %v2885 = vpack.c.b16 %v2857, %v2855
  %v2886 = vpack.c.b16 %v2860, %v2858
  %v2887 = vpack.c.b16 %v2861, %v2859
  %v2888 = vpack.c.b16 %v2864, %v2862
  %v2889 = vpack.c.b16 %v2865, %v2863
  %v2890 = vpack.c.b16 %v2868, %v2866
  %v2891 = vpack.c.b16 %v2869, %v2867
  %v2892 = vpack.c.b16 %v2872, %v2870
  %v2893 = vpack.c.b16 %v2873, %v2871
  %v2894 = vpack.c.b16 %v2876, %v2874
  %v2895 = vpack.c.b16 %v2877, %v2875
  %v2896 = vpack.c.b16 %v2880, %v2878
  %v2897 = vpack.c.b16 %v2881, %v2879
  %2914 = vmatprep.subr.bf16.mxu0 %v2883
  %2915 = vmatpush1.bf16.msra.mxu0 %v2882
  %2916 = vmatprep.subr.bf16.mxu0 %v2885
  %2917 = vmatpush1.bf16.msra.mxu0 %v2884
  %2918 = vmatprep.subr.bf16.mxu0 %v2887
  %2919 = vmatpush1.bf16.msra.mxu0 %v2886
  %2920 = vmatprep.subr.bf16.mxu0 %v2889
  %2921 = vmatpush1.bf16.msra.mxu0 %v2888
  %2922 = vmatprep.subr.bf16.mxu0 %v2891
  %2923 = vmatpush1.bf16.msra.mxu0 %v2890
  %2924 = vmatprep.subr.bf16.mxu0 %v2893
  %2925 = vmatpush1.bf16.msra.mxu0 %v2892
  %2926 = vmatprep.subr.bf16.mxu0 %v2895
  %2927 = vmatpush1.bf16.msra.mxu0 %v2894
  %2928 = vmatprep.subr.bf16.mxu0 %v2897
  %2929 = vmatpush1.bf16.msra.mxu0 %v2896
  %2930 = vmatprep.subr.bf16.mxu0 0
  %2931 = vmatpush1.bf16.msra.mxu0 0
  %2932 = vmatprep.subr.bf16.mxu0 0
  %2933 = vmatpush1.bf16.msra.mxu0 0
  %2934 = vmatprep.subr.bf16.mxu0 0
  %2935 = vmatpush1.bf16.msra.mxu0 0
  %2936 = vmatprep.subr.bf16.mxu0 0
  %2937 = vmatpush1.bf16.msra.mxu0 0
  %2938 = vmatprep.subr.bf16.mxu0 0
  %2939 = vmatpush1.bf16.msra.mxu0 0
  %2940 = vmatprep.subr.bf16.mxu0 0
  %2941 = vmatpush1.bf16.msra.mxu0 0
  %2942 = vmatprep.subr.bf16.mxu0 0
  %2943 = vmatpush1.bf16.msra.mxu0 0
  %2944 = vmatprep.subr.bf16.mxu0 0
  %2945 = vmatpush1.bf16.msra.mxu0 0
  %2946 = vmatprep.mubr.bf16.mxu0 0
  %2947 = vmatmul.mubr.bf16.gmra.mrb[0].mxu0 %v2816
  %v2948 = vpop.f32.mrb[0].mxu0
  %v2949 = vadd.f32 0.0, %v2948
  %v2950 = vpop.f32.mrb[0].mxu0
  %v2951 = vadd.f32 0.0, %v2950
  %v2952 = vpop.f32.mrb[0].mxu0
  %v2953 = vpop.f32.mrb[0].mxu0
  %2954 = vdwg.mxu0
  %v2955 = vadd.f32 %v2813, %v2949
  %v2956 = vadd.f32 %v2814, %v2951
  %v2957 = vld [vmem:[#allocation4 + $0x14] sm:$0x3]
  %v2958 = vpack.c.bf16 %v2957, %v2957
  %s2959 = scalar_lea.vmem %s7, 1280
  %v2960 = vld [vmem:[%s2959] sm:$0xff]
  %v2961 = vld [vmem:[%s2959 + $0x8] sm:$0xff]
  %v2962 = vld [vmem:[%s2959 + $0x10] sm:$0xff]
  %v2963 = vld [vmem:[%s2959 + $0x18] sm:$0xff]
  %v2964 = vld [vmem:[%s2959 + $0x20] sm:$0xff]
  %v2965 = vld [vmem:[%s2959 + $0x28] sm:$0xff]
  %v2966 = vld [vmem:[%s2959 + $0x30] sm:$0xff]
  %v2967 = vld [vmem:[%s2959 + $0x38] sm:$0xff]
  %v2968 = vld [vmem:[%s2959 + $0x40] sm:$0xff]
  %v2969 = vld [vmem:[%s2959 + $0x48] sm:$0xff]
  %v2970 = vld [vmem:[%s2959 + $0x50] sm:$0xff]
  %v2971 = vld [vmem:[%s2959 + $0x58] sm:$0xff]
  %v2972 = vld [vmem:[%s2959 + $0x60] sm:$0xff]
  %v2973 = vld [vmem:[%s2959 + $0x68] sm:$0xff]
  %v2974 = vld [vmem:[%s2959 + $0x70] sm:$0xff]
  %v2975 = vld [vmem:[%s2959 + $0x78] sm:$0xff]
  %v2992 = vunpack.c.l.b16 %v2960
  %v2993 = vunpack.c.h.b16 %v2960
  %v2994 = vunpack.c.l.b16 %v2961
  %v2995 = vunpack.c.h.b16 %v2961
  %v2996 = vunpack.c.l.b16 %v2962
  %v2997 = vunpack.c.h.b16 %v2962
  %v2998 = vunpack.c.l.b16 %v2963
  %v2999 = vunpack.c.h.b16 %v2963
  %v3000 = vunpack.c.l.b16 %v2964
  %v3001 = vunpack.c.h.b16 %v2964
  %v3002 = vunpack.c.l.b16 %v2965
  %v3003 = vunpack.c.h.b16 %v2965
  %v3004 = vunpack.c.l.b16 %v2966
  %v3005 = vunpack.c.h.b16 %v2966
  %v3006 = vunpack.c.l.b16 %v2967
  %v3007 = vunpack.c.h.b16 %v2967
  %v3008 = vunpack.c.l.b16 %v2968
  %v3009 = vunpack.c.h.b16 %v2968
  %v3010 = vunpack.c.l.b16 %v2969
  %v3011 = vunpack.c.h.b16 %v2969
  %v3012 = vunpack.c.l.b16 %v2970
  %v3013 = vunpack.c.h.b16 %v2970
  %v3014 = vunpack.c.l.b16 %v2971
  %v3015 = vunpack.c.h.b16 %v2971
  %v3016 = vunpack.c.l.b16 %v2972
  %v3017 = vunpack.c.h.b16 %v2972
  %v3018 = vunpack.c.l.b16 %v2973
  %v3019 = vunpack.c.h.b16 %v2973
  %v3020 = vunpack.c.l.b16 %v2974
  %v3021 = vunpack.c.h.b16 %v2974
  %v3022 = vunpack.c.l.b16 %v2975
  %v3023 = vunpack.c.h.b16 %v2975
  %v3024 = vpack.c.b16 %v2994, %v2992
  %v3025 = vpack.c.b16 %v2995, %v2993
  %v3026 = vpack.c.b16 %v2998, %v2996
  %v3027 = vpack.c.b16 %v2999, %v2997
  %v3028 = vpack.c.b16 %v3002, %v3000
  %v3029 = vpack.c.b16 %v3003, %v3001
  %v3030 = vpack.c.b16 %v3006, %v3004
  %v3031 = vpack.c.b16 %v3007, %v3005
  %v3032 = vpack.c.b16 %v3010, %v3008
  %v3033 = vpack.c.b16 %v3011, %v3009
  %v3034 = vpack.c.b16 %v3014, %v3012
  %v3035 = vpack.c.b16 %v3015, %v3013
  %v3036 = vpack.c.b16 %v3018, %v3016
  %v3037 = vpack.c.b16 %v3019, %v3017
  %v3038 = vpack.c.b16 %v3022, %v3020
  %v3039 = vpack.c.b16 %v3023, %v3021
  %3056 = vmatprep.subr.bf16.mxu0 %v3025
  %3057 = vmatpush1.bf16.msra.mxu0 %v3024
  %3058 = vmatprep.subr.bf16.mxu0 %v3027
  %3059 = vmatpush1.bf16.msra.mxu0 %v3026
  %3060 = vmatprep.subr.bf16.mxu0 %v3029
  %3061 = vmatpush1.bf16.msra.mxu0 %v3028
  %3062 = vmatprep.subr.bf16.mxu0 %v3031
  %3063 = vmatpush1.bf16.msra.mxu0 %v3030
  %3064 = vmatprep.subr.bf16.mxu0 %v3033
  %3065 = vmatpush1.bf16.msra.mxu0 %v3032
  %3066 = vmatprep.subr.bf16.mxu0 %v3035
  %3067 = vmatpush1.bf16.msra.mxu0 %v3034
  %3068 = vmatprep.subr.bf16.mxu0 %v3037
  %3069 = vmatpush1.bf16.msra.mxu0 %v3036
  %3070 = vmatprep.subr.bf16.mxu0 %v3039
  %3071 = vmatpush1.bf16.msra.mxu0 %v3038
  %3072 = vmatprep.subr.bf16.mxu0 0
  %3073 = vmatpush1.bf16.msra.mxu0 0
  %3074 = vmatprep.subr.bf16.mxu0 0
  %3075 = vmatpush1.bf16.msra.mxu0 0
  %3076 = vmatprep.subr.bf16.mxu0 0
  %3077 = vmatpush1.bf16.msra.mxu0 0
  %3078 = vmatprep.subr.bf16.mxu0 0
  %3079 = vmatpush1.bf16.msra.mxu0 0
  %3080 = vmatprep.subr.bf16.mxu0 0
  %3081 = vmatpush1.bf16.msra.mxu0 0
  %3082 = vmatprep.subr.bf16.mxu0 0
  %3083 = vmatpush1.bf16.msra.mxu0 0
  %3084 = vmatprep.subr.bf16.mxu0 0
  %3085 = vmatpush1.bf16.msra.mxu0 0
  %3086 = vmatprep.subr.bf16.mxu0 0
  %3087 = vmatpush1.bf16.msra.mxu0 0
  %3088 = vmatprep.mubr.bf16.mxu0 0
  %3089 = vmatmul.mubr.bf16.gmra.mrb[0].mxu0 %v2958
  %v3090 = vpop.f32.mrb[0].mxu0
  %v3091 = vadd.f32 0.0, %v3090
  %v3092 = vpop.f32.mrb[0].mxu0
  %v3093 = vadd.f32 0.0, %v3092
  %v3094 = vpop.f32.mrb[0].mxu0
  %v3095 = vpop.f32.mrb[0].mxu0
  %3096 = vdwg.mxu0
  %v3097 = vadd.f32 %v2955, %v3091
  %v3098 = vadd.f32 %v2956, %v3093
  %v3099 = vld [vmem:[#allocation4 + $0x16] sm:$0x3]
  %v3100 = vpack.c.bf16 %v3099, %v3099
  %s3101 = scalar_lea.vmem %s7, 1408
  %v3102 = vld [vmem:[%s3101] sm:$0xff]
  %v3103 = vld [vmem:[%s3101 + $0x8] sm:$0xff]
  %v3104 = vld [vmem:[%s3101 + $0x10] sm:$0xff]
  %v3105 = vld [vmem:[%s3101 + $0x18] sm:$0xff]
  %v3106 = vld [vmem:[%s3101 + $0x20] sm:$0xff]
  %v3107 = vld [vmem:[%s3101 + $0x28] sm:$0xff]
  %v3108 = vld [vmem:[%s3101 + $0x30] sm:$0xff]
  %v3109 = vld [vmem:[%s3101 + $0x38] sm:$0xff]
  %v3110 = vld [vmem:[%s3101 + $0x40] sm:$0xff]
  %v3111 = vld [vmem:[%s3101 + $0x48] sm:$0xff]
  %v3112 = vld [vmem:[%s3101 + $0x50] sm:$0xff]
  %v3113 = vld [vmem:[%s3101 + $0x58] sm:$0xff]
  %v3114 = vld [vmem:[%s3101 + $0x60] sm:$0xff]
  %v3115 = vld [vmem:[%s3101 + $0x68] sm:$0xff]
  %v3116 = vld [vmem:[%s3101 + $0x70] sm:$0xff]
  %v3117 = vld [vmem:[%s3101 + $0x78] sm:$0xff]
  %v3134 = vunpack.c.l.b16 %v3102
  %v3135 = vunpack.c.h.b16 %v3102
  %v3136 = vunpack.c.l.b16 %v3103
  %v3137 = vunpack.c.h.b16 %v3103
  %v3138 = vunpack.c.l.b16 %v3104
  %v3139 = vunpack.c.h.b16 %v3104
  %v3140 = vunpack.c.l.b16 %v3105
  %v3141 = vunpack.c.h.b16 %v3105
  %v3142 = vunpack.c.l.b16 %v3106
  %v3143 = vunpack.c.h.b16 %v3106
  %v3144 = vunpack.c.l.b16 %v3107
  %v3145 = vunpack.c.h.b16 %v3107
  %v3146 = vunpack.c.l.b16 %v3108
  %v3147 = vunpack.c.h.b16 %v3108
  %v3148 = vunpack.c.l.b16 %v3109
  %v3149 = vunpack.c.h.b16 %v3109
  %v3150 = vunpack.c.l.b16 %v3110
  %v3151 = vunpack.c.h.b16 %v3110
  %v3152 = vunpack.c.l.b16 %v3111
  %v3153 = vunpack.c.h.b16 %v3111
  %v3154 = vunpack.c.l.b16 %v3112
  %v3155 = vunpack.c.h.b16 %v3112
  %v3156 = vunpack.c.l.b16 %v3113
  %v3157 = vunpack.c.h.b16 %v3113
  %v3158 = vunpack.c.l.b16 %v3114
  %v3159 = vunpack.c.h.b16 %v3114
  %v3160 = vunpack.c.l.b16 %v3115
  %v3161 = vunpack.c.h.b16 %v3115
  %v3162 = vunpack.c.l.b16 %v3116
  %v3163 = vunpack.c.h.b16 %v3116
  %v3164 = vunpack.c.l.b16 %v3117
  %v3165 = vunpack.c.h.b16 %v3117
  %v3166 = vpack.c.b16 %v3136, %v3134
  %v3167 = vpack.c.b16 %v3137, %v3135
  %v3168 = vpack.c.b16 %v3140, %v3138
  %v3169 = vpack.c.b16 %v3141, %v3139
  %v3170 = vpack.c.b16 %v3144, %v3142
  %v3171 = vpack.c.b16 %v3145, %v3143
  %v3172 = vpack.c.b16 %v3148, %v3146
  %v3173 = vpack.c.b16 %v3149, %v3147
  %v3174 = vpack.c.b16 %v3152, %v3150
  %v3175 = vpack.c.b16 %v3153, %v3151
  %v3176 = vpack.c.b16 %v3156, %v3154
  %v3177 = vpack.c.b16 %v3157, %v3155
  %v3178 = vpack.c.b16 %v3160, %v3158
  %v3179 = vpack.c.b16 %v3161, %v3159
  %v3180 = vpack.c.b16 %v3164, %v3162
  %v3181 = vpack.c.b16 %v3165, %v3163
  %3198 = vmatprep.subr.bf16.mxu0 %v3167
  %3199 = vmatpush1.bf16.msra.mxu0 %v3166
  %3200 = vmatprep.subr.bf16.mxu0 %v3169
  %3201 = vmatpush1.bf16.msra.mxu0 %v3168
  %3202 = vmatprep.subr.bf16.mxu0 %v3171
  %3203 = vmatpush1.bf16.msra.mxu0 %v3170
  %3204 = vmatprep.subr.bf16.mxu0 %v3173
  %3205 = vmatpush1.bf16.msra.mxu0 %v3172
  %3206 = vmatprep.subr.bf16.mxu0 %v3175
  %3207 = vmatpush1.bf16.msra.mxu0 %v3174
  %3208 = vmatprep.subr.bf16.mxu0 %v3177
  %3209 = vmatpush1.bf16.msra.mxu0 %v3176
  %3210 = vmatprep.subr.bf16.mxu0 %v3179
  %3211 = vmatpush1.bf16.msra.mxu0 %v3178
  %3212 = vmatprep.subr.bf16.mxu0 %v3181
  %3213 = vmatpush1.bf16.msra.mxu0 %v3180
  %3214 = vmatprep.subr.bf16.mxu0 0
  %3215 = vmatpush1.bf16.msra.mxu0 0
  %3216 = vmatprep.subr.bf16.mxu0 0
  %3217 = vmatpush1.bf16.msra.mxu0 0
  %3218 = vmatprep.subr.bf16.mxu0 0
  %3219 = vmatpush1.bf16.msra.mxu0 0
  %3220 = vmatprep.subr.bf16.mxu0 0
  %3221 = vmatpush1.bf16.msra.mxu0 0
  %3222 = vmatprep.subr.bf16.mxu0 0
  %3223 = vmatpush1.bf16.msra.mxu0 0
  %3224 = vmatprep.subr.bf16.mxu0 0
  %3225 = vmatpush1.bf16.msra.mxu0 0
  %3226 = vmatprep.subr.bf16.mxu0 0
  %3227 = vmatpush1.bf16.msra.mxu0 0
  %3228 = vmatprep.subr.bf16.mxu0 0
  %3229 = vmatpush1.bf16.msra.mxu0 0
  %3230 = vmatprep.mubr.bf16.mxu0 0
  %3231 = vmatmul.mubr.bf16.gmra.mrb[0].mxu0 %v3100
  %v3232 = vpop.f32.mrb[0].mxu0
  %v3233 = vadd.f32 0.0, %v3232
  %v3234 = vpop.f32.mrb[0].mxu0
  %v3235 = vadd.f32 0.0, %v3234
  %v3236 = vpop.f32.mrb[0].mxu0
  %v3237 = vpop.f32.mrb[0].mxu0
  %3238 = vdwg.mxu0
  %v3239 = vadd.f32 %v3097, %v3233
  %v3240 = vadd.f32 %v3098, %v3235
  %v3241 = vld [vmem:[#allocation4 + $0x18] sm:$0x3]
  %v3242 = vpack.c.bf16 %v3241, %v3241
  %s3243 = scalar_lea.vmem %s7, 1536
  %v3244 = vld [vmem:[%s3243] sm:$0xff]
  %v3245 = vld [vmem:[%s3243 + $0x8] sm:$0xff]
  %v3246 = vld [vmem:[%s3243 + $0x10] sm:$0xff]
  %v3247 = vld [vmem:[%s3243 + $0x18] sm:$0xff]
  %v3248 = vld [vmem:[%s3243 + $0x20] sm:$0xff]
  %v3249 = vld [vmem:[%s3243 + $0x28] sm:$0xff]
  %v3250 = vld [vmem:[%s3243 + $0x30] sm:$0xff]
  %v3251 = vld [vmem:[%s3243 + $0x38] sm:$0xff]
  %v3252 = vld [vmem:[%s3243 + $0x40] sm:$0xff]
  %v3253 = vld [vmem:[%s3243 + $0x48] sm:$0xff]
  %v3254 = vld [vmem:[%s3243 + $0x50] sm:$0xff]
  %v3255 = vld [vmem:[%s3243 + $0x58] sm:$0xff]
  %v3256 = vld [vmem:[%s3243 + $0x60] sm:$0xff]
  %v3257 = vld [vmem:[%s3243 + $0x68] sm:$0xff]
  %v3258 = vld [vmem:[%s3243 + $0x70] sm:$0xff]
  %v3259 = vld [vmem:[%s3243 + $0x78] sm:$0xff]
  %v3276 = vunpack.c.l.b16 %v3244
  %v3277 = vunpack.c.h.b16 %v3244
  %v3278 = vunpack.c.l.b16 %v3245
  %v3279 = vunpack.c.h.b16 %v3245
  %v3280 = vunpack.c.l.b16 %v3246
  %v3281 = vunpack.c.h.b16 %v3246
  %v3282 = vunpack.c.l.b16 %v3247
  %v3283 = vunpack.c.h.b16 %v3247
  %v3284 = vunpack.c.l.b16 %v3248
  %v3285 = vunpack.c.h.b16 %v3248
  %v3286 = vunpack.c.l.b16 %v3249
  %v3287 = vunpack.c.h.b16 %v3249
  %v3288 = vunpack.c.l.b16 %v3250
  %v3289 = vunpack.c.h.b16 %v3250
  %v3290 = vunpack.c.l.b16 %v3251
  %v3291 = vunpack.c.h.b16 %v3251
  %v3292 = vunpack.c.l.b16 %v3252
  %v3293 = vunpack.c.h.b16 %v3252
  %v3294 = vunpack.c.l.b16 %v3253
  %v3295 = vunpack.c.h.b16 %v3253
  %v3296 = vunpack.c.l.b16 %v3254
  %v3297 = vunpack.c.h.b16 %v3254
  %v3298 = vunpack.c.l.b16 %v3255
  %v3299 = vunpack.c.h.b16 %v3255
  %v3300 = vunpack.c.l.b16 %v3256
  %v3301 = vunpack.c.h.b16 %v3256
  %v3302 = vunpack.c.l.b16 %v3257
  %v3303 = vunpack.c.h.b16 %v3257
  %v3304 = vunpack.c.l.b16 %v3258
  %v3305 = vunpack.c.h.b16 %v3258
  %v3306 = vunpack.c.l.b16 %v3259
  %v3307 = vunpack.c.h.b16 %v3259
  %v3308 = vpack.c.b16 %v3278, %v3276
  %v3309 = vpack.c.b16 %v3279, %v3277
  %v3310 = vpack.c.b16 %v3282, %v3280
  %v3311 = vpack.c.b16 %v3283, %v3281
  %v3312 = vpack.c.b16 %v3286, %v3284
  %v3313 = vpack.c.b16 %v3287, %v3285
  %v3314 = vpack.c.b16 %v3290, %v3288
  %v3315 = vpack.c.b16 %v3291, %v3289
  %v3316 = vpack.c.b16 %v3294, %v3292
  %v3317 = vpack.c.b16 %v3295, %v3293
  %v3318 = vpack.c.b16 %v3298, %v3296
  %v3319 = vpack.c.b16 %v3299, %v3297
  %v3320 = vpack.c.b16 %v3302, %v3300
  %v3321 = vpack.c.b16 %v3303, %v3301
  %v3322 = vpack.c.b16 %v3306, %v3304
  %v3323 = vpack.c.b16 %v3307, %v3305
  %3340 = vmatprep.subr.bf16.mxu0 %v3309
  %3341 = vmatpush1.bf16.msra.mxu0 %v3308
  %3342 = vmatprep.subr.bf16.mxu0 %v3311
  %3343 = vmatpush1.bf16.msra.mxu0 %v3310
  %3344 = vmatprep.subr.bf16.mxu0 %v3313
  %3345 = vmatpush1.bf16.msra.mxu0 %v3312
  %3346 = vmatprep.subr.bf16.mxu0 %v3315
  %3347 = vmatpush1.bf16.msra.mxu0 %v3314
  %3348 = vmatprep.subr.bf16.mxu0 %v3317
  %3349 = vmatpush1.bf16.msra.mxu0 %v3316
  %3350 = vmatprep.subr.bf16.mxu0 %v3319
  %3351 = vmatpush1.bf16.msra.mxu0 %v3318
  %3352 = vmatprep.subr.bf16.mxu0 %v3321
  %3353 = vmatpush1.bf16.msra.mxu0 %v3320
  %3354 = vmatprep.subr.bf16.mxu0 %v3323
  %3355 = vmatpush1.bf16.msra.mxu0 %v3322
  %3356 = vmatprep.subr.bf16.mxu0 0
  %3357 = vmatpush1.bf16.msra.mxu0 0
  %3358 = vmatprep.subr.bf16.mxu0 0
  %3359 = vmatpush1.bf16.msra.mxu0 0
  %3360 = vmatprep.subr.bf16.mxu0 0
  %3361 = vmatpush1.bf16.msra.mxu0 0
  %3362 = vmatprep.subr.bf16.mxu0 0
  %3363 = vmatpush1.bf16.msra.mxu0 0
  %3364 = vmatprep.subr.bf16.mxu0 0
  %3365 = vmatpush1.bf16.msra.mxu0 0
  %3366 = vmatprep.subr.bf16.mxu0 0
  %3367 = vmatpush1.bf16.msra.mxu0 0
  %3368 = vmatprep.subr.bf16.mxu0 0
  %3369 = vmatpush1.bf16.msra.mxu0 0
  %3370 = vmatprep.subr.bf16.mxu0 0
  %3371 = vmatpush1.bf16.msra.mxu0 0
  %3372 = vmatprep.mubr.bf16.mxu0 0
  %3373 = vmatmul.mubr.bf16.gmra.mrb[0].mxu0 %v3242
  %v3374 = vpop.f32.mrb[0].mxu0
  %v3375 = vadd.f32 0.0, %v3374
  %v3376 = vpop.f32.mrb[0].mxu0
  %v3377 = vadd.f32 0.0, %v3376
  %v3378 = vpop.f32.mrb[0].mxu0
  %v3379 = vpop.f32.mrb[0].mxu0
  %3380 = vdwg.mxu0
  %v3381 = vadd.f32 %v3239, %v3375
  %v3382 = vadd.f32 %v3240, %v3377
  %v3383 = vld [vmem:[#allocation4 + $0x1a] sm:$0x3]
  %v3384 = vpack.c.bf16 %v3383, %v3383
  %s3385 = scalar_lea.vmem %s7, 1664
  %v3386 = vld [vmem:[%s3385] sm:$0xff]
  %v3387 = vld [vmem:[%s3385 + $0x8] sm:$0xff]
  %v3388 = vld [vmem:[%s3385 + $0x10] sm:$0xff]
  %v3389 = vld [vmem:[%s3385 + $0x18] sm:$0xff]
  %v3390 = vld [vmem:[%s3385 + $0x20] sm:$0xff]
  %v3391 = vld [vmem:[%s3385 + $0x28] sm:$0xff]
  %v3392 = vld [vmem:[%s3385 + $0x30] sm:$0xff]
  %v3393 = vld [vmem:[%s3385 + $0x38] sm:$0xff]
  %v3394 = vld [vmem:[%s3385 + $0x40] sm:$0xff]
  %v3395 = vld [vmem:[%s3385 + $0x48] sm:$0xff]
  %v3396 = vld [vmem:[%s3385 + $0x50] sm:$0xff]
  %v3397 = vld [vmem:[%s3385 + $0x58] sm:$0xff]
  %v3398 = vld [vmem:[%s3385 + $0x60] sm:$0xff]
  %v3399 = vld [vmem:[%s3385 + $0x68] sm:$0xff]
  %v3400 = vld [vmem:[%s3385 + $0x70] sm:$0xff]
  %v3401 = vld [vmem:[%s3385 + $0x78] sm:$0xff]
  %v3418 = vunpack.c.l.b16 %v3386
  %v3419 = vunpack.c.h.b16 %v3386
  %v3420 = vunpack.c.l.b16 %v3387
  %v3421 = vunpack.c.h.b16 %v3387
  %v3422 = vunpack.c.l.b16 %v3388
  %v3423 = vunpack.c.h.b16 %v3388
  %v3424 = vunpack.c.l.b16 %v3389
  %v3425 = vunpack.c.h.b16 %v3389
  %v3426 = vunpack.c.l.b16 %v3390
  %v3427 = vunpack.c.h.b16 %v3390
  %v3428 = vunpack.c.l.b16 %v3391
  %v3429 = vunpack.c.h.b16 %v3391
  %v3430 = vunpack.c.l.b16 %v3392
  %v3431 = vunpack.c.h.b16 %v3392
  %v3432 = vunpack.c.l.b16 %v3393
  %v3433 = vunpack.c.h.b16 %v3393
  %v3434 = vunpack.c.l.b16 %v3394
  %v3435 = vunpack.c.h.b16 %v3394
  %v3436 = vunpack.c.l.b16 %v3395
  %v3437 = vunpack.c.h.b16 %v3395
  %v3438 = vunpack.c.l.b16 %v3396
  %v3439 = vunpack.c.h.b16 %v3396
  %v3440 = vunpack.c.l.b16 %v3397
  %v3441 = vunpack.c.h.b16 %v3397
  %v3442 = vunpack.c.l.b16 %v3398
  %v3443 = vunpack.c.h.b16 %v3398
  %v3444 = vunpack.c.l.b16 %v3399
  %v3445 = vunpack.c.h.b16 %v3399
  %v3446 = vunpack.c.l.b16 %v3400
  %v3447 = vunpack.c.h.b16 %v3400
  %v3448 = vunpack.c.l.b16 %v3401
  %v3449 = vunpack.c.h.b16 %v3401
  %v3450 = vpack.c.b16 %v3420, %v3418
  %v3451 = vpack.c.b16 %v3421, %v3419
  %v3452 = vpack.c.b16 %v3424, %v3422
  %v3453 = vpack.c.b16 %v3425, %v3423
  %v3454 = vpack.c.b16 %v3428, %v3426
  %v3455 = vpack.c.b16 %v3429, %v3427
  %v3456 = vpack.c.b16 %v3432, %v3430
  %v3457 = vpack.c.b16 %v3433, %v3431
  %v3458 = vpack.c.b16 %v3436, %v3434
  %v3459 = vpack.c.b16 %v3437, %v3435
  %v3460 = vpack.c.b16 %v3440, %v3438
  %v3461 = vpack.c.b16 %v3441, %v3439
  %v3462 = vpack.c.b16 %v3444, %v3442
  %v3463 = vpack.c.b16 %v3445, %v3443
  %v3464 = vpack.c.b16 %v3448, %v3446
  %v3465 = vpack.c.b16 %v3449, %v3447
  %3482 = vmatprep.subr.bf16.mxu0 %v3451
  %3483 = vmatpush1.bf16.msra.mxu0 %v3450
  %3484 = vmatprep.subr.bf16.mxu0 %v3453
  %3485 = vmatpush1.bf16.msra.mxu0 %v3452
  %3486 = vmatprep.subr.bf16.mxu0 %v3455
  %3487 = vmatpush1.bf16.msra.mxu0 %v3454
  %3488 = vmatprep.subr.bf16.mxu0 %v3457
  %3489 = vmatpush1.bf16.msra.mxu0 %v3456
  %3490 = vmatprep.subr.bf16.mxu0 %v3459
  %3491 = vmatpush1.bf16.msra.mxu0 %v3458
  %3492 = vmatprep.subr.bf16.mxu0 %v3461
  %3493 = vmatpush1.bf16.msra.mxu0 %v3460
  %3494 = vmatprep.subr.bf16.mxu0 %v3463
  %3495 = vmatpush1.bf16.msra.mxu0 %v3462
  %3496 = vmatprep.subr.bf16.mxu0 %v3465
  %3497 = vmatpush1.bf16.msra.mxu0 %v3464
  %3498 = vmatprep.subr.bf16.mxu0 0
  %3499 = vmatpush1.bf16.msra.mxu0 0
  %3500 = vmatprep.subr.bf16.mxu0 0
  %3501 = vmatpush1.bf16.msra.mxu0 0
  %3502 = vmatprep.subr.bf16.mxu0 0
  %3503 = vmatpush1.bf16.msra.mxu0 0
  %3504 = vmatprep.subr.bf16.mxu0 0
  %3505 = vmatpush1.bf16.msra.mxu0 0
  %3506 = vmatprep.subr.bf16.mxu0 0
  %3507 = vmatpush1.bf16.msra.mxu0 0
  %3508 = vmatprep.subr.bf16.mxu0 0
  %3509 = vmatpush1.bf16.msra.mxu0 0
  %3510 = vmatprep.subr.bf16.mxu0 0
  %3511 = vmatpush1.bf16.msra.mxu0 0
  %3512 = vmatprep.subr.bf16.mxu0 0
  %3513 = vmatpush1.bf16.msra.mxu0 0
  %3514 = vmatprep.mubr.bf16.mxu0 0
  %3515 = vmatmul.mubr.bf16.gmra.mrb[0].mxu0 %v3384
  %v3516 = vpop.f32.mrb[0].mxu0
  %v3517 = vadd.f32 0.0, %v3516
  %v3518 = vpop.f32.mrb[0].mxu0
  %v3519 = vadd.f32 0.0, %v3518
  %v3520 = vpop.f32.mrb[0].mxu0
  %v3521 = vpop.f32.mrb[0].mxu0
  %3522 = vdwg.mxu0
  %v3523 = vadd.f32 %v3381, %v3517
  %v3524 = vadd.f32 %v3382, %v3519
  %v3525 = vld [vmem:[#allocation4 + $0x1c] sm:$0x3]
  %v3526 = vpack.c.bf16 %v3525, %v3525
  %s3527 = scalar_lea.vmem %s7, 1792
  %v3528 = vld [vmem:[%s3527] sm:$0xff]
  %v3529 = vld [vmem:[%s3527 + $0x8] sm:$0xff]
  %v3530 = vld [vmem:[%s3527 + $0x10] sm:$0xff]
  %v3531 = vld [vmem:[%s3527 + $0x18] sm:$0xff]
  %v3532 = vld [vmem:[%s3527 + $0x20] sm:$0xff]
  %v3533 = vld [vmem:[%s3527 + $0x28] sm:$0xff]
  %v3534 = vld [vmem:[%s3527 + $0x30] sm:$0xff]
  %v3535 = vld [vmem:[%s3527 + $0x38] sm:$0xff]
  %v3536 = vld [vmem:[%s3527 + $0x40] sm:$0xff]
  %v3537 = vld [vmem:[%s3527 + $0x48] sm:$0xff]
  %v3538 = vld [vmem:[%s3527 + $0x50] sm:$0xff]
  %v3539 = vld [vmem:[%s3527 + $0x58] sm:$0xff]
  %v3540 = vld [vmem:[%s3527 + $0x60] sm:$0xff]
  %v3541 = vld [vmem:[%s3527 + $0x68] sm:$0xff]
  %v3542 = vld [vmem:[%s3527 + $0x70] sm:$0xff]
  %v3543 = vld [vmem:[%s3527 + $0x78] sm:$0xff]
  %v3560 = vunpack.c.l.b16 %v3528
  %v3561 = vunpack.c.h.b16 %v3528
  %v3562 = vunpack.c.l.b16 %v3529
  %v3563 = vunpack.c.h.b16 %v3529
  %v3564 = vunpack.c.l.b16 %v3530
  %v3565 = vunpack.c.h.b16 %v3530
  %v3566 = vunpack.c.l.b16 %v3531
  %v3567 = vunpack.c.h.b16 %v3531
  %v3568 = vunpack.c.l.b16 %v3532
  %v3569 = vunpack.c.h.b16 %v3532
  %v3570 = vunpack.c.l.b16 %v3533
  %v3571 = vunpack.c.h.b16 %v3533
  %v3572 = vunpack.c.l.b16 %v3534
  %v3573 = vunpack.c.h.b16 %v3534
  %v3574 = vunpack.c.l.b16 %v3535
  %v3575 = vunpack.c.h.b16 %v3535
  %v3576 = vunpack.c.l.b16 %v3536
  %v3577 = vunpack.c.h.b16 %v3536
  %v3578 = vunpack.c.l.b16 %v3537
  %v3579 = vunpack.c.h.b16 %v3537
  %v3580 = vunpack.c.l.b16 %v3538
  %v3581 = vunpack.c.h.b16 %v3538
  %v3582 = vunpack.c.l.b16 %v3539
  %v3583 = vunpack.c.h.b16 %v3539
  %v3584 = vunpack.c.l.b16 %v3540
  %v3585 = vunpack.c.h.b16 %v3540
  %v3586 = vunpack.c.l.b16 %v3541
  %v3587 = vunpack.c.h.b16 %v3541
  %v3588 = vunpack.c.l.b16 %v3542
  %v3589 = vunpack.c.h.b16 %v3542
  %v3590 = vunpack.c.l.b16 %v3543
  %v3591 = vunpack.c.h.b16 %v3543
  %v3592 = vpack.c.b16 %v3562, %v3560
  %v3593 = vpack.c.b16 %v3563, %v3561
  %v3594 = vpack.c.b16 %v3566, %v3564
  %v3595 = vpack.c.b16 %v3567, %v3565
  %v3596 = vpack.c.b16 %v3570, %v3568
  %v3597 = vpack.c.b16 %v3571, %v3569
  %v3598 = vpack.c.b16 %v3574, %v3572
  %v3599 = vpack.c.b16 %v3575, %v3573
  %v3600 = vpack.c.b16 %v3578, %v3576
  %v3601 = vpack.c.b16 %v3579, %v3577
  %v3602 = vpack.c.b16 %v3582, %v3580
  %v3603 = vpack.c.b16 %v3583, %v3581
  %v3604 = vpack.c.b16 %v3586, %v3584
  %v3605 = vpack.c.b16 %v3587, %v3585
  %v3606 = vpack.c.b16 %v3590, %v3588
  %v3607 = vpack.c.b16 %v3591, %v3589
  %3624 = vmatprep.subr.bf16.mxu0 %v3593
  %3625 = vmatpush1.bf16.msra.mxu0 %v3592
  %3626 = vmatprep.subr.bf16.mxu0 %v3595
  %3627 = vmatpush1.bf16.msra.mxu0 %v3594
  %3628 = vmatprep.subr.bf16.mxu0 %v3597
  %3629 = vmatpush1.bf16.msra.mxu0 %v3596
  %3630 = vmatprep.subr.bf16.mxu0 %v3599
  %3631 = vmatpush1.bf16.msra.mxu0 %v3598
  %3632 = vmatprep.subr.bf16.mxu0 %v3601
  %3633 = vmatpush1.bf16.msra.mxu0 %v3600
  %3634 = vmatprep.subr.bf16.mxu0 %v3603
  %3635 = vmatpush1.bf16.msra.mxu0 %v3602
  %3636 = vmatprep.subr.bf16.mxu0 %v3605
  %3637 = vmatpush1.bf16.msra.mxu0 %v3604
  %3638 = vmatprep.subr.bf16.mxu0 %v3607
  %3639 = vmatpush1.bf16.msra.mxu0 %v3606
  %3640 = vmatprep.subr.bf16.mxu0 0
  %3641 = vmatpush1.bf16.msra.mxu0 0
  %3642 = vmatprep.subr.bf16.mxu0 0
  %3643 = vmatpush1.bf16.msra.mxu0 0
  %3644 = vmatprep.subr.bf16.mxu0 0
  %3645 = vmatpush1.bf16.msra.mxu0 0
  %3646 = vmatprep.subr.bf16.mxu0 0
  %3647 = vmatpush1.bf16.msra.mxu0 0
  %3648 = vmatprep.subr.bf16.mxu0 0
  %3649 = vmatpush1.bf16.msra.mxu0 0
  %3650 = vmatprep.subr.bf16.mxu0 0
  %3651 = vmatpush1.bf16.msra.mxu0 0
  %3652 = vmatprep.subr.bf16.mxu0 0
  %3653 = vmatpush1.bf16.msra.mxu0 0
  %3654 = vmatprep.subr.bf16.mxu0 0
  %3655 = vmatpush1.bf16.msra.mxu0 0
  %3656 = vmatprep.mubr.bf16.mxu0 0
  %3657 = vmatmul.mubr.bf16.gmra.mrb[0].mxu0 %v3526
  %v3658 = vpop.f32.mrb[0].mxu0
  %v3659 = vadd.f32 0.0, %v3658
  %v3660 = vpop.f32.mrb[0].mxu0
  %v3661 = vadd.f32 0.0, %v3660
  %v3662 = vpop.f32.mrb[0].mxu0
  %v3663 = vpop.f32.mrb[0].mxu0
  %3664 = vdwg.mxu0
  %v3665 = vadd.f32 %v3523, %v3659
  %v3666 = vadd.f32 %v3524, %v3661
  %v3667 = vld [vmem:[#allocation4 + $0x1e] sm:$0x3]
  %v3668 = vpack.c.bf16 %v3667, %v3667
  %s3669 = scalar_lea.vmem %s7, 1920
  %v3670 = vld [vmem:[%s3669] sm:$0xff]
  %v3671 = vld [vmem:[%s3669 + $0x8] sm:$0xff]
  %v3672 = vld [vmem:[%s3669 + $0x10] sm:$0xff]
  %v3673 = vld [vmem:[%s3669 + $0x18] sm:$0xff]
  %v3674 = vld [vmem:[%s3669 + $0x20] sm:$0xff]
  %v3675 = vld [vmem:[%s3669 + $0x28] sm:$0xff]
  %v3676 = vld [vmem:[%s3669 + $0x30] sm:$0xff]
  %v3677 = vld [vmem:[%s3669 + $0x38] sm:$0xff]
  %v3678 = vld [vmem:[%s3669 + $0x40] sm:$0xff]
  %v3679 = vld [vmem:[%s3669 + $0x48] sm:$0xff]
  %v3680 = vld [vmem:[%s3669 + $0x50] sm:$0xff]
  %v3681 = vld [vmem:[%s3669 + $0x58] sm:$0xff]
  %v3682 = vld [vmem:[%s3669 + $0x60] sm:$0xff]
  %v3683 = vld [vmem:[%s3669 + $0x68] sm:$0xff]
  %v3684 = vld [vmem:[%s3669 + $0x70] sm:$0xff]
  %v3685 = vld [vmem:[%s3669 + $0x78] sm:$0xff]
  %v3702 = vunpack.c.l.b16 %v3670
  %v3703 = vunpack.c.h.b16 %v3670
  %v3704 = vunpack.c.l.b16 %v3671
  %v3705 = vunpack.c.h.b16 %v3671
  %v3706 = vunpack.c.l.b16 %v3672
  %v3707 = vunpack.c.h.b16 %v3672
  %v3708 = vunpack.c.l.b16 %v3673
  %v3709 = vunpack.c.h.b16 %v3673
  %v3710 = vunpack.c.l.b16 %v3674
  %v3711 = vunpack.c.h.b16 %v3674
  %v3712 = vunpack.c.l.b16 %v3675
  %v3713 = vunpack.c.h.b16 %v3675
  %v3714 = vunpack.c.l.b16 %v3676
  %v3715 = vunpack.c.h.b16 %v3676
  %v3716 = vunpack.c.l.b16 %v3677
  %v3717 = vunpack.c.h.b16 %v3677
  %v3718 = vunpack.c.l.b16 %v3678
  %v3719 = vunpack.c.h.b16 %v3678
  %v3720 = vunpack.c.l.b16 %v3679
  %v3721 = vunpack.c.h.b16 %v3679
  %v3722 = vunpack.c.l.b16 %v3680
  %v3723 = vunpack.c.h.b16 %v3680
  %v3724 = vunpack.c.l.b16 %v3681
  %v3725 = vunpack.c.h.b16 %v3681
  %v3726 = vunpack.c.l.b16 %v3682
  %v3727 = vunpack.c.h.b16 %v3682
  %v3728 = vunpack.c.l.b16 %v3683
  %v3729 = vunpack.c.h.b16 %v3683
  %v3730 = vunpack.c.l.b16 %v3684
  %v3731 = vunpack.c.h.b16 %v3684
  %v3732 = vunpack.c.l.b16 %v3685
  %v3733 = vunpack.c.h.b16 %v3685
  %v3734 = vpack.c.b16 %v3704, %v3702
  %v3735 = vpack.c.b16 %v3705, %v3703
  %v3736 = vpack.c.b16 %v3708, %v3706
  %v3737 = vpack.c.b16 %v3709, %v3707
  %v3738 = vpack.c.b16 %v3712, %v3710
  %v3739 = vpack.c.b16 %v3713, %v3711
  %v3740 = vpack.c.b16 %v3716, %v3714
  %v3741 = vpack.c.b16 %v3717, %v3715
  %v3742 = vpack.c.b16 %v3720, %v3718
  %v3743 = vpack.c.b16 %v3721, %v3719
  %v3744 = vpack.c.b16 %v3724, %v3722
  %v3745 = vpack.c.b16 %v3725, %v3723
  %v3746 = vpack.c.b16 %v3728, %v3726
  %v3747 = vpack.c.b16 %v3729, %v3727
  %v3748 = vpack.c.b16 %v3732, %v3730
  %v3749 = vpack.c.b16 %v3733, %v3731
  %3766 = vmatprep.subr.bf16.mxu0 %v3735
  %3767 = vmatpush1.bf16.msra.mxu0 %v3734
  %3768 = vmatprep.subr.bf16.mxu0 %v3737
  %3769 = vmatpush1.bf16.msra.mxu0 %v3736
  %3770 = vmatprep.subr.bf16.mxu0 %v3739
  %3771 = vmatpush1.bf16.msra.mxu0 %v3738
  %3772 = vmatprep.subr.bf16.mxu0 %v3741
  %3773 = vmatpush1.bf16.msra.mxu0 %v3740
  %3774 = vmatprep.subr.bf16.mxu0 %v3743
  %3775 = vmatpush1.bf16.msra.mxu0 %v3742
  %3776 = vmatprep.subr.bf16.mxu0 %v3745
  %3777 = vmatpush1.bf16.msra.mxu0 %v3744
  %3778 = vmatprep.subr.bf16.mxu0 %v3747
  %3779 = vmatpush1.bf16.msra.mxu0 %v3746
  %3780 = vmatprep.subr.bf16.mxu0 %v3749
  %3781 = vmatpush1.bf16.msra.mxu0 %v3748
  %3782 = vmatprep.subr.bf16.mxu0 0
  %3783 = vmatpush1.bf16.msra.mxu0 0
  %3784 = vmatprep.subr.bf16.mxu0 0
  %3785 = vmatpush1.bf16.msra.mxu0 0
  %3786 = vmatprep.subr.bf16.mxu0 0
  %3787 = vmatpush1.bf16.msra.mxu0 0
  %3788 = vmatprep.subr.bf16.mxu0 0
  %3789 = vmatpush1.bf16.msra.mxu0 0
  %3790 = vmatprep.subr.bf16.mxu0 0
  %3791 = vmatpush1.bf16.msra.mxu0 0
  %3792 = vmatprep.subr.bf16.mxu0 0
  %3793 = vmatpush1.bf16.msra.mxu0 0
  %3794 = vmatprep.subr.bf16.mxu0 0
  %3795 = vmatpush1.bf16.msra.mxu0 0
  %3796 = vmatprep.subr.bf16.mxu0 0
  %3797 = vmatpush1.bf16.msra.mxu0 0
  %3798 = vmatprep.mubr.bf16.mxu0 0
  %3799 = vmatmul.mubr.bf16.gmra.mrb[0].mxu0 %v3668
  %v3800 = vpop.f32.mrb[0].mxu0
  %v3801 = vadd.f32 0.0, %v3800
  %v3802 = vpop.f32.mrb[0].mxu0
  %v3803 = vadd.f32 0.0, %v3802
  %v3804 = vpop.f32.mrb[0].mxu0
  %v3805 = vpop.f32.mrb[0].mxu0
  %3806 = vdwg.mxu0
  %v3807 = vadd.f32 %v3665, %v3801
  %v3808 = vadd.f32 %v3666, %v3803
  %v3809 = vld [vmem:[#allocation4 + $0x20] sm:$0x3]
  %v3810 = vpack.c.bf16 %v3809, %v3809
  %s3811 = scalar_lea.vmem %s7, 2048
  %v3812 = vld [vmem:[%s3811] sm:$0xff]
  %v3813 = vld [vmem:[%s3811 + $0x8] sm:$0xff]
  %v3814 = vld [vmem:[%s3811 + $0x10] sm:$0xff]
  %v3815 = vld [vmem:[%s3811 + $0x18] sm:$0xff]
  %v3816 = vld [vmem:[%s3811 + $0x20] sm:$0xff]
  %v3817 = vld [vmem:[%s3811 + $0x28] sm:$0xff]
  %v3818 = vld [vmem:[%s3811 + $0x30] sm:$0xff]
  %v3819 = vld [vmem:[%s3811 + $0x38] sm:$0xff]
  %v3820 = vld [vmem:[%s3811 + $0x40] sm:$0xff]
  %v3821 = vld [vmem:[%s3811 + $0x48] sm:$0xff]
  %v3822 = vld [vmem:[%s3811 + $0x50] sm:$0xff]
  %v3823 = vld [vmem:[%s3811 + $0x58] sm:$0xff]
  %v3824 = vld [vmem:[%s3811 + $0x60] sm:$0xff]
  %v3825 = vld [vmem:[%s3811 + $0x68] sm:$0xff]
  %v3826 = vld [vmem:[%s3811 + $0x70] sm:$0xff]
  %v3827 = vld [vmem:[%s3811 + $0x78] sm:$0xff]
  %v3844 = vunpack.c.l.b16 %v3812
  %v3845 = vunpack.c.h.b16 %v3812
  %v3846 = vunpack.c.l.b16 %v3813
  %v3847 = vunpack.c.h.b16 %v3813
  %v3848 = vunpack.c.l.b16 %v3814
  %v3849 = vunpack.c.h.b16 %v3814
  %v3850 = vunpack.c.l.b16 %v3815
  %v3851 = vunpack.c.h.b16 %v3815
  %v3852 = vunpack.c.l.b16 %v3816
  %v3853 = vunpack.c.h.b16 %v3816
  %v3854 = vunpack.c.l.b16 %v3817
  %v3855 = vunpack.c.h.b16 %v3817
  %v3856 = vunpack.c.l.b16 %v3818
  %v3857 = vunpack.c.h.b16 %v3818
  %v3858 = vunpack.c.l.b16 %v3819
  %v3859 = vunpack.c.h.b16 %v3819
  %v3860 = vunpack.c.l.b16 %v3820
  %v3861 = vunpack.c.h.b16 %v3820
  %v3862 = vunpack.c.l.b16 %v3821
  %v3863 = vunpack.c.h.b16 %v3821
  %v3864 = vunpack.c.l.b16 %v3822
  %v3865 = vunpack.c.h.b16 %v3822
  %v3866 = vunpack.c.l.b16 %v3823
  %v3867 = vunpack.c.h.b16 %v3823
  %v3868 = vunpack.c.l.b16 %v3824
  %v3869 = vunpack.c.h.b16 %v3824
  %v3870 = vunpack.c.l.b16 %v3825
  %v3871 = vunpack.c.h.b16 %v3825
  %v3872 = vunpack.c.l.b16 %v3826
  %v3873 = vunpack.c.h.b16 %v3826
  %v3874 = vunpack.c.l.b16 %v3827
  %v3875 = vunpack.c.h.b16 %v3827
  %v3876 = vpack.c.b16 %v3846, %v3844
  %v3877 = vpack.c.b16 %v3847, %v3845
  %v3878 = vpack.c.b16 %v3850, %v3848
  %v3879 = vpack.c.b16 %v3851, %v3849
  %v3880 = vpack.c.b16 %v3854, %v3852
  %v3881 = vpack.c.b16 %v3855, %v3853
  %v3882 = vpack.c.b16 %v3858, %v3856
  %v3883 = vpack.c.b16 %v3859, %v3857
  %v3884 = vpack.c.b16 %v3862, %v3860
  %v3885 = vpack.c.b16 %v3863, %v3861
  %v3886 = vpack.c.b16 %v3866, %v3864
  %v3887 = vpack.c.b16 %v3867, %v3865
  %v3888 = vpack.c.b16 %v3870, %v3868
  %v3889 = vpack.c.b16 %v3871, %v3869
  %v3890 = vpack.c.b16 %v3874, %v3872
  %v3891 = vpack.c.b16 %v3875, %v3873
  %3908 = vmatprep.subr.bf16.mxu0 %v3877
  %3909 = vmatpush1.bf16.msra.mxu0 %v3876
  %3910 = vmatprep.subr.bf16.mxu0 %v3879
  %3911 = vmatpush1.bf16.msra.mxu0 %v3878
  %3912 = vmatprep.subr.bf16.mxu0 %v3881
  %3913 = vmatpush1.bf16.msra.mxu0 %v3880
  %3914 = vmatprep.subr.bf16.mxu0 %v3883
  %3915 = vmatpush1.bf16.msra.mxu0 %v3882
  %3916 = vmatprep.subr.bf16.mxu0 %v3885
  %3917 = vmatpush1.bf16.msra.mxu0 %v3884
  %3918 = vmatprep.subr.bf16.mxu0 %v3887
  %3919 = vmatpush1.bf16.msra.mxu0 %v3886
  %3920 = vmatprep.subr.bf16.mxu0 %v3889
  %3921 = vmatpush1.bf16.msra.mxu0 %v3888
  %3922 = vmatprep.subr.bf16.mxu0 %v3891
  %3923 = vmatpush1.bf16.msra.mxu0 %v3890
  %3924 = vmatprep.subr.bf16.mxu0 0
  %3925 = vmatpush1.bf16.msra.mxu0 0
  %3926 = vmatprep.subr.bf16.mxu0 0
  %3927 = vmatpush1.bf16.msra.mxu0 0
  %3928 = vmatprep.subr.bf16.mxu0 0
  %3929 = vmatpush1.bf16.msra.mxu0 0
  %3930 = vmatprep.subr.bf16.mxu0 0
  %3931 = vmatpush1.bf16.msra.mxu0 0
  %3932 = vmatprep.subr.bf16.mxu0 0
  %3933 = vmatpush1.bf16.msra.mxu0 0
  %3934 = vmatprep.subr.bf16.mxu0 0
  %3935 = vmatpush1.bf16.msra.mxu0 0
  %3936 = vmatprep.subr.bf16.mxu0 0
  %3937 = vmatpush1.bf16.msra.mxu0 0
  %3938 = vmatprep.subr.bf16.mxu0 0
  %3939 = vmatpush1.bf16.msra.mxu0 0
  %3940 = vmatprep.mubr.bf16.mxu0 0
  %3941 = vmatmul.mubr.bf16.gmra.mrb[0].mxu0 %v3810
  %v3942 = vpop.f32.mrb[0].mxu0
  %v3943 = vadd.f32 0.0, %v3942
  %v3944 = vpop.f32.mrb[0].mxu0
  %v3945 = vadd.f32 0.0, %v3944
  %v3946 = vpop.f32.mrb[0].mxu0
  %v3947 = vpop.f32.mrb[0].mxu0
  %3948 = vdwg.mxu0
  %v3949 = vadd.f32 %v3807, %v3943
  %v3950 = vadd.f32 %v3808, %v3945
  %v3951 = vld [vmem:[#allocation4 + $0x22] sm:$0x3]
  %v3952 = vpack.c.bf16 %v3951, %v3951
  %s3953 = scalar_lea.vmem %s7, 2176
  %v3954 = vld [vmem:[%s3953] sm:$0xff]
  %v3955 = vld [vmem:[%s3953 + $0x8] sm:$0xff]
  %v3956 = vld [vmem:[%s3953 + $0x10] sm:$0xff]
  %v3957 = vld [vmem:[%s3953 + $0x18] sm:$0xff]
  %v3958 = vld [vmem:[%s3953 + $0x20] sm:$0xff]
  %v3959 = vld [vmem:[%s3953 + $0x28] sm:$0xff]
  %v3960 = vld [vmem:[%s3953 + $0x30] sm:$0xff]
  %v3961 = vld [vmem:[%s3953 + $0x38] sm:$0xff]
  %v3962 = vld [vmem:[%s3953 + $0x40] sm:$0xff]
  %v3963 = vld [vmem:[%s3953 + $0x48] sm:$0xff]
  %v3964 = vld [vmem:[%s3953 + $0x50] sm:$0xff]
  %v3965 = vld [vmem:[%s3953 + $0x58] sm:$0xff]
  %v3966 = vld [vmem:[%s3953 + $0x60] sm:$0xff]
  %v3967 = vld [vmem:[%s3953 + $0x68] sm:$0xff]
  %v3968 = vld [vmem:[%s3953 + $0x70] sm:$0xff]
  %v3969 = vld [vmem:[%s3953 + $0x78] sm:$0xff]
  %v3986 = vunpack.c.l.b16 %v3954
  %v3987 = vunpack.c.h.b16 %v3954
  %v3988 = vunpack.c.l.b16 %v3955
  %v3989 = vunpack.c.h.b16 %v3955
  %v3990 = vunpack.c.l.b16 %v3956
  %v3991 = vunpack.c.h.b16 %v3956
  %v3992 = vunpack.c.l.b16 %v3957
  %v3993 = vunpack.c.h.b16 %v3957
  %v3994 = vunpack.c.l.b16 %v3958
  %v3995 = vunpack.c.h.b16 %v3958
  %v3996 = vunpack.c.l.b16 %v3959
  %v3997 = vunpack.c.h.b16 %v3959
  %v3998 = vunpack.c.l.b16 %v3960
  %v3999 = vunpack.c.h.b16 %v3960
  %v4000 = vunpack.c.l.b16 %v3961
  %v4001 = vunpack.c.h.b16 %v3961
  %v4002 = vunpack.c.l.b16 %v3962
  %v4003 = vunpack.c.h.b16 %v3962
  %v4004 = vunpack.c.l.b16 %v3963
  %v4005 = vunpack.c.h.b16 %v3963
  %v4006 = vunpack.c.l.b16 %v3964
  %v4007 = vunpack.c.h.b16 %v3964
  %v4008 = vunpack.c.l.b16 %v3965
  %v4009 = vunpack.c.h.b16 %v3965
  %v4010 = vunpack.c.l.b16 %v3966
  %v4011 = vunpack.c.h.b16 %v3966
  %v4012 = vunpack.c.l.b16 %v3967
  %v4013 = vunpack.c.h.b16 %v3967
  %v4014 = vunpack.c.l.b16 %v3968
  %v4015 = vunpack.c.h.b16 %v3968
  %v4016 = vunpack.c.l.b16 %v3969
  %v4017 = vunpack.c.h.b16 %v3969
  %v4018 = vpack.c.b16 %v3988, %v3986
  %v4019 = vpack.c.b16 %v3989, %v3987
  %v4020 = vpack.c.b16 %v3992, %v3990
  %v4021 = vpack.c.b16 %v3993, %v3991
  %v4022 = vpack.c.b16 %v3996, %v3994
  %v4023 = vpack.c.b16 %v3997, %v3995
  %v4024 = vpack.c.b16 %v4000, %v3998
  %v4025 = vpack.c.b16 %v4001, %v3999
  %v4026 = vpack.c.b16 %v4004, %v4002
  %v4027 = vpack.c.b16 %v4005, %v4003
  %v4028 = vpack.c.b16 %v4008, %v4006
  %v4029 = vpack.c.b16 %v4009, %v4007
  %v4030 = vpack.c.b16 %v4012, %v4010
  %v4031 = vpack.c.b16 %v4013, %v4011
  %v4032 = vpack.c.b16 %v4016, %v4014
  %v4033 = vpack.c.b16 %v4017, %v4015
  %4050 = vmatprep.subr.bf16.mxu0 %v4019
  %4051 = vmatpush1.bf16.msra.mxu0 %v4018
  %4052 = vmatprep.subr.bf16.mxu0 %v4021
  %4053 = vmatpush1.bf16.msra.mxu0 %v4020
  %4054 = vmatprep.subr.bf16.mxu0 %v4023
  %4055 = vmatpush1.bf16.msra.mxu0 %v4022
  %4056 = vmatprep.subr.bf16.mxu0 %v4025
  %4057 = vmatpush1.bf16.msra.mxu0 %v4024
  %4058 = vmatprep.subr.bf16.mxu0 %v4027
  %4059 = vmatpush1.bf16.msra.mxu0 %v4026
  %4060 = vmatprep.subr.bf16.mxu0 %v4029
  %4061 = vmatpush1.bf16.msra.mxu0 %v4028
  %4062 = vmatprep.subr.bf16.mxu0 %v4031
  %4063 = vmatpush1.bf16.msra.mxu0 %v4030
  %4064 = vmatprep.subr.bf16.mxu0 %v4033
  %4065 = vmatpush1.bf16.msra.mxu0 %v4032
  %4066 = vmatprep.subr.bf16.mxu0 0
  %4067 = vmatpush1.bf16.msra.mxu0 0
  %4068 = vmatprep.subr.bf16.mxu0 0
  %4069 = vmatpush1.bf16.msra.mxu0 0
  %4070 = vmatprep.subr.bf16.mxu0 0
  %4071 = vmatpush1.bf16.msra.mxu0 0
  %4072 = vmatprep.subr.bf16.mxu0 0
  %4073 = vmatpush1.bf16.msra.mxu0 0
  %4074 = vmatprep.subr.bf16.mxu0 0
  %4075 = vmatpush1.bf16.msra.mxu0 0
  %4076 = vmatprep.subr.bf16.mxu0 0
  %4077 = vmatpush1.bf16.msra.mxu0 0
  %4078 = vmatprep.subr.bf16.mxu0 0
  %4079 = vmatpush1.bf16.msra.mxu0 0
  %4080 = vmatprep.subr.bf16.mxu0 0
  %4081 = vmatpush1.bf16.msra.mxu0 0
  %4082 = vmatprep.mubr.bf16.mxu0 0
  %4083 = vmatmul.mubr.bf16.gmra.mrb[0].mxu0 %v3952
  %v4084 = vpop.f32.mrb[0].mxu0
  %v4085 = vadd.f32 0.0, %v4084
  %v4086 = vpop.f32.mrb[0].mxu0
  %v4087 = vadd.f32 0.0, %v4086
  %v4088 = vpop.f32.mrb[0].mxu0
  %v4089 = vpop.f32.mrb[0].mxu0
  %4090 = vdwg.mxu0
  %v4091 = vadd.f32 %v3949, %v4085
  %v4092 = vadd.f32 %v3950, %v4087
  %v4093 = vld [vmem:[#allocation4 + $0x24] sm:$0x3]
  %v4094 = vpack.c.bf16 %v4093, %v4093
  %s4095 = scalar_lea.vmem %s7, 2304
  %v4096 = vld [vmem:[%s4095] sm:$0xff]
  %v4097 = vld [vmem:[%s4095 + $0x8] sm:$0xff]
  %v4098 = vld [vmem:[%s4095 + $0x10] sm:$0xff]
  %v4099 = vld [vmem:[%s4095 + $0x18] sm:$0xff]
  %v4100 = vld [vmem:[%s4095 + $0x20] sm:$0xff]
  %v4101 = vld [vmem:[%s4095 + $0x28] sm:$0xff]
  %v4102 = vld [vmem:[%s4095 + $0x30] sm:$0xff]
  %v4103 = vld [vmem:[%s4095 + $0x38] sm:$0xff]
  %v4104 = vld [vmem:[%s4095 + $0x40] sm:$0xff]
  %v4105 = vld [vmem:[%s4095 + $0x48] sm:$0xff]
  %v4106 = vld [vmem:[%s4095 + $0x50] sm:$0xff]
  %v4107 = vld [vmem:[%s4095 + $0x58] sm:$0xff]
  %v4108 = vld [vmem:[%s4095 + $0x60] sm:$0xff]
  %v4109 = vld [vmem:[%s4095 + $0x68] sm:$0xff]
  %v4110 = vld [vmem:[%s4095 + $0x70] sm:$0xff]
  %v4111 = vld [vmem:[%s4095 + $0x78] sm:$0xff]
  %v4128 = vunpack.c.l.b16 %v4096
  %v4129 = vunpack.c.h.b16 %v4096
  %v4130 = vunpack.c.l.b16 %v4097
  %v4131 = vunpack.c.h.b16 %v4097
  %v4132 = vunpack.c.l.b16 %v4098
  %v4133 = vunpack.c.h.b16 %v4098
  %v4134 = vunpack.c.l.b16 %v4099
  %v4135 = vunpack.c.h.b16 %v4099
  %v4136 = vunpack.c.l.b16 %v4100
  %v4137 = vunpack.c.h.b16 %v4100
  %v4138 = vunpack.c.l.b16 %v4101
  %v4139 = vunpack.c.h.b16 %v4101
  %v4140 = vunpack.c.l.b16 %v4102
  %v4141 = vunpack.c.h.b16 %v4102
  %v4142 = vunpack.c.l.b16 %v4103
  %v4143 = vunpack.c.h.b16 %v4103
  %v4144 = vunpack.c.l.b16 %v4104
  %v4145 = vunpack.c.h.b16 %v4104
  %v4146 = vunpack.c.l.b16 %v4105
  %v4147 = vunpack.c.h.b16 %v4105
  %v4148 = vunpack.c.l.b16 %v4106
  %v4149 = vunpack.c.h.b16 %v4106
  %v4150 = vunpack.c.l.b16 %v4107
  %v4151 = vunpack.c.h.b16 %v4107
  %v4152 = vunpack.c.l.b16 %v4108
  %v4153 = vunpack.c.h.b16 %v4108
  %v4154 = vunpack.c.l.b16 %v4109
  %v4155 = vunpack.c.h.b16 %v4109
  %v4156 = vunpack.c.l.b16 %v4110
  %v4157 = vunpack.c.h.b16 %v4110
  %v4158 = vunpack.c.l.b16 %v4111
  %v4159 = vunpack.c.h.b16 %v4111
  %v4160 = vpack.c.b16 %v4130, %v4128
  %v4161 = vpack.c.b16 %v4131, %v4129
  %v4162 = vpack.c.b16 %v4134, %v4132
  %v4163 = vpack.c.b16 %v4135, %v4133
  %v4164 = vpack.c.b16 %v4138, %v4136
  %v4165 = vpack.c.b16 %v4139, %v4137
  %v4166 = vpack.c.b16 %v4142, %v4140
  %v4167 = vpack.c.b16 %v4143, %v4141
  %v4168 = vpack.c.b16 %v4146, %v4144
  %v4169 = vpack.c.b16 %v4147, %v4145
  %v4170 = vpack.c.b16 %v4150, %v4148
  %v4171 = vpack.c.b16 %v4151, %v4149
  %v4172 = vpack.c.b16 %v4154, %v4152
  %v4173 = vpack.c.b16 %v4155, %v4153
  %v4174 = vpack.c.b16 %v4158, %v4156
  %v4175 = vpack.c.b16 %v4159, %v4157
  %4192 = vmatprep.subr.bf16.mxu0 %v4161
  %4193 = vmatpush1.bf16.msra.mxu0 %v4160
  %4194 = vmatprep.subr.bf16.mxu0 %v4163
  %4195 = vmatpush1.bf16.msra.mxu0 %v4162
  %4196 = vmatprep.subr.bf16.mxu0 %v4165
  %4197 = vmatpush1.bf16.msra.mxu0 %v4164
  %4198 = vmatprep.subr.bf16.mxu0 %v4167
  %4199 = vmatpush1.bf16.msra.mxu0 %v4166
  %4200 = vmatprep.subr.bf16.mxu0 %v4169
  %4201 = vmatpush1.bf16.msra.mxu0 %v4168
  %4202 = vmatprep.subr.bf16.mxu0 %v4171
  %4203 = vmatpush1.bf16.msra.mxu0 %v4170
  %4204 = vmatprep.subr.bf16.mxu0 %v4173
  %4205 = vmatpush1.bf16.msra.mxu0 %v4172
  %4206 = vmatprep.subr.bf16.mxu0 %v4175
  %4207 = vmatpush1.bf16.msra.mxu0 %v4174
  %4208 = vmatprep.subr.bf16.mxu0 0
  %4209 = vmatpush1.bf16.msra.mxu0 0
  %4210 = vmatprep.subr.bf16.mxu0 0
  %4211 = vmatpush1.bf16.msra.mxu0 0
  %4212 = vmatprep.subr.bf16.mxu0 0
  %4213 = vmatpush1.bf16.msra.mxu0 0
  %4214 = vmatprep.subr.bf16.mxu0 0
  %4215 = vmatpush1.bf16.msra.mxu0 0
  %4216 = vmatprep.subr.bf16.mxu0 0
  %4217 = vmatpush1.bf16.msra.mxu0 0
  %4218 = vmatprep.subr.bf16.mxu0 0
  %4219 = vmatpush1.bf16.msra.mxu0 0
  %4220 = vmatprep.subr.bf16.mxu0 0
  %4221 = vmatpush1.bf16.msra.mxu0 0
  %4222 = vmatprep.subr.bf16.mxu0 0
  %4223 = vmatpush1.bf16.msra.mxu0 0
  %4224 = vmatprep.mubr.bf16.mxu0 0
  %4225 = vmatmul.mubr.bf16.gmra.mrb[0].mxu0 %v4094
  %v4226 = vpop.f32.mrb[0].mxu0
  %v4227 = vadd.f32 0.0, %v4226
  %v4228 = vpop.f32.mrb[0].mxu0
  %v4229 = vadd.f32 0.0, %v4228
  %v4230 = vpop.f32.mrb[0].mxu0
  %v4231 = vpop.f32.mrb[0].mxu0
  %4232 = vdwg.mxu0
  %v4233 = vadd.f32 %v4091, %v4227
  %v4234 = vadd.f32 %v4092, %v4229
  %v4235 = vld [vmem:[#allocation4 + $0x26] sm:$0x3]
  %v4236 = vpack.c.bf16 %v4235, %v4235
  %s4237 = scalar_lea.vmem %s7, 2432
  %v4238 = vld [vmem:[%s4237] sm:$0xff]
  %v4239 = vld [vmem:[%s4237 + $0x8] sm:$0xff]
  %v4240 = vld [vmem:[%s4237 + $0x10] sm:$0xff]
  %v4241 = vld [vmem:[%s4237 + $0x18] sm:$0xff]
  %v4242 = vld [vmem:[%s4237 + $0x20] sm:$0xff]
  %v4243 = vld [vmem:[%s4237 + $0x28] sm:$0xff]
  %v4244 = vld [vmem:[%s4237 + $0x30] sm:$0xff]
  %v4245 = vld [vmem:[%s4237 + $0x38] sm:$0xff]
  %v4246 = vld [vmem:[%s4237 + $0x40] sm:$0xff]
  %v4247 = vld [vmem:[%s4237 + $0x48] sm:$0xff]
  %v4248 = vld [vmem:[%s4237 + $0x50] sm:$0xff]
  %v4249 = vld [vmem:[%s4237 + $0x58] sm:$0xff]
  %v4250 = vld [vmem:[%s4237 + $0x60] sm:$0xff]
  %v4251 = vld [vmem:[%s4237 + $0x68] sm:$0xff]
  %v4252 = vld [vmem:[%s4237 + $0x70] sm:$0xff]
  %v4253 = vld [vmem:[%s4237 + $0x78] sm:$0xff]
  %v4270 = vunpack.c.l.b16 %v4238
  %v4271 = vunpack.c.h.b16 %v4238
  %v4272 = vunpack.c.l.b16 %v4239
  %v4273 = vunpack.c.h.b16 %v4239
  %v4274 = vunpack.c.l.b16 %v4240
  %v4275 = vunpack.c.h.b16 %v4240
  %v4276 = vunpack.c.l.b16 %v4241
  %v4277 = vunpack.c.h.b16 %v4241
  %v4278 = vunpack.c.l.b16 %v4242
  %v4279 = vunpack.c.h.b16 %v4242
  %v4280 = vunpack.c.l.b16 %v4243
  %v4281 = vunpack.c.h.b16 %v4243
  %v4282 = vunpack.c.l.b16 %v4244
  %v4283 = vunpack.c.h.b16 %v4244
  %v4284 = vunpack.c.l.b16 %v4245
  %v4285 = vunpack.c.h.b16 %v4245
  %v4286 = vunpack.c.l.b16 %v4246
  %v4287 = vunpack.c.h.b16 %v4246
  %v4288 = vunpack.c.l.b16 %v4247
  %v4289 = vunpack.c.h.b16 %v4247
  %v4290 = vunpack.c.l.b16 %v4248
  %v4291 = vunpack.c.h.b16 %v4248
  %v4292 = vunpack.c.l.b16 %v4249
  %v4293 = vunpack.c.h.b16 %v4249
  %v4294 = vunpack.c.l.b16 %v4250
  %v4295 = vunpack.c.h.b16 %v4250
  %v4296 = vunpack.c.l.b16 %v4251
  %v4297 = vunpack.c.h.b16 %v4251
  %v4298 = vunpack.c.l.b16 %v4252
  %v4299 = vunpack.c.h.b16 %v4252
  %v4300 = vunpack.c.l.b16 %v4253
  %v4301 = vunpack.c.h.b16 %v4253
  %v4302 = vpack.c.b16 %v4272, %v4270
  %v4303 = vpack.c.b16 %v4273, %v4271
  %v4304 = vpack.c.b16 %v4276, %v4274
  %v4305 = vpack.c.b16 %v4277, %v4275
  %v4306 = vpack.c.b16 %v4280, %v4278
  %v4307 = vpack.c.b16 %v4281, %v4279
  %v4308 = vpack.c.b16 %v4284, %v4282
  %v4309 = vpack.c.b16 %v4285, %v4283
  %v4310 = vpack.c.b16 %v4288, %v4286
  %v4311 = vpack.c.b16 %v4289, %v4287
  %v4312 = vpack.c.b16 %v4292, %v4290
  %v4313 = vpack.c.b16 %v4293, %v4291
  %v4314 = vpack.c.b16 %v4296, %v4294
  %v4315 = vpack.c.b16 %v4297, %v4295
  %v4316 = vpack.c.b16 %v4300, %v4298
  %v4317 = vpack.c.b16 %v4301, %v4299
  %4334 = vmatprep.subr.bf16.mxu0 %v4303
  %4335 = vmatpush1.bf16.msra.mxu0 %v4302
  %4336 = vmatprep.subr.bf16.mxu0 %v4305
  %4337 = vmatpush1.bf16.msra.mxu0 %v4304
  %4338 = vmatprep.subr.bf16.mxu0 %v4307
  %4339 = vmatpush1.bf16.msra.mxu0 %v4306
  %4340 = vmatprep.subr.bf16.mxu0 %v4309
  %4341 = vmatpush1.bf16.msra.mxu0 %v4308
  %4342 = vmatprep.subr.bf16.mxu0 %v4311
  %4343 = vmatpush1.bf16.msra.mxu0 %v4310
  %4344 = vmatprep.subr.bf16.mxu0 %v4313
  %4345 = vmatpush1.bf16.msra.mxu0 %v4312
  %4346 = vmatprep.subr.bf16.mxu0 %v4315
  %4347 = vmatpush1.bf16.msra.mxu0 %v4314
  %4348 = vmatprep.subr.bf16.mxu0 %v4317
  %4349 = vmatpush1.bf16.msra.mxu0 %v4316
  %4350 = vmatprep.subr.bf16.mxu0 0
  %4351 = vmatpush1.bf16.msra.mxu0 0
  %4352 = vmatprep.subr.bf16.mxu0 0
  %4353 = vmatpush1.bf16.msra.mxu0 0
  %4354 = vmatprep.subr.bf16.mxu0 0
  %4355 = vmatpush1.bf16.msra.mxu0 0
  %4356 = vmatprep.subr.bf16.mxu0 0
  %4357 = vmatpush1.bf16.msra.mxu0 0
  %4358 = vmatprep.subr.bf16.mxu0 0
  %4359 = vmatpush1.bf16.msra.mxu0 0
  %4360 = vmatprep.subr.bf16.mxu0 0
  %4361 = vmatpush1.bf16.msra.mxu0 0
  %4362 = vmatprep.subr.bf16.mxu0 0
  %4363 = vmatpush1.bf16.msra.mxu0 0
  %4364 = vmatprep.subr.bf16.mxu0 0
  %4365 = vmatpush1.bf16.msra.mxu0 0
  %4366 = vmatprep.mubr.bf16.mxu0 0
  %4367 = vmatmul.mubr.bf16.gmra.mrb[0].mxu0 %v4236
  %v4368 = vpop.f32.mrb[0].mxu0
  %v4369 = vadd.f32 0.0, %v4368
  %v4370 = vpop.f32.mrb[0].mxu0
  %v4371 = vadd.f32 0.0, %v4370
  %v4372 = vpop.f32.mrb[0].mxu0
  %v4373 = vpop.f32.mrb[0].mxu0
  %4374 = vdwg.mxu0
  %v4375 = vadd.f32 %v4233, %v4369
  %v4376 = vadd.f32 %v4234, %v4371
  %v4377 = vld [vmem:[#allocation4 + $0x28] sm:$0x3]
  %v4378 = vpack.c.bf16 %v4377, %v4377
  %s4379 = scalar_lea.vmem %s7, 2560
  %v4380 = vld [vmem:[%s4379] sm:$0xff]
  %v4381 = vld [vmem:[%s4379 + $0x8] sm:$0xff]
  %v4382 = vld [vmem:[%s4379 + $0x10] sm:$0xff]
  %v4383 = vld [vmem:[%s4379 + $0x18] sm:$0xff]
  %v4384 = vld [vmem:[%s4379 + $0x20] sm:$0xff]
  %v4385 = vld [vmem:[%s4379 + $0x28] sm:$0xff]
  %v4386 = vld [vmem:[%s4379 + $0x30] sm:$0xff]
  %v4387 = vld [vmem:[%s4379 + $0x38] sm:$0xff]
  %v4388 = vld [vmem:[%s4379 + $0x40] sm:$0xff]
  %v4389 = vld [vmem:[%s4379 + $0x48] sm:$0xff]
  %v4390 = vld [vmem:[%s4379 + $0x50] sm:$0xff]
  %v4391 = vld [vmem:[%s4379 + $0x58] sm:$0xff]
  %v4392 = vld [vmem:[%s4379 + $0x60] sm:$0xff]
  %v4393 = vld [vmem:[%s4379 + $0x68] sm:$0xff]
  %v4394 = vld [vmem:[%s4379 + $0x70] sm:$0xff]
  %v4395 = vld [vmem:[%s4379 + $0x78] sm:$0xff]
  %v4412 = vunpack.c.l.b16 %v4380
  %v4413 = vunpack.c.h.b16 %v4380
  %v4414 = vunpack.c.l.b16 %v4381
  %v4415 = vunpack.c.h.b16 %v4381
  %v4416 = vunpack.c.l.b16 %v4382
  %v4417 = vunpack.c.h.b16 %v4382
  %v4418 = vunpack.c.l.b16 %v4383
  %v4419 = vunpack.c.h.b16 %v4383
  %v4420 = vunpack.c.l.b16 %v4384
  %v4421 = vunpack.c.h.b16 %v4384
  %v4422 = vunpack.c.l.b16 %v4385
  %v4423 = vunpack.c.h.b16 %v4385
  %v4424 = vunpack.c.l.b16 %v4386
  %v4425 = vunpack.c.h.b16 %v4386
  %v4426 = vunpack.c.l.b16 %v4387
  %v4427 = vunpack.c.h.b16 %v4387
  %v4428 = vunpack.c.l.b16 %v4388
  %v4429 = vunpack.c.h.b16 %v4388
  %v4430 = vunpack.c.l.b16 %v4389
  %v4431 = vunpack.c.h.b16 %v4389
  %v4432 = vunpack.c.l.b16 %v4390
  %v4433 = vunpack.c.h.b16 %v4390
  %v4434 = vunpack.c.l.b16 %v4391
  %v4435 = vunpack.c.h.b16 %v4391
  %v4436 = vunpack.c.l.b16 %v4392
  %v4437 = vunpack.c.h.b16 %v4392
  %v4438 = vunpack.c.l.b16 %v4393
  %v4439 = vunpack.c.h.b16 %v4393
  %v4440 = vunpack.c.l.b16 %v4394
  %v4441 = vunpack.c.h.b16 %v4394
  %v4442 = vunpack.c.l.b16 %v4395
  %v4443 = vunpack.c.h.b16 %v4395
  %v4444 = vpack.c.b16 %v4414, %v4412
  %v4445 = vpack.c.b16 %v4415, %v4413
  %v4446 = vpack.c.b16 %v4418, %v4416
  %v4447 = vpack.c.b16 %v4419, %v4417
  %v4448 = vpack.c.b16 %v4422, %v4420
  %v4449 = vpack.c.b16 %v4423, %v4421
  %v4450 = vpack.c.b16 %v4426, %v4424
  %v4451 = vpack.c.b16 %v4427, %v4425
  %v4452 = vpack.c.b16 %v4430, %v4428
  %v4453 = vpack.c.b16 %v4431, %v4429
  %v4454 = vpack.c.b16 %v4434, %v4432
  %v4455 = vpack.c.b16 %v4435, %v4433
  %v4456 = vpack.c.b16 %v4438, %v4436
  %v4457 = vpack.c.b16 %v4439, %v4437
  %v4458 = vpack.c.b16 %v4442, %v4440
  %v4459 = vpack.c.b16 %v4443, %v4441
  %4476 = vmatprep.subr.bf16.mxu0 %v4445
  %4477 = vmatpush1.bf16.msra.mxu0 %v4444
  %4478 = vmatprep.subr.bf16.mxu0 %v4447
  %4479 = vmatpush1.bf16.msra.mxu0 %v4446
  %4480 = vmatprep.subr.bf16.mxu0 %v4449
  %4481 = vmatpush1.bf16.msra.mxu0 %v4448
  %4482 = vmatprep.subr.bf16.mxu0 %v4451
  %4483 = vmatpush1.bf16.msra.mxu0 %v4450
  %4484 = vmatprep.subr.bf16.mxu0 %v4453
  %4485 = vmatpush1.bf16.msra.mxu0 %v4452
  %4486 = vmatprep.subr.bf16.mxu0 %v4455
  %4487 = vmatpush1.bf16.msra.mxu0 %v4454
  %4488 = vmatprep.subr.bf16.mxu0 %v4457
  %4489 = vmatpush1.bf16.msra.mxu0 %v4456
  %4490 = vmatprep.subr.bf16.mxu0 %v4459
  %4491 = vmatpush1.bf16.msra.mxu0 %v4458
  %4492 = vmatprep.subr.bf16.mxu0 0
  %4493 = vmatpush1.bf16.msra.mxu0 0
  %4494 = vmatprep.subr.bf16.mxu0 0
  %4495 = vmatpush1.bf16.msra.mxu0 0
  %4496 = vmatprep.subr.bf16.mxu0 0
  %4497 = vmatpush1.bf16.msra.mxu0 0
  %4498 = vmatprep.subr.bf16.mxu0 0
  %4499 = vmatpush1.bf16.msra.mxu0 0
  %4500 = vmatprep.subr.bf16.mxu0 0
  %4501 = vmatpush1.bf16.msra.mxu0 0
  %4502 = vmatprep.subr.bf16.mxu0 0
  %4503 = vmatpush1.bf16.msra.mxu0 0
  %4504 = vmatprep.subr.bf16.mxu0 0
  %4505 = vmatpush1.bf16.msra.mxu0 0
  %4506 = vmatprep.subr.bf16.mxu0 0
  %4507 = vmatpush1.bf16.msra.mxu0 0
  %4508 = vmatprep.mubr.bf16.mxu0 0
  %4509 = vmatmul.mubr.bf16.gmra.mrb[0].mxu0 %v4378
  %v4510 = vpop.f32.mrb[0].mxu0
  %v4511 = vadd.f32 0.0, %v4510
  %v4512 = vpop.f32.mrb[0].mxu0
  %v4513 = vadd.f32 0.0, %v4512
  %v4514 = vpop.f32.mrb[0].mxu0
  %v4515 = vpop.f32.mrb[0].mxu0
  %4516 = vdwg.mxu0
  %v4517 = vadd.f32 %v4375, %v4511
  %v4518 = vadd.f32 %v4376, %v4513
  %v4519 = vld [vmem:[#allocation4 + $0x2a] sm:$0x3]
  %v4520 = vpack.c.bf16 %v4519, %v4519
  %s4521 = scalar_lea.vmem %s7, 2688
  %v4522 = vld [vmem:[%s4521] sm:$0xff]
  %v4523 = vld [vmem:[%s4521 + $0x8] sm:$0xff]
  %v4524 = vld [vmem:[%s4521 + $0x10] sm:$0xff]
  %v4525 = vld [vmem:[%s4521 + $0x18] sm:$0xff]
  %v4526 = vld [vmem:[%s4521 + $0x20] sm:$0xff]
  %v4527 = vld [vmem:[%s4521 + $0x28] sm:$0xff]
  %v4528 = vld [vmem:[%s4521 + $0x30] sm:$0xff]
  %v4529 = vld [vmem:[%s4521 + $0x38] sm:$0xff]
  %v4530 = vld [vmem:[%s4521 + $0x40] sm:$0xff]
  %v4531 = vld [vmem:[%s4521 + $0x48] sm:$0xff]
  %v4532 = vld [vmem:[%s4521 + $0x50] sm:$0xff]
  %v4533 = vld [vmem:[%s4521 + $0x58] sm:$0xff]
  %v4534 = vld [vmem:[%s4521 + $0x60] sm:$0xff]
  %v4535 = vld [vmem:[%s4521 + $0x68] sm:$0xff]
  %v4536 = vld [vmem:[%s4521 + $0x70] sm:$0xff]
  %v4537 = vld [vmem:[%s4521 + $0x78] sm:$0xff]
  %v4554 = vunpack.c.l.b16 %v4522
  %v4555 = vunpack.c.h.b16 %v4522
  %v4556 = vunpack.c.l.b16 %v4523
  %v4557 = vunpack.c.h.b16 %v4523
  %v4558 = vunpack.c.l.b16 %v4524
  %v4559 = vunpack.c.h.b16 %v4524
  %v4560 = vunpack.c.l.b16 %v4525
  %v4561 = vunpack.c.h.b16 %v4525
  %v4562 = vunpack.c.l.b16 %v4526
  %v4563 = vunpack.c.h.b16 %v4526
  %v4564 = vunpack.c.l.b16 %v4527
  %v4565 = vunpack.c.h.b16 %v4527
  %v4566 = vunpack.c.l.b16 %v4528
  %v4567 = vunpack.c.h.b16 %v4528
  %v4568 = vunpack.c.l.b16 %v4529
  %v4569 = vunpack.c.h.b16 %v4529
  %v4570 = vunpack.c.l.b16 %v4530
  %v4571 = vunpack.c.h.b16 %v4530
  %v4572 = vunpack.c.l.b16 %v4531
  %v4573 = vunpack.c.h.b16 %v4531
  %v4574 = vunpack.c.l.b16 %v4532
  %v4575 = vunpack.c.h.b16 %v4532
  %v4576 = vunpack.c.l.b16 %v4533
  %v4577 = vunpack.c.h.b16 %v4533
  %v4578 = vunpack.c.l.b16 %v4534
  %v4579 = vunpack.c.h.b16 %v4534
  %v4580 = vunpack.c.l.b16 %v4535
  %v4581 = vunpack.c.h.b16 %v4535
  %v4582 = vunpack.c.l.b16 %v4536
  %v4583 = vunpack.c.h.b16 %v4536
  %v4584 = vunpack.c.l.b16 %v4537
  %v4585 = vunpack.c.h.b16 %v4537
  %v4586 = vpack.c.b16 %v4556, %v4554
  %v4587 = vpack.c.b16 %v4557, %v4555
  %v4588 = vpack.c.b16 %v4560, %v4558
  %v4589 = vpack.c.b16 %v4561, %v4559
  %v4590 = vpack.c.b16 %v4564, %v4562
  %v4591 = vpack.c.b16 %v4565, %v4563
  %v4592 = vpack.c.b16 %v4568, %v4566
  %v4593 = vpack.c.b16 %v4569, %v4567
  %v4594 = vpack.c.b16 %v4572, %v4570
  %v4595 = vpack.c.b16 %v4573, %v4571
  %v4596 = vpack.c.b16 %v4576, %v4574
  %v4597 = vpack.c.b16 %v4577, %v4575
  %v4598 = vpack.c.b16 %v4580, %v4578
  %v4599 = vpack.c.b16 %v4581, %v4579
  %v4600 = vpack.c.b16 %v4584, %v4582
  %v4601 = vpack.c.b16 %v4585, %v4583
  %4618 = vmatprep.subr.bf16.mxu0 %v4587
  %4619 = vmatpush1.bf16.msra.mxu0 %v4586
  %4620 = vmatprep.subr.bf16.mxu0 %v4589
  %4621 = vmatpush1.bf16.msra.mxu0 %v4588
  %4622 = vmatprep.subr.bf16.mxu0 %v4591
  %4623 = vmatpush1.bf16.msra.mxu0 %v4590
  %4624 = vmatprep.subr.bf16.mxu0 %v4593
  %4625 = vmatpush1.bf16.msra.mxu0 %v4592
  %4626 = vmatprep.subr.bf16.mxu0 %v4595
  %4627 = vmatpush1.bf16.msra.mxu0 %v4594
  %4628 = vmatprep.subr.bf16.mxu0 %v4597
  %4629 = vmatpush1.bf16.msra.mxu0 %v4596
  %4630 = vmatprep.subr.bf16.mxu0 %v4599
  %4631 = vmatpush1.bf16.msra.mxu0 %v4598
  %4632 = vmatprep.subr.bf16.mxu0 %v4601
  %4633 = vmatpush1.bf16.msra.mxu0 %v4600
  %4634 = vmatprep.subr.bf16.mxu0 0
  %4635 = vmatpush1.bf16.msra.mxu0 0
  %4636 = vmatprep.subr.bf16.mxu0 0
  %4637 = vmatpush1.bf16.msra.mxu0 0
  %4638 = vmatprep.subr.bf16.mxu0 0
  %4639 = vmatpush1.bf16.msra.mxu0 0
  %4640 = vmatprep.subr.bf16.mxu0 0
  %4641 = vmatpush1.bf16.msra.mxu0 0
  %4642 = vmatprep.subr.bf16.mxu0 0
  %4643 = vmatpush1.bf16.msra.mxu0 0
  %4644 = vmatprep.subr.bf16.mxu0 0
  %4645 = vmatpush1.bf16.msra.mxu0 0
  %4646 = vmatprep.subr.bf16.mxu0 0
  %4647 = vmatpush1.bf16.msra.mxu0 0
  %4648 = vmatprep.subr.bf16.mxu0 0
  %4649 = vmatpush1.bf16.msra.mxu0 0
  %4650 = vmatprep.mubr.bf16.mxu0 0
  %4651 = vmatmul.mubr.bf16.gmra.mrb[0].mxu0 %v4520
  %v4652 = vpop.f32.mrb[0].mxu0
  %v4653 = vadd.f32 0.0, %v4652
  %v4654 = vpop.f32.mrb[0].mxu0
  %v4655 = vadd.f32 0.0, %v4654
  %v4656 = vpop.f32.mrb[0].mxu0
  %v4657 = vpop.f32.mrb[0].mxu0
  %4658 = vdwg.mxu0
  %v4659 = vadd.f32 %v4517, %v4653
  %v4660 = vadd.f32 %v4518, %v4655
  %v4661 = vld [vmem:[#allocation4 + $0x2c] sm:$0x3]
  %v4662 = vpack.c.bf16 %v4661, %v4661
  %s4663 = scalar_lea.vmem %s7, 2816
  %v4664 = vld [vmem:[%s4663] sm:$0xff]
  %v4665 = vld [vmem:[%s4663 + $0x8] sm:$0xff]
  %v4666 = vld [vmem:[%s4663 + $0x10] sm:$0xff]
  %v4667 = vld [vmem:[%s4663 + $0x18] sm:$0xff]
  %v4668 = vld [vmem:[%s4663 + $0x20] sm:$0xff]
  %v4669 = vld [vmem:[%s4663 + $0x28] sm:$0xff]
  %v4670 = vld [vmem:[%s4663 + $0x30] sm:$0xff]
  %v4671 = vld [vmem:[%s4663 + $0x38] sm:$0xff]
  %v4672 = vld [vmem:[%s4663 + $0x40] sm:$0xff]
  %v4673 = vld [vmem:[%s4663 + $0x48] sm:$0xff]
  %v4674 = vld [vmem:[%s4663 + $0x50] sm:$0xff]
  %v4675 = vld [vmem:[%s4663 + $0x58] sm:$0xff]
  %v4676 = vld [vmem:[%s4663 + $0x60] sm:$0xff]
  %v4677 = vld [vmem:[%s4663 + $0x68] sm:$0xff]
  %v4678 = vld [vmem:[%s4663 + $0x70] sm:$0xff]
  %v4679 = vld [vmem:[%s4663 + $0x78] sm:$0xff]
  %v4696 = vunpack.c.l.b16 %v4664
  %v4697 = vunpack.c.h.b16 %v4664
  %v4698 = vunpack.c.l.b16 %v4665
  %v4699 = vunpack.c.h.b16 %v4665
  %v4700 = vunpack.c.l.b16 %v4666
  %v4701 = vunpack.c.h.b16 %v4666
  %v4702 = vunpack.c.l.b16 %v4667
  %v4703 = vunpack.c.h.b16 %v4667
  %v4704 = vunpack.c.l.b16 %v4668
  %v4705 = vunpack.c.h.b16 %v4668
  %v4706 = vunpack.c.l.b16 %v4669
  %v4707 = vunpack.c.h.b16 %v4669
  %v4708 = vunpack.c.l.b16 %v4670
  %v4709 = vunpack.c.h.b16 %v4670
  %v4710 = vunpack.c.l.b16 %v4671
  %v4711 = vunpack.c.h.b16 %v4671
  %v4712 = vunpack.c.l.b16 %v4672
  %v4713 = vunpack.c.h.b16 %v4672
  %v4714 = vunpack.c.l.b16 %v4673
  %v4715 = vunpack.c.h.b16 %v4673
  %v4716 = vunpack.c.l.b16 %v4674
  %v4717 = vunpack.c.h.b16 %v4674
  %v4718 = vunpack.c.l.b16 %v4675
  %v4719 = vunpack.c.h.b16 %v4675
  %v4720 = vunpack.c.l.b16 %v4676
  %v4721 = vunpack.c.h.b16 %v4676
  %v4722 = vunpack.c.l.b16 %v4677
  %v4723 = vunpack.c.h.b16 %v4677
  %v4724 = vunpack.c.l.b16 %v4678
  %v4725 = vunpack.c.h.b16 %v4678
  %v4726 = vunpack.c.l.b16 %v4679
  %v4727 = vunpack.c.h.b16 %v4679
  %v4728 = vpack.c.b16 %v4698, %v4696
  %v4729 = vpack.c.b16 %v4699, %v4697
  %v4730 = vpack.c.b16 %v4702, %v4700
  %v4731 = vpack.c.b16 %v4703, %v4701
  %v4732 = vpack.c.b16 %v4706, %v4704
  %v4733 = vpack.c.b16 %v4707, %v4705
  %v4734 = vpack.c.b16 %v4710, %v4708
  %v4735 = vpack.c.b16 %v4711, %v4709
  %v4736 = vpack.c.b16 %v4714, %v4712
  %v4737 = vpack.c.b16 %v4715, %v4713
  %v4738 = vpack.c.b16 %v4718, %v4716
  %v4739 = vpack.c.b16 %v4719, %v4717
  %v4740 = vpack.c.b16 %v4722, %v4720
  %v4741 = vpack.c.b16 %v4723, %v4721
  %v4742 = vpack.c.b16 %v4726, %v4724
  %v4743 = vpack.c.b16 %v4727, %v4725
  %4760 = vmatprep.subr.bf16.mxu0 %v4729
  %4761 = vmatpush1.bf16.msra.mxu0 %v4728
  %4762 = vmatprep.subr.bf16.mxu0 %v4731
  %4763 = vmatpush1.bf16.msra.mxu0 %v4730
  %4764 = vmatprep.subr.bf16.mxu0 %v4733
  %4765 = vmatpush1.bf16.msra.mxu0 %v4732
  %4766 = vmatprep.subr.bf16.mxu0 %v4735
  %4767 = vmatpush1.bf16.msra.mxu0 %v4734
  %4768 = vmatprep.subr.bf16.mxu0 %v4737
  %4769 = vmatpush1.bf16.msra.mxu0 %v4736
  %4770 = vmatprep.subr.bf16.mxu0 %v4739
  %4771 = vmatpush1.bf16.msra.mxu0 %v4738
  %4772 = vmatprep.subr.bf16.mxu0 %v4741
  %4773 = vmatpush1.bf16.msra.mxu0 %v4740
  %4774 = vmatprep.subr.bf16.mxu0 %v4743
  %4775 = vmatpush1.bf16.msra.mxu0 %v4742
  %4776 = vmatprep.subr.bf16.mxu0 0
  %4777 = vmatpush1.bf16.msra.mxu0 0
  %4778 = vmatprep.subr.bf16.mxu0 0
  %4779 = vmatpush1.bf16.msra.mxu0 0
  %4780 = vmatprep.subr.bf16.mxu0 0
  %4781 = vmatpush1.bf16.msra.mxu0 0
  %4782 = vmatprep.subr.bf16.mxu0 0
  %4783 = vmatpush1.bf16.msra.mxu0 0
  %4784 = vmatprep.subr.bf16.mxu0 0
  %4785 = vmatpush1.bf16.msra.mxu0 0
  %4786 = vmatprep.subr.bf16.mxu0 0
  %4787 = vmatpush1.bf16.msra.mxu0 0
  %4788 = vmatprep.subr.bf16.mxu0 0
  %4789 = vmatpush1.bf16.msra.mxu0 0
  %4790 = vmatprep.subr.bf16.mxu0 0
  %4791 = vmatpush1.bf16.msra.mxu0 0
  %4792 = vmatprep.mubr.bf16.mxu0 0
  %4793 = vmatmul.mubr.bf16.gmra.mrb[0].mxu0 %v4662
  %v4794 = vpop.f32.mrb[0].mxu0
  %v4795 = vadd.f32 0.0, %v4794
  %v4796 = vpop.f32.mrb[0].mxu0
  %v4797 = vadd.f32 0.0, %v4796
  %v4798 = vpop.f32.mrb[0].mxu0
  %v4799 = vpop.f32.mrb[0].mxu0
  %4800 = vdwg.mxu0
  %v4801 = vadd.f32 %v4659, %v4795
  %v4802 = vadd.f32 %v4660, %v4797
  %v4803 = vld [vmem:[#allocation4 + $0x2e] sm:$0x3]
  %v4804 = vpack.c.bf16 %v4803, %v4803
  %s4805 = scalar_lea.vmem %s7, 2944
  %v4806 = vld [vmem:[%s4805] sm:$0xff]
  %v4807 = vld [vmem:[%s4805 + $0x8] sm:$0xff]
  %v4808 = vld [vmem:[%s4805 + $0x10] sm:$0xff]
  %v4809 = vld [vmem:[%s4805 + $0x18] sm:$0xff]
  %v4810 = vld [vmem:[%s4805 + $0x20] sm:$0xff]
  %v4811 = vld [vmem:[%s4805 + $0x28] sm:$0xff]
  %v4812 = vld [vmem:[%s4805 + $0x30] sm:$0xff]
  %v4813 = vld [vmem:[%s4805 + $0x38] sm:$0xff]
  %v4814 = vld [vmem:[%s4805 + $0x40] sm:$0xff]
  %v4815 = vld [vmem:[%s4805 + $0x48] sm:$0xff]
  %v4816 = vld [vmem:[%s4805 + $0x50] sm:$0xff]
  %v4817 = vld [vmem:[%s4805 + $0x58] sm:$0xff]
  %v4818 = vld [vmem:[%s4805 + $0x60] sm:$0xff]
  %v4819 = vld [vmem:[%s4805 + $0x68] sm:$0xff]
  %v4820 = vld [vmem:[%s4805 + $0x70] sm:$0xff]
  %v4821 = vld [vmem:[%s4805 + $0x78] sm:$0xff]
  %v4838 = vunpack.c.l.b16 %v4806
  %v4839 = vunpack.c.h.b16 %v4806
  %v4840 = vunpack.c.l.b16 %v4807
  %v4841 = vunpack.c.h.b16 %v4807
  %v4842 = vunpack.c.l.b16 %v4808
  %v4843 = vunpack.c.h.b16 %v4808
  %v4844 = vunpack.c.l.b16 %v4809
  %v4845 = vunpack.c.h.b16 %v4809
  %v4846 = vunpack.c.l.b16 %v4810
  %v4847 = vunpack.c.h.b16 %v4810
  %v4848 = vunpack.c.l.b16 %v4811
  %v4849 = vunpack.c.h.b16 %v4811
  %v4850 = vunpack.c.l.b16 %v4812
  %v4851 = vunpack.c.h.b16 %v4812
  %v4852 = vunpack.c.l.b16 %v4813
  %v4853 = vunpack.c.h.b16 %v4813
  %v4854 = vunpack.c.l.b16 %v4814
  %v4855 = vunpack.c.h.b16 %v4814
  %v4856 = vunpack.c.l.b16 %v4815
  %v4857 = vunpack.c.h.b16 %v4815
  %v4858 = vunpack.c.l.b16 %v4816
  %v4859 = vunpack.c.h.b16 %v4816
  %v4860 = vunpack.c.l.b16 %v4817
  %v4861 = vunpack.c.h.b16 %v4817
  %v4862 = vunpack.c.l.b16 %v4818
  %v4863 = vunpack.c.h.b16 %v4818
  %v4864 = vunpack.c.l.b16 %v4819
  %v4865 = vunpack.c.h.b16 %v4819
  %v4866 = vunpack.c.l.b16 %v4820
  %v4867 = vunpack.c.h.b16 %v4820
  %v4868 = vunpack.c.l.b16 %v4821
  %v4869 = vunpack.c.h.b16 %v4821
  %v4870 = vpack.c.b16 %v4840, %v4838
  %v4871 = vpack.c.b16 %v4841, %v4839
  %v4872 = vpack.c.b16 %v4844, %v4842
  %v4873 = vpack.c.b16 %v4845, %v4843
  %v4874 = vpack.c.b16 %v4848, %v4846
  %v4875 = vpack.c.b16 %v4849, %v4847
  %v4876 = vpack.c.b16 %v4852, %v4850
  %v4877 = vpack.c.b16 %v4853, %v4851
  %v4878 = vpack.c.b16 %v4856, %v4854
  %v4879 = vpack.c.b16 %v4857, %v4855
  %v4880 = vpack.c.b16 %v4860, %v4858
  %v4881 = vpack.c.b16 %v4861, %v4859
  %v4882 = vpack.c.b16 %v4864, %v4862
  %v4883 = vpack.c.b16 %v4865, %v4863
  %v4884 = vpack.c.b16 %v4868, %v4866
  %v4885 = vpack.c.b16 %v4869, %v4867
  %4902 = vmatprep.subr.bf16.mxu0 %v4871
  %4903 = vmatpush1.bf16.msra.mxu0 %v4870
  %4904 = vmatprep.subr.bf16.mxu0 %v4873
  %4905 = vmatpush1.bf16.msra.mxu0 %v4872
  %4906 = vmatprep.subr.bf16.mxu0 %v4875
  %4907 = vmatpush1.bf16.msra.mxu0 %v4874
  %4908 = vmatprep.subr.bf16.mxu0 %v4877
  %4909 = vmatpush1.bf16.msra.mxu0 %v4876
  %4910 = vmatprep.subr.bf16.mxu0 %v4879
  %4911 = vmatpush1.bf16.msra.mxu0 %v4878
  %4912 = vmatprep.subr.bf16.mxu0 %v4881
  %4913 = vmatpush1.bf16.msra.mxu0 %v4880
  %4914 = vmatprep.subr.bf16.mxu0 %v4883
  %4915 = vmatpush1.bf16.msra.mxu0 %v4882
  %4916 = vmatprep.subr.bf16.mxu0 %v4885
  %4917 = vmatpush1.bf16.msra.mxu0 %v4884
  %4918 = vmatprep.subr.bf16.mxu0 0
  %4919 = vmatpush1.bf16.msra.mxu0 0
  %4920 = vmatprep.subr.bf16.mxu0 0
  %4921 = vmatpush1.bf16.msra.mxu0 0
  %4922 = vmatprep.subr.bf16.mxu0 0
  %4923 = vmatpush1.bf16.msra.mxu0 0
  %4924 = vmatprep.subr.bf16.mxu0 0
  %4925 = vmatpush1.bf16.msra.mxu0 0
  %4926 = vmatprep.subr.bf16.mxu0 0
  %4927 = vmatpush1.bf16.msra.mxu0 0
  %4928 = vmatprep.subr.bf16.mxu0 0
  %4929 = vmatpush1.bf16.msra.mxu0 0
  %4930 = vmatprep.subr.bf16.mxu0 0
  %4931 = vmatpush1.bf16.msra.mxu0 0
  %4932 = vmatprep.subr.bf16.mxu0 0
  %4933 = vmatpush1.bf16.msra.mxu0 0
  %4934 = vmatprep.mubr.bf16.mxu0 0
  %4935 = vmatmul.mubr.bf16.gmra.mrb[0].mxu0 %v4804
  %v4936 = vpop.f32.mrb[0].mxu0
  %v4937 = vadd.f32 0.0, %v4936
  %v4938 = vpop.f32.mrb[0].mxu0
  %v4939 = vadd.f32 0.0, %v4938
  %v4940 = vpop.f32.mrb[0].mxu0
  %v4941 = vpop.f32.mrb[0].mxu0
  %4942 = vdwg.mxu0
  %v4943 = vadd.f32 %v4801, %v4937
  %v4944 = vadd.f32 %v4802, %v4939
  %v4945 = vld [vmem:[#allocation4 + $0x30] sm:$0x3]
  %v4946 = vpack.c.bf16 %v4945, %v4945
  %s4947 = scalar_lea.vmem %s7, 3072
  %v4948 = vld [vmem:[%s4947] sm:$0xff]
  %v4949 = vld [vmem:[%s4947 + $0x8] sm:$0xff]
  %v4950 = vld [vmem:[%s4947 + $0x10] sm:$0xff]
  %v4951 = vld [vmem:[%s4947 + $0x18] sm:$0xff]
  %v4952 = vld [vmem:[%s4947 + $0x20] sm:$0xff]
  %v4953 = vld [vmem:[%s4947 + $0x28] sm:$0xff]
  %v4954 = vld [vmem:[%s4947 + $0x30] sm:$0xff]
  %v4955 = vld [vmem:[%s4947 + $0x38] sm:$0xff]
  %v4956 = vld [vmem:[%s4947 + $0x40] sm:$0xff]
  %v4957 = vld [vmem:[%s4947 + $0x48] sm:$0xff]
  %v4958 = vld [vmem:[%s4947 + $0x50] sm:$0xff]
  %v4959 = vld [vmem:[%s4947 + $0x58] sm:$0xff]
  %v4960 = vld [vmem:[%s4947 + $0x60] sm:$0xff]
  %v4961 = vld [vmem:[%s4947 + $0x68] sm:$0xff]
  %v4962 = vld [vmem:[%s4947 + $0x70] sm:$0xff]
  %v4963 = vld [vmem:[%s4947 + $0x78] sm:$0xff]
  %v4980 = vunpack.c.l.b16 %v4948
  %v4981 = vunpack.c.h.b16 %v4948
  %v4982 = vunpack.c.l.b16 %v4949
  %v4983 = vunpack.c.h.b16 %v4949
  %v4984 = vunpack.c.l.b16 %v4950
  %v4985 = vunpack.c.h.b16 %v4950
  %v4986 = vunpack.c.l.b16 %v4951
  %v4987 = vunpack.c.h.b16 %v4951
  %v4988 = vunpack.c.l.b16 %v4952
  %v4989 = vunpack.c.h.b16 %v4952
  %v4990 = vunpack.c.l.b16 %v4953
  %v4991 = vunpack.c.h.b16 %v4953
  %v4992 = vunpack.c.l.b16 %v4954
  %v4993 = vunpack.c.h.b16 %v4954
  %v4994 = vunpack.c.l.b16 %v4955
  %v4995 = vunpack.c.h.b16 %v4955
  %v4996 = vunpack.c.l.b16 %v4956
  %v4997 = vunpack.c.h.b16 %v4956
  %v4998 = vunpack.c.l.b16 %v4957
  %v4999 = vunpack.c.h.b16 %v4957
  %v5000 = vunpack.c.l.b16 %v4958
  %v5001 = vunpack.c.h.b16 %v4958
  %v5002 = vunpack.c.l.b16 %v4959
  %v5003 = vunpack.c.h.b16 %v4959
  %v5004 = vunpack.c.l.b16 %v4960
  %v5005 = vunpack.c.h.b16 %v4960
  %v5006 = vunpack.c.l.b16 %v4961
  %v5007 = vunpack.c.h.b16 %v4961
  %v5008 = vunpack.c.l.b16 %v4962
  %v5009 = vunpack.c.h.b16 %v4962
  %v5010 = vunpack.c.l.b16 %v4963
  %v5011 = vunpack.c.h.b16 %v4963
  %v5012 = vpack.c.b16 %v4982, %v4980
  %v5013 = vpack.c.b16 %v4983, %v4981
  %v5014 = vpack.c.b16 %v4986, %v4984
  %v5015 = vpack.c.b16 %v4987, %v4985
  %v5016 = vpack.c.b16 %v4990, %v4988
  %v5017 = vpack.c.b16 %v4991, %v4989
  %v5018 = vpack.c.b16 %v4994, %v4992
  %v5019 = vpack.c.b16 %v4995, %v4993
  %v5020 = vpack.c.b16 %v4998, %v4996
  %v5021 = vpack.c.b16 %v4999, %v4997
  %v5022 = vpack.c.b16 %v5002, %v5000
  %v5023 = vpack.c.b16 %v5003, %v5001
  %v5024 = vpack.c.b16 %v5006, %v5004
  %v5025 = vpack.c.b16 %v5007, %v5005
  %v5026 = vpack.c.b16 %v5010, %v5008
  %v5027 = vpack.c.b16 %v5011, %v5009
  %5044 = vmatprep.subr.bf16.mxu0 %v5013
  %5045 = vmatpush1.bf16.msra.mxu0 %v5012
  %5046 = vmatprep.subr.bf16.mxu0 %v5015
  %5047 = vmatpush1.bf16.msra.mxu0 %v5014
  %5048 = vmatprep.subr.bf16.mxu0 %v5017
  %5049 = vmatpush1.bf16.msra.mxu0 %v5016
  %5050 = vmatprep.subr.bf16.mxu0 %v5019
  %5051 = vmatpush1.bf16.msra.mxu0 %v5018
  %5052 = vmatprep.subr.bf16.mxu0 %v5021
  %5053 = vmatpush1.bf16.msra.mxu0 %v5020
  %5054 = vmatprep.subr.bf16.mxu0 %v5023
  %5055 = vmatpush1.bf16.msra.mxu0 %v5022
  %5056 = vmatprep.subr.bf16.mxu0 %v5025
  %5057 = vmatpush1.bf16.msra.mxu0 %v5024
  %5058 = vmatprep.subr.bf16.mxu0 %v5027
  %5059 = vmatpush1.bf16.msra.mxu0 %v5026
  %5060 = vmatprep.subr.bf16.mxu0 0
  %5061 = vmatpush1.bf16.msra.mxu0 0
  %5062 = vmatprep.subr.bf16.mxu0 0
  %5063 = vmatpush1.bf16.msra.mxu0 0
  %5064 = vmatprep.subr.bf16.mxu0 0
  %5065 = vmatpush1.bf16.msra.mxu0 0
  %5066 = vmatprep.subr.bf16.mxu0 0
  %5067 = vmatpush1.bf16.msra.mxu0 0
  %5068 = vmatprep.subr.bf16.mxu0 0
  %5069 = vmatpush1.bf16.msra.mxu0 0
  %5070 = vmatprep.subr.bf16.mxu0 0
  %5071 = vmatpush1.bf16.msra.mxu0 0
  %5072 = vmatprep.subr.bf16.mxu0 0
  %5073 = vmatpush1.bf16.msra.mxu0 0
  %5074 = vmatprep.subr.bf16.mxu0 0
  %5075 = vmatpush1.bf16.msra.mxu0 0
  %5076 = vmatprep.mubr.bf16.mxu0 0
  %5077 = vmatmul.mubr.bf16.gmra.mrb[0].mxu0 %v4946
  %v5078 = vpop.f32.mrb[0].mxu0
  %v5079 = vadd.f32 0.0, %v5078
  %v5080 = vpop.f32.mrb[0].mxu0
  %v5081 = vadd.f32 0.0, %v5080
  %v5082 = vpop.f32.mrb[0].mxu0
  %v5083 = vpop.f32.mrb[0].mxu0
  %5084 = vdwg.mxu0
  %v5085 = vadd.f32 %v4943, %v5079
  %v5086 = vadd.f32 %v4944, %v5081
  %v5087 = vld [vmem:[%s8] sm:$0x3]
  %v5089 = vlaneseq
  %v5090 = vshrl.u32 %v5089, 7
  %v5091 = vsub.s32 0, %v5090
  %v5092 = vrot.slane %v5087, %v5091
  %v5093 = vlaneseq
  %v5094 = vshrl.u32 %v5093, 7
  %v5095 = vsub.s32 1, %v5094
  %v5096 = vrot.slane %v5087, %v5095
  %v5099 = vadd.f32 %v5085, %v5092
  %v5100 = vadd.f32 %v5086, %v5096
  %v5101 = vmax.f32 %v5099, 0.0
  %v5102 = vmax.f32 %v5100, 0.0
  %v5103 = vpack.c.bf16 %v5101, %v5101
  %v5104 = vpack.c.bf16 %v5102, %v5102
  %v5105 = vld [vmem:[%s9] sm:$0xf]
  %v5106 = vld [vmem:[%s9 + $0x4] sm:$0xf]
  %v5107 = vld [vmem:[%s9 + $0x8] sm:$0xf]
  %v5108 = vld [vmem:[%s9 + $0xc] sm:$0xf]
  %v5109 = vld [vmem:[%s9 + $0x10] sm:$0xf]
  %v5110 = vld [vmem:[%s9 + $0x14] sm:$0xf]
  %v5111 = vld [vmem:[%s9 + $0x18] sm:$0xf]
  %v5112 = vld [vmem:[%s9 + $0x1c] sm:$0xf]
  %v5113 = vld [vmem:[%s9 + $0x20] sm:$0xf]
  %v5114 = vld [vmem:[%s9 + $0x24] sm:$0xf]
  %v5115 = vld [vmem:[%s9 + $0x28] sm:$0xf]
  %v5116 = vld [vmem:[%s9 + $0x2c] sm:$0xf]
  %v5117 = vld [vmem:[%s9 + $0x30] sm:$0xf]
  %v5118 = vld [vmem:[%s9 + $0x34] sm:$0xf]
  %v5119 = vld [vmem:[%s9 + $0x38] sm:$0xf]
  %v5120 = vld [vmem:[%s9 + $0x3c] sm:$0xf]
  %v5121 = vld [vmem:[%s9 + $0x40] sm:$0xf]
  %v5122 = vld [vmem:[%s9 + $0x44] sm:$0xf]
  %v5123 = vld [vmem:[%s9 + $0x48] sm:$0xf]
  %v5124 = vld [vmem:[%s9 + $0x4c] sm:$0xf]
  %v5125 = vld [vmem:[%s9 + $0x50] sm:$0xf]
  %v5126 = vld [vmem:[%s9 + $0x54] sm:$0xf]
  %v5127 = vld [vmem:[%s9 + $0x58] sm:$0xf]
  %v5128 = vld [vmem:[%s9 + $0x5c] sm:$0xf]
  %v5129 = vld [vmem:[%s9 + $0x60] sm:$0xf]
  %v5130 = vld [vmem:[%s9 + $0x64] sm:$0xf]
  %v5131 = vld [vmem:[%s9 + $0x68] sm:$0xf]
  %v5132 = vld [vmem:[%s9 + $0x6c] sm:$0xf]
  %v5133 = vld [vmem:[%s9 + $0x70] sm:$0xf]
  %v5134 = vld [vmem:[%s9 + $0x74] sm:$0xf]
  %v5135 = vld [vmem:[%s9 + $0x78] sm:$0xf]
  %v5136 = vld [vmem:[%s9 + $0x7c] sm:$0xf]
  %v5137 = vld [vmem:[%s10] sm:$0x1]
  %v5139 = vlaneseq
  %v5140 = vshrl.u32 %v5139, 7
  %v5141 = vsub.s32 0, %v5140
  %v5142 = vrot.slane %v5137, %v5141
  %v5176 = vunpack.c.l.b16 %v5105
  %v5177 = vunpack.c.l.b16 %v5106
  %v5178 = vunpack.c.l.b16 %v5107
  %v5179 = vunpack.c.l.b16 %v5108
  %v5180 = vunpack.c.l.b16 %v5109
  %v5181 = vunpack.c.l.b16 %v5110
  %v5182 = vunpack.c.l.b16 %v5111
  %v5183 = vunpack.c.l.b16 %v5112
  %v5184 = vunpack.c.l.b16 %v5113
  %v5185 = vunpack.c.l.b16 %v5114
  %v5186 = vunpack.c.l.b16 %v5115
  %v5187 = vunpack.c.l.b16 %v5116
  %v5188 = vunpack.c.l.b16 %v5117
  %v5189 = vunpack.c.l.b16 %v5118
  %v5190 = vunpack.c.l.b16 %v5119
  %v5191 = vunpack.c.l.b16 %v5120
  %v5192 = vunpack.c.l.b16 %v5121
  %v5193 = vunpack.c.l.b16 %v5122
  %v5194 = vunpack.c.l.b16 %v5123
  %v5195 = vunpack.c.l.b16 %v5124
  %v5196 = vunpack.c.l.b16 %v5125
  %v5197 = vunpack.c.l.b16 %v5126
  %v5198 = vunpack.c.l.b16 %v5127
  %v5199 = vunpack.c.l.b16 %v5128
  %v5200 = vunpack.c.l.b16 %v5129
  %v5201 = vunpack.c.l.b16 %v5130
  %v5202 = vunpack.c.l.b16 %v5131
  %v5203 = vunpack.c.l.b16 %v5132
  %v5204 = vunpack.c.l.b16 %v5133
  %v5205 = vunpack.c.l.b16 %v5134
  %v5206 = vunpack.c.l.b16 %v5135
  %v5207 = vunpack.c.l.b16 %v5136
  %v5208 = vpack.c.b16 %v5177, %v5176
  %v5209 = vpack.c.b16 %v5179, %v5178
  %v5210 = vpack.c.b16 %v5181, %v5180
  %v5211 = vpack.c.b16 %v5183, %v5182
  %v5212 = vpack.c.b16 %v5185, %v5184
  %v5213 = vpack.c.b16 %v5187, %v5186
  %v5214 = vpack.c.b16 %v5189, %v5188
  %v5215 = vpack.c.b16 %v5191, %v5190
  %v5216 = vpack.c.b16 %v5193, %v5192
  %v5217 = vpack.c.b16 %v5195, %v5194
  %v5218 = vpack.c.b16 %v5197, %v5196
  %v5219 = vpack.c.b16 %v5199, %v5198
  %v5220 = vpack.c.b16 %v5201, %v5200
  %v5221 = vpack.c.b16 %v5203, %v5202
  %v5222 = vpack.c.b16 %v5205, %v5204
  %v5223 = vpack.c.b16 %v5207, %v5206
  %5240 = vmatprep.subr.bf16.mxu0 0
  %5241 = vmatpush1.bf16.msra.mxu0 %v5208
  %5242 = vmatprep.subr.bf16.mxu0 0
  %5243 = vmatpush1.bf16.msra.mxu0 %v5209
  %5244 = vmatprep.subr.bf16.mxu0 0
  %5245 = vmatpush1.bf16.msra.mxu0 %v5210
  %5246 = vmatprep.subr.bf16.mxu0 0
  %5247 = vmatpush1.bf16.msra.mxu0 %v5211
  %5248 = vmatprep.subr.bf16.mxu0 0
  %5249 = vmatpush1.bf16.msra.mxu0 %v5212
  %5250 = vmatprep.subr.bf16.mxu0 0
  %5251 = vmatpush1.bf16.msra.mxu0 %v5213
  %5252 = vmatprep.subr.bf16.mxu0 0
  %5253 = vmatpush1.bf16.msra.mxu0 %v5214
  %5254 = vmatprep.subr.bf16.mxu0 0
  %5255 = vmatpush1.bf16.msra.mxu0 %v5215
  %5256 = vmatprep.subr.bf16.mxu0 0
  %5257 = vmatpush1.bf16.msra.mxu0 %v5216
  %5258 = vmatprep.subr.bf16.mxu0 0
  %5259 = vmatpush1.bf16.msra.mxu0 %v5217
  %5260 = vmatprep.subr.bf16.mxu0 0
  %5261 = vmatpush1.bf16.msra.mxu0 %v5218
  %5262 = vmatprep.subr.bf16.mxu0 0
  %5263 = vmatpush1.bf16.msra.mxu0 %v5219
  %5264 = vmatprep.subr.bf16.mxu0 0
  %5265 = vmatpush1.bf16.msra.mxu0 %v5220
  %5266 = vmatprep.subr.bf16.mxu0 0
  %5267 = vmatpush1.bf16.msra.mxu0 %v5221
  %5268 = vmatprep.subr.bf16.mxu0 0
  %5269 = vmatpush1.bf16.msra.mxu0 %v5222
  %5270 = vmatprep.subr.bf16.mxu0 0
  %5271 = vmatpush1.bf16.msra.mxu0 %v5223
  %5272 = vmatprep.mubr.bf16.mxu0 %v5104
  %5273 = vmatmul.mubr.bf16.gmra.mrb[0].mxu0 %v5103
  %v5274 = vpop.f32.mrb[0].mxu0
  %v5275 = vadd.f32 %v5142, %v5274
  %v5276 = vpop.f32.mrb[0].mxu0
  %v5277 = vpop.f32.mrb[0].mxu0
  %v5278 = vpop.f32.mrb[0].mxu0
  %5279 = vdwg.mxu0
  %v5280 = vmax.f32 %v5275, 0.0
  %v5281 = vld [vmem:[%s11] sm:$0xff]
  %v5282 = vld [vmem:[%s11 + $0x8] sm:$0xff]
  %v5283 = vld [vmem:[%s11 + $0x10] sm:$0xff]
  %v5284 = vld [vmem:[%s11 + $0x18] sm:$0xff]
  %v5285 = vld [vmem:[%s11 + $0x20] sm:$0xff]
  %v5286 = vld [vmem:[%s11 + $0x28] sm:$0xff]
  %v5287 = vld [vmem:[%s11 + $0x30] sm:$0xff]
  %v5288 = vld [vmem:[%s11 + $0x38] sm:$0xff]
  %v5289 = vld [vmem:[%s11 + $0x40] sm:$0xff]
  %v5290 = vld [vmem:[%s11 + $0x48] sm:$0xff]
  %v5291 = vld [vmem:[%s11 + $0x50] sm:$0xff]
  %v5292 = vld [vmem:[%s11 + $0x58] sm:$0xff]
  %v5293 = vld [vmem:[%s11 + $0x60] sm:$0xff]
  %v5294 = vld [vmem:[%s11 + $0x68] sm:$0xff]
  %v5295 = vld [vmem:[%s11 + $0x70] sm:$0xff]
  %v5296 = vld [vmem:[%s11 + $0x78] sm:$0xff]
  %v5297 = vld [vmem:[#allocation5] sm:$0x1]
  %v5299 = vlaneseq
  %v5300 = vshrl.u32 %v5299, 7
  %v5301 = vsub.s32 0, %v5300
  %v5302 = vrot.slane %v5297, %v5301
  %5304 = vmatprep.subr.mxu0 0.0
  %5305 = vmatpush1.msra.mxu0 %v5281
  %5306 = vmatprep.subr.mxu0 0.0
  %5307 = vmatpush1.msra.mxu0 %v5282
  %5308 = vmatprep.subr.mxu0 0.0
  %5309 = vmatpush1.msra.mxu0 %v5283
  %5310 = vmatprep.subr.mxu0 0.0
  %5311 = vmatpush1.msra.mxu0 %v5284
  %5312 = vmatprep.subr.mxu0 0.0
  %5313 = vmatpush1.msra.mxu0 %v5285
  %5314 = vmatprep.subr.mxu0 0.0
  %5315 = vmatpush1.msra.mxu0 %v5286
  %5316 = vmatprep.subr.mxu0 0.0
  %5317 = vmatpush1.msra.mxu0 %v5287
  %5318 = vmatprep.subr.mxu0 0.0
  %5319 = vmatpush1.msra.mxu0 %v5288
  %5320 = vmatprep.subr.mxu0 0.0
  %5321 = vmatpush1.msra.mxu0 %v5289
  %5322 = vmatprep.subr.mxu0 0.0
  %5323 = vmatpush1.msra.mxu0 %v5290
  %5324 = vmatprep.subr.mxu0 0.0
  %5325 = vmatpush1.msra.mxu0 %v5291
  %5326 = vmatprep.subr.mxu0 0.0
  %5327 = vmatpush1.msra.mxu0 %v5292
  %5328 = vmatprep.subr.mxu0 0.0
  %5329 = vmatpush1.msra.mxu0 %v5293
  %5330 = vmatprep.subr.mxu0 0.0
  %5331 = vmatpush1.msra.mxu0 %v5294
  %5332 = vmatprep.subr.mxu0 0.0
  %5333 = vmatpush1.msra.mxu0 %v5295
  %5334 = vmatprep.subr.mxu0 0.0
  %5335 = vmatpush1.msra.mxu0 %v5296
  %5336 = vmatprep.subr.mxu0 0.0
  %5337 = vmatpush1.msra.mxu0 0.0
  %5338 = vmatprep.subr.mxu0 0.0
  %5339 = vmatpush1.msra.mxu0 0.0
  %5340 = vmatprep.subr.mxu0 0.0
  %5341 = vmatpush1.msra.mxu0 0.0
  %5342 = vmatprep.subr.mxu0 0.0
  %5343 = vmatpush1.msra.mxu0 0.0
  %5344 = vmatprep.subr.mxu0 0.0
  %5345 = vmatpush1.msra.mxu0 0.0
  %5346 = vmatprep.subr.mxu0 0.0
  %5347 = vmatpush1.msra.mxu0 0.0
  %5348 = vmatprep.subr.mxu0 0.0
  %5349 = vmatpush1.msra.mxu0 0.0
  %5350 = vmatprep.subr.mxu0 0.0
  %5351 = vmatpush1.msra.mxu0 0.0
  %5352 = vmatprep.subr.mxu0 0.0
  %5353 = vmatpush1.msra.mxu0 0.0
  %5354 = vmatprep.subr.mxu0 0.0
  %5355 = vmatpush1.msra.mxu0 0.0
  %5356 = vmatprep.subr.mxu0 0.0
  %5357 = vmatpush1.msra.mxu0 0.0
  %5358 = vmatprep.subr.mxu0 0.0
  %5359 = vmatpush1.msra.mxu0 0.0
  %5360 = vmatprep.subr.mxu0 0.0
  %5361 = vmatpush1.msra.mxu0 0.0
  %5362 = vmatprep.subr.mxu0 0.0
  %5363 = vmatpush1.msra.mxu0 0.0
  %5364 = vmatprep.subr.mxu0 0.0
  %5365 = vmatpush1.msra.mxu0 0.0
  %5366 = vmatprep.subr.mxu0 0.0
  %5367 = vmatpush1.msra.mxu0 0.0
  %5368 = vmatprep.mubr.f32.mxu0 0.0
  %5369 = vmatmul.mubr.f32.gmra.mrb[0].mxu0 %v5280
  %v5370 = vpop.f32.mrb[0].mxu0
  %v5371 = vadd.f32 %v5302, %v5370
  %v5372 = vpop.f32.mrb[0].mxu0
  %5373 = vdwg.mxu0
  %vm5374 = vcmask 1024
  %5375 = vst.msk [vmem:[%s13] sm:$0x3] %vm5374, %v5371
  // Predicated region
  $region54: #{expr_predict_forward.1} parent=0 // pred_check
    _
  $region55: #{expr_predict_forward.1} parent=0 // pred_check_branch
    %5377 = sbr.rel (0) target = $region57
  $region56: #{expr_predict_forward.1} parent=0 // pred_region
    _
  $region57: #{expr_predict_forward.1} parent=0 // pred_fallthru
    _
  // Predicated region
  $region58: #{expr_predict_forward.1} parent=0 // pred_check
    _
  $region59: #{expr_predict_forward.1} parent=0 // pred_check_branch
    %5379 = sbr.rel (0) target = $region61
  $region60: #{expr_predict_forward.1} parent=0 // pred_region
    _
  $region61: #{expr_predict_forward.1} parent=0 // pred_fallthru
    _

</llo_original>
